<compile_context>
chip_gen: v6e
topology: v6e:2x2x1
jax: 0.10.0
libtpu: 0.0.40
codegen_flags: <defaults>
</compile_context>

<pallas_src>
import functools

import jax
import jax.numpy as jnp
from jax import lax
from jax.experimental import pallas as pl
from jax.experimental.pallas import tpu as pltpu

NEG_INF = -1e30
LN_EPS = 1e-5


# ----------------------------- kernel helpers -------------------------------

def _layernorm_f32(x, g, b, eps):
    mean = jnp.mean(x, axis=-1, keepdims=True)
    xc = x - mean
    var = jnp.mean(xc * xc, axis=-1, keepdims=True)
    return xc * lax.rsqrt(var + eps) * g + b


def _full_spec(shape):
    # Whole-array block, resident across the batch grid (weights / LN params).
    return pl.BlockSpec(shape, lambda b: (0,) * len(shape))


# ----------------------------- Pallas kernels -------------------------------

def _attn_block_kernel(x_ref, bias_ref, g_ref, b_ref, wqkv_ref, bqkv_ref,
                       wo_ref, bo_ref, o_ref, *, n_heads, eps):
    """One batch: LN1 -> QKV -> causal multi-head attention -> proj -> +res."""
    x = x_ref[0].astype(jnp.float32)                    # (T, E) f32 residual
    T, E = x.shape
    Dh = E // n_heads
    scale = 1.0 / (Dh ** 0.5)

    h = _layernorm_f32(x, g_ref[...], b_ref[...], eps).astype(jnp.bfloat16)
    qkv = jnp.dot(h, wqkv_ref[...], preferred_element_type=jnp.float32)
    qkv = qkv + bqkv_ref[...]                           # (T, 3E) f32

    bias = bias_ref[0]                                  # (T, T) additive mask
    attn = jnp.zeros((T, E), jnp.float32)
    # Static unrolled loop over heads; head columns sliced directly from the
    # QKV activation (no transpose / reshape glue between kernels).
    for hh in range(n_heads):
        q_h = qkv[:, 0 * E + hh * Dh:0 * E + (hh + 1) * Dh]     # (T, Dh)
        k_h = qkv[:, 1 * E + hh * Dh:1 * E + (hh + 1) * Dh]
        v_h = qkv[:, 2 * E + hh * Dh:2 * E + (hh + 1) * Dh]
        s = jnp.einsum("td,sd->ts", q_h, k_h,
                       preferred_element_type=jnp.float32) * scale
        s = s + bias
        s = s - jnp.max(s, axis=-1, keepdims=True)
        p = jnp.exp(s)
        p = p * pl.reciprocal(jnp.sum(p, axis=-1, keepdims=True), approx=True)
        o_h = jnp.dot(p.astype(jnp.bfloat16), v_h.astype(jnp.bfloat16),
                      preferred_element_type=jnp.float32)        # (T, Dh)
        attn = attn + jnp.dot(o_h.astype(jnp.bfloat16),
                              wo_ref[hh * Dh:(hh + 1) * Dh, :],
                              preferred_element_type=jnp.float32)
    o_ref[0] = (x + attn + bo_ref[...]).astype(o_ref.dtype)


def _mlp_block_kernel(x_ref, g_ref, b_ref, w1_ref, b1_ref, w2_ref, b2_ref,
                      o_ref, *, eps):
    """One batch: LN2 -> fc1 -> GELU -> fc2 -> +residual."""
    x = x_ref[0].astype(jnp.float32)                    # (T, E)
    h = _layernorm_f32(x, g_ref[...], b_ref[...], eps).astype(jnp.bfloat16)
    ff = jnp.dot(h, w1_ref[...], preferred_element_type=jnp.float32)
    ff = ff + b1_ref[...]
    # TODO(synk): PyTorch nn.GELU defaults to the exact erf form; tanh approx
    # kept here (GPT-2 style, EUP-friendly) — numerically very close.
    ff = jax.nn.gelu(ff, approximate=True).astype(jnp.bfloat16)
    ff = jnp.dot(ff, w2_ref[...], preferred_element_type=jnp.float32)
    ff = ff + b2_ref[...]
    o_ref[0] = (x + ff).astype(o_ref.dtype)


def _head_block_kernel(x_ref, g_ref, b_ref, w_ref, o_ref, *, eps):
    """One batch: LN_f -> fused (lm | diffw | diffstep) head matmul."""
    x = x_ref[0].astype(jnp.float32)
    h = _layernorm_f32(x, g_ref[...], b_ref[...], eps).astype(jnp.bfloat16)
    o_ref[0] = jnp.dot(h, w_ref[...],
                       preferred_element_type=jnp.float32).astype(o_ref.dtype)


# ----------------------------- pallas wrappers -------------------------------

_PAR = pltpu.CompilerParams(dimension_semantics=("parallel",))


def attn_block(x, bias, blk, n_heads):
    B, T, E = x.shape
    kernel = functools.partial(_attn_block_kernel, n_heads=n_heads, eps=LN_EPS)
    return pl.pallas_call(
        kernel,
        grid=(B,),
        in_specs=[
            pl.BlockSpec((1, T, E), lambda b: (b, 0, 0)),
            pl.BlockSpec((1, T, T), lambda b: (b, 0, 0)),
            _full_spec((1, E)), _full_spec((1, E)),
            _full_spec((E, 3 * E)), _full_spec((1, 3 * E)),
            _full_spec((E, E)), _full_spec((1, E)),
        ],
        out_specs=pl.BlockSpec((1, T, E), lambda b: (b, 0, 0)),
        out_shape=jax.ShapeDtypeStruct((B, T, E), x.dtype),
        compiler_params=_PAR,
    )(x, bias, blk["ln1_g"], blk["ln1_b"], blk["w_qkv"], blk["b_qkv"],
      blk["w_o"], blk["b_o"])


def mlp_block(x, blk):
    B, T, E = x.shape
    F = blk["w_fc1"].shape[1]
    kernel = functools.partial(_mlp_block_kernel, eps=LN_EPS)
    return pl.pallas_call(
        kernel,
        grid=(B,),
        in_specs=[
            pl.BlockSpec((1, T, E), lambda b: (b, 0, 0)),
            _full_spec((1, E)), _full_spec((1, E)),
            _full_spec((E, F)), _full_spec((1, F)),
            _full_spec((F, E)), _full_spec((1, E)),
        ],
        out_specs=pl.BlockSpec((1, T, E), lambda b: (b, 0, 0)),
        out_shape=jax.ShapeDtypeStruct((B, T, E), x.dtype),
        compiler_params=_PAR,
    )(x, blk["ln2_g"], blk["ln2_b"], blk["w_fc1"], blk["b_fc1"],
      blk["w_fc2"], blk["b_fc2"])


def head_block(x, lnf_g, lnf_b, w_heads):
    B, T, E = x.shape
    N = w_heads.shape[1]
    kernel = functools.partial(_head_block_kernel, eps=LN_EPS)
    return pl.pallas_call(
        kernel,
        grid=(B,),
        in_specs=[
            pl.BlockSpec((1, T, E), lambda b: (b, 0, 0)),
            _full_spec((1, E)), _full_spec((1, E)),
            _full_spec((E, N)),
        ],
        out_specs=pl.BlockSpec((1, T, N), lambda b: (b, 0, 0)),
        out_shape=jax.ShapeDtypeStruct((B, T, N), jnp.float32),
        compiler_params=_PAR,
    )(x, lnf_g, lnf_b, w_heads)


# ----------------------------- model definition ------------------------------

def _round_up(n, m):
    return ((n + m - 1) // m) * m


def init_params(key, cfg):
    V, E, L = cfg["vocab_size"], cfg["embedding_dim"], cfg["n_layers"]
    BS, F = cfg["block_size"], 4 * cfg["embedding_dim"]

    def nrm(k, shape, std=0.02, dtype=jnp.float32):
        return (std * jax.random.normal(k, shape)).astype(dtype)

    keys = iter(jax.random.split(key, 8 + 4 * L))
    params = {
        "wte": nrm(next(keys), (V, E)),
        "wpe": nrm(next(keys), (BS, E)),
        "lnf_g": jnp.ones((1, E), jnp.float32),
        "lnf_b": jnp.zeros((1, E), jnp.float32),
    }
    blocks = []
    for _ in range(L):
        blocks.append({
            "ln1_g": jnp.ones((1, E), jnp.float32),
            "ln1_b": jnp.zeros((1, E), jnp.float32),
            "w_qkv": nrm(next(keys), (E, 3 * E), dtype=jnp.bfloat16),
            "b_qkv": jnp.zeros((1, 3 * E), jnp.float32),
            "w_o": nrm(next(keys), (E, E), dtype=jnp.bfloat16),
            "b_o": jnp.zeros((1, E), jnp.float32),
            "ln2_g": jnp.ones((1, E), jnp.float32),
            "ln2_b": jnp.zeros((1, E), jnp.float32),
            "w_fc1": nrm(next(keys), (E, F), dtype=jnp.bfloat16),
            "b_fc1": jnp.zeros((1, F), jnp.float32),
            "w_fc2": nrm(next(keys), (F, E), dtype=jnp.bfloat16),
            "b_fc2": jnp.zeros((1, E), jnp.float32),
        })
    params["blocks"] = blocks

    # Fused output heads (all bias-free), laid out lane-aligned:
    #   cols [0:V)              lm_head
    #   cols [Vpad:Vpad+5)      predict_weight_token   (Vpad = round_up(V,128))
    #   cols [Vpad+5:Vpad+8)    predict_diffstep_token
    #   rest                    zero padding to a 128 multiple
    Vpad = _round_up(V, 128)
    Ntot = _round_up(Vpad + 8, 128)
    w_lm = nrm(next(keys), (E, V))
    w_dw = nrm(next(keys), (E, 5))
    w_ds = nrm(next(keys), (E, 3))
    w_heads = jnp.zeros((E, Ntot), jnp.float32)
    w_heads = w_heads.at[:, :V].set(w_lm)
    w_heads = w_heads.at[:, Vpad:Vpad + 5].set(w_dw)
    w_heads = w_heads.at[:, Vpad + 5:Vpad + 8].set(w_ds)
    params["w_heads"] = w_heads.astype(jnp.bfloat16)
    return params


def gpt_actor_forward(params, tokens, attention_mask, cfg):
    B, T = tokens.shape
    V, E, H = cfg["vocab_size"], cfg["embedding_dim"], cfg["n_heads"]
    Vpad = _round_up(V, 128)

    if attention_mask is None:
        attention_mask = jnp.ones((B, T), jnp.float32)

    # Additive causal + key-padding bias, hoisted out of the kernels.
    causal = jnp.tril(jnp.ones((T, T), dtype=bool))
    key_ok = attention_mask.astype(jnp.float32) > 0.5            # (B, T)
    mask = jnp.logical_and(causal[None, :, :], key_ok[:, None, :])
    bias = jnp.where(mask, 0.0, NEG_INF).astype(jnp.float32)     # (B, T, T)

    # Embedding gather is glue, not a hot matmul path.
    tok_emb = jnp.take(params["wte"], tokens, axis=0)            # (B, T, E)
    pos_emb = params["wpe"][:T]
    x = (tok_emb + pos_emb[None, :, :]).astype(jnp.bfloat16)     # bf16 activations

    for blk in params["blocks"]:
        x = attn_block(x, bias, blk, H)
        x = mlp_block(x, blk)

    heads = head_block(x, params["lnf_g"], params["lnf_b"], params["w_heads"])
    logits = heads[:, :, :V]
    diffw = heads[:, :, Vpad:Vpad + 5]
    diffstep = heads[:, :, Vpad + 5:Vpad + 8]
    return logits, diffw, diffstep


# TODO(synk): tokenizer, LoRA branch and the autoregressive sampling methods
# (multinomial generation / batch_generate) have no Pallas equivalent and are
# out of scope for the forward-pass kernel.


# --------------------------------- main --------------------------------------

if __name__ == "__main__":
    cfg = dict(
        vocab_size=256,
        embedding_dim=128,
        n_heads=4,
        n_layers=2,
        block_size=64,
    )
    root = jax.random.PRNGKey(0)
    k_params, k_tok = jax.random.split(root)

    params = init_params(k_params, cfg)

    B, T = 2, 8
    tokens = jax.random.randint(k_tok, (B, T), 0, cfg["vocab_size"],
                                dtype=jnp.int32)
    attention_mask = jnp.ones((B, T), jnp.float32)

    fwd = jax.jit(functools.partial(gpt_actor_forward, cfg=cfg))
    logits, diffw, diffstep = fwd(params, tokens, attention_mask)
    jax.block_until_ready((logits, diffw, diffstep))

    assert logits.shape == (B, T, cfg["vocab_size"])
    assert diffw.shape == (B, T, 5)
    assert diffstep.shape == (B, T, 3)
    assert bool(jnp.all(jnp.isfinite(logits)))
    assert bool(jnp.all(jnp.isfinite(diffw)))
    assert bool(jnp.all(jnp.isfinite(diffstep)))
    print("KERNEL_OK")
</pallas_src>

<mosaic_0001>
module attributes {stable_mosaic.version = 11 : i64} {
  func.func @_mlp_block_kernel(%arg0: i32, %arg1: memref<1x8x128xbf16, #tpu.memory_space<vmem>>, %arg2: memref<1x128xf32, #tpu.memory_space<vmem>>, %arg3: memref<1x128xf32, #tpu.memory_space<vmem>>, %arg4: memref<128x512xbf16, #tpu.memory_space<vmem>>, %arg5: memref<1x512xf32, #tpu.memory_space<vmem>>, %arg6: memref<512x128xbf16, #tpu.memory_space<vmem>>, %arg7: memref<1x128xf32, #tpu.memory_space<vmem>>, %arg8: memref<1x8x128xbf16, #tpu.memory_space<vmem>>) attributes {dimension_semantics = [#tpu.dimension_semantics<parallel>], iteration_bounds = array<i64: 2>, scalar_prefetch = 0 : i64, scratch_operands = 0 : i64, tpu.core_type = #tpu.core_type<tc>, window_params = [{transform_indices = @transform_0, window_bounds = array<i64: 1, 8, 128>}, {pipeline_mode = #tpu.pipeline_mode<synchronous>, transform_indices = @transform_1, window_bounds = array<i64: 1, 128>}, {pipeline_mode = #tpu.pipeline_mode<synchronous>, transform_indices = @transform_2, window_bounds = array<i64: 1, 128>}, {pipeline_mode = #tpu.pipeline_mode<synchronous>, transform_indices = @transform_3, window_bounds = array<i64: 128, 512>}, {pipeline_mode = #tpu.pipeline_mode<synchronous>, transform_indices = @transform_4, window_bounds = array<i64: 1, 512>}, {pipeline_mode = #tpu.pipeline_mode<synchronous>, transform_indices = @transform_5, window_bounds = array<i64: 512, 128>}, {pipeline_mode = #tpu.pipeline_mode<synchronous>, transform_indices = @transform_6, window_bounds = array<i64: 1, 128>}, {transform_indices = @transform_7, window_bounds = array<i64: 1, 8, 128>}]} {
    %c0 = arith.constant 0 : index
    %c0_0 = arith.constant 0 : index
    %c0_1 = arith.constant 0 : index
    %0 = vector.load %arg1[%c0, %c0_0, %c0_1] : memref<1x8x128xbf16, #tpu.memory_space<vmem>>, vector<1x8x128xbf16>
    %1 = vector.shape_cast %0 : vector<1x8x128xbf16> to vector<8x128xbf16>
    %2 = arith.extf %1 : vector<8x128xbf16> to vector<8x128xf32>
    %c0_2 = arith.constant 0 : index
    %c0_3 = arith.constant 0 : index
    %3 = vector.load %arg2[%c0_2, %c0_3] : memref<1x128xf32, #tpu.memory_space<vmem>>, vector<1x128xf32>
    %c0_4 = arith.constant 0 : index
    %c0_5 = arith.constant 0 : index
    %4 = vector.load %arg3[%c0_4, %c0_5] : memref<1x128xf32, #tpu.memory_space<vmem>>, vector<1x128xf32>
    %cst = arith.constant dense<0.000000e+00> : vector<8xf32>
    %5 = vector.multi_reduction <add>, %2, %cst [1] : vector<8x128xf32> to vector<8xf32>
    %6 = vector.shape_cast %5 : vector<8xf32> to vector<8x1xf32>
    %cst_6 = arith.constant 1.280000e+02 : f32
    %7 = vector.broadcast %cst_6 : f32 to vector<8x1xf32>
    %8 = arith.divf %6, %7 : vector<8x1xf32>
    %9 = vector.broadcast %8 : vector<8x1xf32> to vector<8x128xf32>
    %10 = arith.subf %2, %9 : vector<8x128xf32>
    %11 = arith.mulf %10, %10 : vector<8x128xf32>
    %cst_7 = arith.constant dense<0.000000e+00> : vector<8xf32>
    %12 = vector.multi_reduction <add>, %11, %cst_7 [1] : vector<8x128xf32> to vector<8xf32>
    %13 = vector.shape_cast %12 : vector<8xf32> to vector<8x1xf32>
    %cst_8 = arith.constant 1.280000e+02 : f32
    %14 = vector.broadcast %cst_8 : f32 to vector<8x1xf32>
    %15 = arith.divf %13, %14 : vector<8x1xf32>
    %cst_9 = arith.constant 9.99999974E-6 : f32
    %16 = vector.broadcast %cst_9 : f32 to vector<8x1xf32>
    %17 = arith.addf %15, %16 : vector<8x1xf32>
    %18 = math.rsqrt %17 : vector<8x1xf32>
    %19 = vector.broadcast %18 : vector<8x1xf32> to vector<8x128xf32>
    %20 = arith.mulf %10, %19 : vector<8x128xf32>
    %21 = vector.broadcast %3 : vector<1x128xf32> to vector<8x128xf32>
    %22 = arith.mulf %20, %21 : vector<8x128xf32>
    %23 = vector.broadcast %4 : vector<1x128xf32> to vector<8x128xf32>
    %24 = arith.addf %22, %23 : vector<8x128xf32>
    %25 = arith.truncf %24 : vector<8x128xf32> to vector<8x128xbf16>
    %c0_10 = arith.constant 0 : index
    %c0_11 = arith.constant 0 : index
    %26 = vector.load %arg4[%c0_10, %c0_11] : memref<128x512xbf16, #tpu.memory_space<vmem>>, vector<128x512xbf16>
    %cst_12 = arith.constant dense<0.000000e+00> : vector<8x512xf32>
    %27 = tpu.matmul %25, %26, %cst_12 {dimension_numbers = #tpu.dot_dimension_numbers<[1], [0], [0], [1], [0, 0, 1, 1], [], []>} : vector<8x128xbf16>, vector<128x512xbf16>, vector<8x512xf32> -> vector<8x512xf32>
    %c0_13 = arith.constant 0 : index
    %c0_14 = arith.constant 0 : index
    %28 = vector.load %arg5[%c0_13, %c0_14] : memref<1x512xf32, #tpu.memory_space<vmem>>, vector<1x512xf32>
    %29 = vector.broadcast %28 : vector<1x512xf32> to vector<8x512xf32>
    %30 = arith.addf %27, %29 : vector<8x512xf32>
    %31 = arith.mulf %30, %30 : vector<8x512xf32>
    %32 = arith.mulf %30, %31 : vector<8x512xf32>
    %cst_15 = arith.constant 4.471500e-02 : f32
    %33 = vector.broadcast %cst_15 : f32 to vector<8x512xf32>
    %34 = arith.mulf %33, %32 : vector<8x512xf32>
    %35 = arith.addf %30, %34 : vector<8x512xf32>
    %cst_16 = arith.constant 0.797884583 : f32
    %36 = vector.broadcast %cst_16 : f32 to vector<8x512xf32>
    %37 = arith.mulf %36, %35 : vector<8x512xf32>
    %38 = math.tanh %37 : vector<8x512xf32>
    %cst_17 = arith.constant 1.000000e+00 : f32
    %39 = vector.broadcast %cst_17 : f32 to vector<8x512xf32>
    %40 = arith.addf %39, %38 : vector<8x512xf32>
    %cst_18 = arith.constant 5.000000e-01 : f32
    %41 = vector.broadcast %cst_18 : f32 to vector<8x512xf32>
    %42 = arith.mulf %41, %40 : vector<8x512xf32>
    %43 = arith.mulf %30, %42 : vector<8x512xf32>
    %44 = arith.truncf %43 : vector<8x512xf32> to vector<8x512xbf16>
    %c0_19 = arith.constant 0 : index
    %c0_20 = arith.constant 0 : index
    %45 = vector.load %arg6[%c0_19, %c0_20] : memref<512x128xbf16, #tpu.memory_space<vmem>>, vector<512x128xbf16>
    %cst_21 = arith.constant dense<0.000000e+00> : vector<8x128xf32>
    %46 = tpu.matmul %44, %45, %cst_21 {dimension_numbers = #tpu.dot_dimension_numbers<[1], [0], [0], [1], [0, 0, 1, 1], [], []>} : vector<8x512xbf16>, vector<512x128xbf16>, vector<8x128xf32> -> vector<8x128xf32>
    %c0_22 = arith.constant 0 : index
    %c0_23 = arith.constant 0 : index
    %47 = vector.load %arg7[%c0_22, %c0_23] : memref<1x128xf32, #tpu.memory_space<vmem>>, vector<1x128xf32>
    %48 = vector.broadcast %47 : vector<1x128xf32> to vector<8x128xf32>
    %49 = arith.addf %46, %48 : vector<8x128xf32>
    %50 = arith.addf %2, %49 : vector<8x128xf32>
    %51 = arith.truncf %50 : vector<8x128xf32> to vector<8x128xbf16>
    %c0_24 = arith.constant 0 : index
    %c0_25 = arith.constant 0 : index
    %c0_26 = arith.constant 0 : index
    %52 = vector.load %arg8[%c0_24, %c0_25, %c0_26] : memref<1x8x128xbf16, #tpu.memory_space<vmem>>, vector<1x8x128xbf16>
    %53 = vector.shape_cast %52 : vector<1x8x128xbf16> to vector<8x128xbf16>
    %54 = vector.shape_cast %51 : vector<8x128xbf16> to vector<1x8x128xbf16>
    tpu.vector_store %arg8[%c0_24, %c0_25, %c0_26], %54 {strides = array<i32>} : memref<1x8x128xbf16, #tpu.memory_space<vmem>>, vector<1x8x128xbf16>,
    return
  }
  func.func @transform_0(%arg0: i32) -> (i32, i32, i32) {
    %c0_i32 = arith.constant 0 : i32
    %c0_i32_0 = arith.constant 0 : i32
    %c0_i32_1 = arith.constant 0 : i32
    return %arg0, %c0_i32, %c0_i32_0 : i32, i32, i32
  }
  func.func @transform_1(%arg0: i32) -> (i32, i32) {
    %c0_i32 = arith.constant 0 : i32
    %c0_i32_0 = arith.constant 0 : i32
    %c0_i32_1 = arith.constant 0 : i32
    return %c0_i32, %c0_i32_0 : i32, i32
  }
  func.func @transform_2(%arg0: i32) -> (i32, i32) {
    %c0_i32 = arith.constant 0 : i32
    %c0_i32_0 = arith.constant 0 : i32
    %c0_i32_1 = arith.constant 0 : i32
    return %c0_i32, %c0_i32_0 : i32, i32
  }
  func.func @transform_3(%arg0: i32) -> (i32, i32) {
    %c0_i32 = arith.constant 0 : i32
    %c0_i32_0 = arith.constant 0 : i32
    %c0_i32_1 = arith.constant 0 : i32
    return %c0_i32, %c0_i32_0 : i32, i32
  }
  func.func @transform_4(%arg0: i32) -> (i32, i32) {
    %c0_i32 = arith.constant 0 : i32
    %c0_i32_0 = arith.constant 0 : i32
    %c0_i32_1 = arith.constant 0 : i32
    return %c0_i32, %c0_i32_0 : i32, i32
  }
  func.func @transform_5(%arg0: i32) -> (i32, i32) {
    %c0_i32 = arith.constant 0 : i32
    %c0_i32_0 = arith.constant 0 : i32
    %c0_i32_1 = arith.constant 0 : i32
    return %c0_i32, %c0_i32_0 : i32, i32
  }
  func.func @transform_6(%arg0: i32) -> (i32, i32) {
    %c0_i32 = arith.constant 0 : i32
    %c0_i32_0 = arith.constant 0 : i32
    %c0_i32_1 = arith.constant 0 : i32
    return %c0_i32, %c0_i32_0 : i32, i32
  }
  func.func @transform_7(%arg0: i32) -> (i32, i32, i32) {
    %c0_i32 = arith.constant 0 : i32
    %c0_i32_0 = arith.constant 0 : i32
    %c0_i32_1 = arith.constant 0 : i32
    return %arg0, %c0_i32, %c0_i32_0 : i32, i32, i32
  }
}

module attributes {stable_mosaic.version = 11 : i64} {
  func.func @_attn_block_kernel(%arg0: i32, %arg1: memref<1x8x128xbf16, #tpu.memory_space<vmem>>, %arg2: memref<1x8x8xf32, #tpu.memory_space<vmem>>, %arg3: memref<1x128xf32, #tpu.memory_space<vmem>>, %arg4: memref<1x128xf32, #tpu.memory_space<vmem>>, %arg5: memref<128x384xbf16, #tpu.memory_space<vmem>>, %arg6: memref<1x384xf32, #tpu.memory_space<vmem>>, %arg7: memref<128x128xbf16, #tpu.memory_space<vmem>>, %arg8: memref<1x128xf32, #tpu.memory_space<vmem>>, %arg9: memref<1x8x128xbf16, #tpu.memory_space<vmem>>) attributes {dimension_semantics = [#tpu.dimension_semantics<parallel>], iteration_bounds = array<i64: 2>, scalar_prefetch = 0 : i64, scratch_operands = 0 : i64, tpu.core_type = #tpu.core_type<tc>, window_params = [{transform_indices = @transform_0, window_bounds = array<i64: 1, 8, 128>}, {transform_indices = @transform_1, window_bounds = array<i64: 1, 8, 8>}, {pipeline_mode = #tpu.pipeline_mode<synchronous>, transform_indices = @transform_2, window_bounds = array<i64: 1, 128>}, {pipeline_mode = #tpu.pipeline_mode<synchronous>, transform_indices = @transform_3, window_bounds = array<i64: 1, 128>}, {pipeline_mode = #tpu.pipeline_mode<synchronous>, transform_indices = @transform_4, window_bounds = array<i64: 128, 384>}, {pipeline_mode = #tpu.pipeline_mode<synchronous>, transform_indices = @transform_5, window_bounds = array<i64: 1, 384>}, {pipeline_mode = #tpu.pipeline_mode<synchronous>, transform_indices = @transform_6, window_bounds = array<i64: 128, 128>}, {pipeline_mode = #tpu.pipeline_mode<synchronous>, transform_indices = @transform_7, window_bounds = array<i64: 1, 128>}, {transform_indices = @transform_8, window_bounds = array<i64: 1, 8, 128>}]} {
    %c0 = arith.constant 0 : index
    %c0_0 = arith.constant 0 : index
    %c0_1 = arith.constant 0 : index
    %0 = vector.load %arg1[%c0, %c0_0, %c0_1] : memref<1x8x128xbf16, #tpu.memory_space<vmem>>, vector<1x8x128xbf16>
    %1 = vector.shape_cast %0 : vector<1x8x128xbf16> to vector<8x128xbf16>
    %2 = arith.extf %1 : vector<8x128xbf16> to vector<8x128xf32>
    %c0_2 = arith.constant 0 : index
    %c0_3 = arith.constant 0 : index
    %3 = vector.load %arg3[%c0_2, %c0_3] : memref<1x128xf32, #tpu.memory_space<vmem>>, vector<1x128xf32>
    %c0_4 = arith.constant 0 : index
    %c0_5 = arith.constant 0 : index
    %4 = vector.load %arg4[%c0_4, %c0_5] : memref<1x128xf32, #tpu.memory_space<vmem>>, vector<1x128xf32>
    %cst = arith.constant dense<0.000000e+00> : vector<8xf32>
    %5 = vector.multi_reduction <add>, %2, %cst [1] : vector<8x128xf32> to vector<8xf32>
    %6 = vector.shape_cast %5 : vector<8xf32> to vector<8x1xf32>
    %cst_6 = arith.constant 1.280000e+02 : f32
    %7 = vector.broadcast %cst_6 : f32 to vector<8x1xf32>
    %8 = arith.divf %6, %7 : vector<8x1xf32>
    %9 = vector.broadcast %8 : vector<8x1xf32> to vector<8x128xf32>
    %10 = arith.subf %2, %9 : vector<8x128xf32>
    %11 = arith.mulf %10, %10 : vector<8x128xf32>
    %cst_7 = arith.constant dense<0.000000e+00> : vector<8xf32>
    %12 = vector.multi_reduction <add>, %11, %cst_7 [1] : vector<8x128xf32> to vector<8xf32>
    %13 = vector.shape_cast %12 : vector<8xf32> to vector<8x1xf32>
    %cst_8 = arith.constant 1.280000e+02 : f32
    %14 = vector.broadcast %cst_8 : f32 to vector<8x1xf32>
    %15 = arith.divf %13, %14 : vector<8x1xf32>
    %cst_9 = arith.constant 9.99999974E-6 : f32
    %16 = vector.broadcast %cst_9 : f32 to vector<8x1xf32>
    %17 = arith.addf %15, %16 : vector<8x1xf32>
    %18 = math.rsqrt %17 : vector<8x1xf32>
    %19 = vector.broadcast %18 : vector<8x1xf32> to vector<8x128xf32>
    %20 = arith.mulf %10, %19 : vector<8x128xf32>
    %21 = vector.broadcast %3 : vector<1x128xf32> to vector<8x128xf32>
    %22 = arith.mulf %20, %21 : vector<8x128xf32>
    %23 = vector.broadcast %4 : vector<1x128xf32> to vector<8x128xf32>
    %24 = arith.addf %22, %23 : vector<8x128xf32>
    %25 = arith.truncf %24 : vector<8x128xf32> to vector<8x128xbf16>
    %c0_10 = arith.constant 0 : index
    %c0_11 = arith.constant 0 : index
    %26 = vector.load %arg5[%c0_10, %c0_11] : memref<128x384xbf16, #tpu.memory_space<vmem>>, vector<128x384xbf16>
    %cst_12 = arith.constant dense<0.000000e+00> : vector<8x384xf32>
    %27 = tpu.matmul %25, %26, %cst_12 {dimension_numbers = #tpu.dot_dimension_numbers<[1], [0], [0], [1], [0, 0, 1, 1], [], []>} : vector<8x128xbf16>, vector<128x384xbf16>, vector<8x384xf32> -> vector<8x384xf32>
    %c0_13 = arith.constant 0 : index
    %c0_14 = arith.constant 0 : index
    %28 = vector.load %arg6[%c0_13, %c0_14] : memref<1x384xf32, #tpu.memory_space<vmem>>, vector<1x384xf32>
    %29 = vector.broadcast %28 : vector<1x384xf32> to vector<8x384xf32>
    %30 = arith.addf %27, %29 : vector<8x384xf32>
    %c0_15 = arith.constant 0 : index
    %c0_16 = arith.constant 0 : index
    %c0_17 = arith.constant 0 : index
    %31 = vector.load %arg2[%c0_15, %c0_16, %c0_17] : memref<1x8x8xf32, #tpu.memory_space<vmem>>, vector<1x8x8xf32>
    %32 = vector.shape_cast %31 : vector<1x8x8xf32> to vector<8x8xf32>
    %cst_18 = arith.constant 0.000000e+00 : f32
    %33 = vector.broadcast %cst_18 : f32 to vector<8x128xf32>
    %34 = vector.extract_strided_slice %30 {offsets = [0, 0], sizes = [8, 32], strides = [1, 1]} : vector<8x384xf32> to vector<8x32xf32>
    %35 = vector.extract_strided_slice %30 {offsets = [0, 128], sizes = [8, 32], strides = [1, 1]} : vector<8x384xf32> to vector<8x32xf32>
    %36 = vector.extract_strided_slice %30 {offsets = [0, 256], sizes = [8, 32], strides = [1, 1]} : vector<8x384xf32> to vector<8x32xf32>
    "tpu.trace_start"() <{level = 10 : i32, message = "td,sd->ts"}> : () -> ()
    %cst_19 = arith.constant dense<0.000000e+00> : vector<8x8xf32>
    %37 = tpu.matmul %34, %35, %cst_19 {dimension_numbers = #tpu.dot_dimension_numbers<[1], [1], [0], [0], [0, 0, 1, 0], [], []>} : vector<8x32xf32>, vector<8x32xf32>, vector<8x8xf32> -> vector<8x8xf32>
    "tpu.trace_stop"() : () -> ()
    %cst_20 = arith.constant 0.176776692 : f32
    %38 = vector.broadcast %cst_20 : f32 to vector<8x8xf32>
    %39 = arith.mulf %37, %38 : vector<8x8xf32>
    %40 = arith.addf %39, %32 : vector<8x8xf32>
    %cst_21 = arith.constant dense<0xFF800000> : vector<8xf32>
    %41 = vector.multi_reduction <maximumf>, %40, %cst_21 [1] : vector<8x8xf32> to vector<8xf32>
    %42 = vector.shape_cast %41 : vector<8xf32> to vector<8x1xf32>
    %43 = vector.broadcast %42 : vector<8x1xf32> to vector<8x8xf32>
    %44 = arith.subf %40, %43 : vector<8x8xf32>
    %45 = math.exp %44 : vector<8x8xf32>
    %cst_22 = arith.constant dense<0.000000e+00> : vector<8xf32>
    %46 = vector.multi_reduction <add>, %45, %cst_22 [1] : vector<8x8xf32> to vector<8xf32>
    %47 = vector.shape_cast %46 : vector<8xf32> to vector<8x1xf32>
    %48 = tpu.reciprocal %47 {approx = true} : vector<8x1xf32> -> vector<8x1xf32>
    %49 = vector.broadcast %48 : vector<8x1xf32> to vector<8x8xf32>
    %50 = arith.mulf %45, %49 : vector<8x8xf32>
    %51 = arith.truncf %50 : vector<8x8xf32> to vector<8x8xbf16>
    %52 = arith.truncf %36 : vector<8x32xf32> to vector<8x32xbf16>
    %cst_23 = arith.constant dense<0.000000e+00> : vector<8x32xf32>
    %53 = tpu.matmul %51, %52, %cst_23 {dimension_numbers = #tpu.dot_dimension_numbers<[1], [0], [0], [1], [0, 0, 1, 1], [], []>} : vector<8x8xbf16>, vector<8x32xbf16>, vector<8x32xf32> -> vector<8x32xf32>
    %54 = arith.truncf %53 : vector<8x32xf32> to vector<8x32xbf16>
    %c0_24 = arith.constant 0 : index
    %c0_25 = arith.constant 0 : index
    %55 = vector.load %arg7[%c0_24, %c0_25] : memref<128x128xbf16, #tpu.memory_space<vmem>>, vector<32x128xbf16>
    %cst_26 = arith.constant dense<0.000000e+00> : vector<8x128xf32>
    %56 = tpu.matmul %54, %55, %cst_26 {dimension_numbers = #tpu.dot_dimension_numbers<[1], [0], [0], [1], [0, 0, 1, 1], [], []>} : vector<8x32xbf16>, vector<32x128xbf16>, vector<8x128xf32> -> vector<8x128xf32>
    %57 = arith.addf %33, %56 : vector<8x128xf32>
    %58 = vector.extract_strided_slice %30 {offsets = [0, 32], sizes = [8, 32], strides = [1, 1]} : vector<8x384xf32> to vector<8x32xf32>
    %59 = vector.extract_strided_slice %30 {offsets = [0, 160], sizes = [8, 32], strides = [1, 1]} : vector<8x384xf32> to vector<8x32xf32>
    %60 = vector.extract_strided_slice %30 {offsets = [0, 288], sizes = [8, 32], strides = [1, 1]} : vector<8x384xf32> to vector<8x32xf32>
    "tpu.trace_start"() <{level = 10 : i32, message = "td,sd->ts"}> : () -> ()
    %cst_27 = arith.constant dense<0.000000e+00> : vector<8x8xf32>
    %61 = tpu.matmul %58, %59, %cst_27 {dimension_numbers = #tpu.dot_dimension_numbers<[1], [1], [0], [0], [0, 0, 1, 0], [], []>} : vector<8x32xf32>, vector<8x32xf32>, vector<8x8xf32> -> vector<8x8xf32>
    "tpu.trace_stop"() : () -> ()
    %cst_28 = arith.constant 0.176776692 : f32
    %62 = vector.broadcast %cst_28 : f32 to vector<8x8xf32>
    %63 = arith.mulf %61, %62 : vector<8x8xf32>
    %64 = arith.addf %63, %32 : vector<8x8xf32>
    %cst_29 = arith.constant dense<0xFF800000> : vector<8xf32>
    %65 = vector.multi_reduction <maximumf>, %64, %cst_29 [1] : vector<8x8xf32> to vector<8xf32>
    %66 = vector.shape_cast %65 : vector<8xf32> to vector<8x1xf32>
    %67 = vector.broadcast %66 : vector<8x1xf32> to vector<8x8xf32>
    %68 = arith.subf %64, %67 : vector<8x8xf32>
    %69 = math.exp %68 : vector<8x8xf32>
    %cst_30 = arith.constant dense<0.000000e+00> : vector<8xf32>
    %70 = vector.multi_reduction <add>, %69, %cst_30 [1] : vector<8x8xf32> to vector<8xf32>
    %71 = vector.shape_cast %70 : vector<8xf32> to vector<8x1xf32>
    %72 = tpu.reciprocal %71 {approx = true} : vector<8x1xf32> -> vector<8x1xf32>
    %73 = vector.broadcast %72 : vector<8x1xf32> to vector<8x8xf32>
    %74 = arith.mulf %69, %73 : vector<8x8xf32>
    %75 = arith.truncf %74 : vector<8x8xf32> to vector<8x8xbf16>
    %76 = arith.truncf %60 : vector<8x32xf32> to vector<8x32xbf16>
    %cst_31 = arith.constant dense<0.000000e+00> : vector<8x32xf32>
    %77 = tpu.matmul %75, %76, %cst_31 {dimension_numbers = #tpu.dot_dimension_numbers<[1], [0], [0], [1], [0, 0, 1, 1], [], []>} : vector<8x8xbf16>, vector<8x32xbf16>, vector<8x32xf32> -> vector<8x32xf32>
    %78 = arith.truncf %77 : vector<8x32xf32> to vector<8x32xbf16>
    %c32 = arith.constant 32 : index
    %c0_32 = arith.constant 0 : index
    %79 = vector.load %arg7[%c32, %c0_32] : memref<128x128xbf16, #tpu.memory_space<vmem>>, vector<32x128xbf16>
    %cst_33 = arith.constant dense<0.000000e+00> : vector<8x128xf32>
    %80 = tpu.matmul %78, %79, %cst_33 {dimension_numbers = #tpu.dot_dimension_numbers<[1], [0], [0], [1], [0, 0, 1, 1], [], []>} : vector<8x32xbf16>, vector<32x128xbf16>, vector<8x128xf32> -> vector<8x128xf32>
    %81 = arith.addf %57, %80 : vector<8x128xf32>
    %82 = vector.extract_strided_slice %30 {offsets = [0, 64], sizes = [8, 32], strides = [1, 1]} : vector<8x384xf32> to vector<8x32xf32>
    %83 = vector.extract_strided_slice %30 {offsets = [0, 192], sizes = [8, 32], strides = [1, 1]} : vector<8x384xf32> to vector<8x32xf32>
    %84 = vector.extract_strided_slice %30 {offsets = [0, 320], sizes = [8, 32], strides = [1, 1]} : vector<8x384xf32> to vector<8x32xf32>
    "tpu.trace_start"() <{level = 10 : i32, message = "td,sd->ts"}> : () -> ()
    %cst_34 = arith.constant dense<0.000000e+00> : vector<8x8xf32>
    %85 = tpu.matmul %82, %83, %cst_34 {dimension_numbers = #tpu.dot_dimension_numbers<[1], [1], [0], [0], [0, 0, 1, 0], [], []>} : vector<8x32xf32>, vector<8x32xf32>, vector<8x8xf32> -> vector<8x8xf32>
    "tpu.trace_stop"() : () -> ()
    %cst_35 = arith.constant 0.176776692 : f32
    %86 = vector.broadcast %cst_35 : f32 to vector<8x8xf32>
    %87 = arith.mulf %85, %86 : vector<8x8xf32>
    %88 = arith.addf %87, %32 : vector<8x8xf32>
    %cst_36 = arith.constant dense<0xFF800000> : vector<8xf32>
    %89 = vector.multi_reduction <maximumf>, %88, %cst_36 [1] : vector<8x8xf32> to vector<8xf32>
    %90 = vector.shape_cast %89 : vector<8xf32> to vector<8x1xf32>
    %91 = vector.broadcast %90 : vector<8x1xf32> to vector<8x8xf32>
    %92 = arith.subf %88, %91 : vector<8x8xf32>
    %93 = math.exp %92 : vector<8x8xf32>
    %cst_37 = arith.constant dense<0.000000e+00> : vector<8xf32>
    %94 = vector.multi_reduction <add>, %93, %cst_37 [1] : vector<8x8xf32> to vector<8xf32>
    %95 = vector.shape_cast %94 : vector<8xf32> to vector<8x1xf32>
    %96 = tpu.reciprocal %95 {approx = true} : vector<8x1xf32> -> vector<8x1xf32>
    %97 = vector.broadcast %96 : vector<8x1xf32> to vector<8x8xf32>
    %98 = arith.mulf %93, %97 : vector<8x8xf32>
    %99 = arith.truncf %98 : vector<8x8xf32> to vector<8x8xbf16>
    %100 = arith.truncf %84 : vector<8x32xf32> to vector<8x32xbf16>
    %cst_38 = arith.constant dense<0.000000e+00> : vector<8x32xf32>
    %101 = tpu.matmul %99, %100, %cst_38 {dimension_numbers = #tpu.dot_dimension_numbers<[1], [0], [0], [1], [0, 0, 1, 1], [], []>} : vector<8x8xbf16>, vector<8x32xbf16>, vector<8x32xf32> -> vector<8x32xf32>
    %102 = arith.truncf %101 : vector<8x32xf32> to vector<8x32xbf16>
    %c64 = arith.constant 64 : index
    %c0_39 = arith.constant 0 : index
    %103 = vector.load %arg7[%c64, %c0_39] : memref<128x128xbf16, #tpu.memory_space<vmem>>, vector<32x128xbf16>
    %cst_40 = arith.constant dense<0.000000e+00> : vector<8x128xf32>
    %104 = tpu.matmul %102, %103, %cst_40 {dimension_numbers = #tpu.dot_dimension_numbers<[1], [0], [0], [1], [0, 0, 1, 1], [], []>} : vector<8x32xbf16>, vector<32x128xbf16>, vector<8x128xf32> -> vector<8x128xf32>
    %105 = arith.addf %81, %104 : vector<8x128xf32>
    %106 = vector.extract_strided_slice %30 {offsets = [0, 96], sizes = [8, 32], strides = [1, 1]} : vector<8x384xf32> to vector<8x32xf32>
    %107 = vector.extract_strided_slice %30 {offsets = [0, 224], sizes = [8, 32], strides = [1, 1]} : vector<8x384xf32> to vector<8x32xf32>
    %108 = vector.extract_strided_slice %30 {offsets = [0, 352], sizes = [8, 32], strides = [1, 1]} : vector<8x384xf32> to vector<8x32xf32>
    "tpu.trace_start"() <{level = 10 : i32, message = "td,sd->ts"}> : () -> ()
    %cst_41 = arith.constant dense<0.000000e+00> : vector<8x8xf32>
    %109 = tpu.matmul %106, %107, %cst_41 {dimension_numbers = #tpu.dot_dimension_numbers<[1], [1], [0], [0], [0, 0, 1, 0], [], []>} : vector<8x32xf32>, vector<8x32xf32>, vector<8x8xf32> -> vector<8x8xf32>
    "tpu.trace_stop"() : () -> ()
    %cst_42 = arith.constant 0.176776692 : f32
    %110 = vector.broadcast %cst_42 : f32 to vector<8x8xf32>
    %111 = arith.mulf %109, %110 : vector<8x8xf32>
    %112 = arith.addf %111, %32 : vector<8x8xf32>
    %cst_43 = arith.constant dense<0xFF800000> : vector<8xf32>
    %113 = vector.multi_reduction <maximumf>, %112, %cst_43 [1] : vector<8x8xf32> to vector<8xf32>
    %114 = vector.shape_cast %113 : vector<8xf32> to vector<8x1xf32>
    %115 = vector.broadcast %114 : vector<8x1xf32> to vector<8x8xf32>
    %116 = arith.subf %112, %115 : vector<8x8xf32>
    %117 = math.exp %116 : vector<8x8xf32>
    %cst_44 = arith.constant dense<0.000000e+00> : vector<8xf32>
    %118 = vector.multi_reduction <add>, %117, %cst_44 [1] : vector<8x8xf32> to vector<8xf32>
    %119 = vector.shape_cast %118 : vector<8xf32> to vector<8x1xf32>
    %120 = tpu.reciprocal %119 {approx = true} : vector<8x1xf32> -> vector<8x1xf32>
    %121 = vector.broadcast %120 : vector<8x1xf32> to vector<8x8xf32>
    %122 = arith.mulf %117, %121 : vector<8x8xf32>
    %123 = arith.truncf %122 : vector<8x8xf32> to vector<8x8xbf16>
    %124 = arith.truncf %108 : vector<8x32xf32> to vector<8x32xbf16>
    %cst_45 = arith.constant dense<0.000000e+00> : vector<8x32xf32>
    %125 = tpu.matmul %123, %124, %cst_45 {dimension_numbers = #tpu.dot_dimension_numbers<[1], [0], [0], [1], [0, 0, 1, 1], [], []>} : vector<8x8xbf16>, vector<8x32xbf16>, vector<8x32xf32> -> vector<8x32xf32>
    %126 = arith.truncf %125 : vector<8x32xf32> to vector<8x32xbf16>
    %c96 = arith.constant 96 : index
    %c0_46 = arith.constant 0 : index
    %127 = vector.load %arg7[%c96, %c0_46] : memref<128x128xbf16, #tpu.memory_space<vmem>>, vector<32x128xbf16>
    %cst_47 = arith.constant dense<0.000000e+00> : vector<8x128xf32>
    %128 = tpu.matmul %126, %127, %cst_47 {dimension_numbers = #tpu.dot_dimension_numbers<[1], [0], [0], [1], [0, 0, 1, 1], [], []>} : vector<8x32xbf16>, vector<32x128xbf16>, vector<8x128xf32> -> vector<8x128xf32>
    %129 = arith.addf %105, %128 : vector<8x128xf32>
    %130 = arith.addf %2, %129 : vector<8x128xf32>
    %c0_48 = arith.constant 0 : index
    %c0_49 = arith.constant 0 : index
    %131 = vector.load %arg8[%c0_48, %c0_49] : memref<1x128xf32, #tpu.memory_space<vmem>>, vector<1x128xf32>
    %132 = vector.broadcast %131 : vector<1x128xf32> to vector<8x128xf32>
    %133 = arith.addf %130, %132 : vector<8x128xf32>
    %134 = arith.truncf %133 : vector<8x128xf32> to vector<8x128xbf16>
    %c0_50 = arith.constant 0 : index
    %c0_51 = arith.constant 0 : index
    %c0_52 = arith.constant 0 : index
    %135 = vector.load %arg9[%c0_50, %c0_51, %c0_52] : memref<1x8x128xbf16, #tpu.memory_space<vmem>>, vector<1x8x128xbf16>
    %136 = vector.shape_cast %135 : vector<1x8x128xbf16> to vector<8x128xbf16>
    %137 = vector.shape_cast %134 : vector<8x128xbf16> to vector<1x8x128xbf16>
    tpu.vector_store %arg9[%c0_50, %c0_51, %c0_52], %137 {strides = array<i32>} : memref<1x8x128xbf16, #tpu.memory_space<vmem>>, vector<1x8x128xbf16>,
    return
  }
  func.func @transform_0(%arg0: i32) -> (i32, i32, i32) {
    %c0_i32 = arith.constant 0 : i32
    %c0_i32_0 = arith.constant 0 : i32
    %c0_i32_1 = arith.constant 0 : i32
    return %arg0, %c0_i32, %c0_i32_0 : i32, i32, i32
  }
  func.func @transform_1(%arg0: i32) -> (i32, i32, i32) {
    %c0_i32 = arith.constant 0 : i32
    %c0_i32_0 = arith.constant 0 : i32
    %c0_i32_1 = arith.constant 0 : i32
    return %arg0, %c0_i32, %c0_i32_0 : i32, i32, i32
  }
  func.func @transform_2(%arg0: i32) -> (i32, i32) {
    %c0_i32 = arith.constant 0 : i32
    %c0_i32_0 = arith.constant 0 : i32
    %c0_i32_1 = arith.constant 0 : i32
    return %c0_i32, %c0_i32_0 : i32, i32
  }
  func.func @transform_3(%arg0: i32) -> (i32, i32) {
    %c0_i32 = arith.constant 0 : i32
    %c0_i32_0 = arith.constant 0 : i32
    %c0_i32_1 = arith.constant 0 : i32
    return %c0_i32, %c0_i32_0 : i32, i32
  }
  func.func @transform_4(%arg0: i32) -> (i32, i32) {
    %c0_i32 = arith.constant 0 : i32
    %c0_i32_0 = arith.constant 0 : i32
    %c0_i32_1 = arith.constant 0 : i32
    return %c0_i32, %c0_i32_0 : i32, i32
  }
  func.func @transform_5(%arg0: i32) -> (i32, i32) {
    %c0_i32 = arith.constant 0 : i32
    %c0_i32_0 = arith.constant 0 : i32
    %c0_i32_1 = arith.constant 0 : i32
    return %c0_i32, %c0_i32_0 : i32, i32
  }
  func.func @transform_6(%arg0: i32) -> (i32, i32) {
    %c0_i32 = arith.constant 0 : i32
    %c0_i32_0 = arith.constant 0 : i32
    %c0_i32_1 = arith.constant 0 : i32
    return %c0_i32, %c0_i32_0 : i32, i32
  }
  func.func @transform_7(%arg0: i32) -> (i32, i32) {
    %c0_i32 = arith.constant 0 : i32
    %c0_i32_0 = arith.constant 0 : i32
    %c0_i32_1 = arith.constant 0 : i32
    return %c0_i32, %c0_i32_0 : i32, i32
  }
  func.func @transform_8(%arg0: i32) -> (i32, i32, i32) {
    %c0_i32 = arith.constant 0 : i32
    %c0_i32_0 = arith.constant 0 : i32
    %c0_i32_1 = arith.constant 0 : i32
    return %arg0, %c0_i32, %c0_i32_0 : i32, i32, i32
  }
}

module attributes {stable_mosaic.version = 11 : i64} {
  func.func @_attn_block_kernel(%arg0: i32, %arg1: memref<1x8x128xbf16, #tpu.memory_space<vmem>>, %arg2: memref<1x8x8xf32, #tpu.memory_space<vmem>>, %arg3: memref<1x128xf32, #tpu.memory_space<vmem>>, %arg4: memref<1x128xf32, #tpu.memory_space<vmem>>, %arg5: memref<128x384xbf16, #tpu.memory_space<vmem>>, %arg6: memref<1x384xf32, #tpu.memory_space<vmem>>, %arg7: memref<128x128xbf16, #tpu.memory_space<vmem>>, %arg8: memref<1x128xf32, #tpu.memory_space<vmem>>, %arg9: memref<1x8x128xbf16, #tpu.memory_space<vmem>>) attributes {dimension_semantics = [#tpu.dimension_semantics<parallel>], iteration_bounds = array<i64: 2>, scalar_prefetch = 0 : i64, scratch_operands = 0 : i64, tpu.core_type = #tpu.core_type<tc>, window_params = [{transform_indices = @transform_0, window_bounds = array<i64: 1, 8, 128>}, {transform_indices = @transform_1, window_bounds = array<i64: 1, 8, 8>}, {pipeline_mode = #tpu.pipeline_mode<synchronous>, transform_indices = @transform_2, window_bounds = array<i64: 1, 128>}, {pipeline_mode = #tpu.pipeline_mode<synchronous>, transform_indices = @transform_3, window_bounds = array<i64: 1, 128>}, {pipeline_mode = #tpu.pipeline_mode<synchronous>, transform_indices = @transform_4, window_bounds = array<i64: 128, 384>}, {pipeline_mode = #tpu.pipeline_mode<synchronous>, transform_indices = @transform_5, window_bounds = array<i64: 1, 384>}, {pipeline_mode = #tpu.pipeline_mode<synchronous>, transform_indices = @transform_6, window_bounds = array<i64: 128, 128>}, {pipeline_mode = #tpu.pipeline_mode<synchronous>, transform_indices = @transform_7, window_bounds = array<i64: 1, 128>}, {transform_indices = @transform_8, window_bounds = array<i64: 1, 8, 128>}]} {
    %c0 = arith.constant 0 : index
    %c0_0 = arith.constant 0 : index
    %c0_1 = arith.constant 0 : index
    %0 = vector.load %arg1[%c0, %c0_0, %c0_1] : memref<1x8x128xbf16, #tpu.memory_space<vmem>>, vector<1x8x128xbf16>
    %1 = vector.shape_cast %0 : vector<1x8x128xbf16> to vector<8x128xbf16>
    %2 = arith.extf %1 : vector<8x128xbf16> to vector<8x128xf32>
    %c0_2 = arith.constant 0 : index
    %c0_3 = arith.constant 0 : index
    %3 = vector.load %arg3[%c0_2, %c0_3] : memref<1x128xf32, #tpu.memory_space<vmem>>, vector<1x128xf32>
    %c0_4 = arith.constant 0 : index
    %c0_5 = arith.constant 0 : index
    %4 = vector.load %arg4[%c0_4, %c0_5] : memref<1x128xf32, #tpu.memory_space<vmem>>, vector<1x128xf32>
    %cst = arith.constant dense<0.000000e+00> : vector<8xf32>
    %5 = vector.multi_reduction <add>, %2, %cst [1] : vector<8x128xf32> to vector<8xf32>
    %6 = vector.shape_cast %5 : vector<8xf32> to vector<8x1xf32>
    %cst_6 = arith.constant 1.280000e+02 : f32
    %7 = vector.broadcast %cst_6 : f32 to vector<8x1xf32>
    %8 = arith.divf %6, %7 : vector<8x1xf32>
    %9 = vector.broadcast %8 : vector<8x1xf32> to vector<8x128xf32>
    %10 = arith.subf %2, %9 : vector<8x128xf32>
    %11 = arith.mulf %10, %10 : vector<8x128xf32>
    %cst_7 = arith.constant dense<0.000000e+00> : vector<8xf32>
    %12 = vector.multi_reduction <add>, %11, %cst_7 [1] : vector<8x128xf32> to vector<8xf32>
    %13 = vector.shape_cast %12 : vector<8xf32> to vector<8x1xf32>
    %cst_8 = arith.constant 1.280000e+02 : f32
    %14 = vector.broadcast %cst_8 : f32 to vector<8x1xf32>
    %15 = arith.divf %13, %14 : vector<8x1xf32>
    %cst_9 = arith.constant 9.99999974E-6 : f32
    %16 = vector.broadcast %cst_9 : f32 to vector<8x1xf32>
    %17 = arith.addf %15, %16 : vector<8x1xf32>
    %18 = math.rsqrt %17 : vector<8x1xf32>
    %19 = vector.broadcast %18 : vector<8x1xf32> to vector<8x128xf32>
    %20 = arith.mulf %10, %19 : vector<8x128xf32>
    %21 = vector.broadcast %3 : vector<1x128xf32> to vector<8x128xf32>
    %22 = arith.mulf %20, %21 : vector<8x128xf32>
    %23 = vector.broadcast %4 : vector<1x128xf32> to vector<8x128xf32>
    %24 = arith.addf %22, %23 : vector<8x128xf32>
    %25 = arith.truncf %24 : vector<8x128xf32> to vector<8x128xbf16>
    %c0_10 = arith.constant 0 : index
    %c0_11 = arith.constant 0 : index
    %26 = vector.load %arg5[%c0_10, %c0_11] : memref<128x384xbf16, #tpu.memory_space<vmem>>, vector<128x384xbf16>
    %cst_12 = arith.constant dense<0.000000e+00> : vector<8x384xf32>
    %27 = tpu.matmul %25, %26, %cst_12 {dimension_numbers = #tpu.dot_dimension_numbers<[1], [0], [0], [1], [0, 0, 1, 1], [], []>} : vector<8x128xbf16>, vector<128x384xbf16>, vector<8x384xf32> -> vector<8x384xf32>
    %c0_13 = arith.constant 0 : index
    %c0_14 = arith.constant 0 : index
    %28 = vector.load %arg6[%c0_13, %c0_14] : memref<1x384xf32, #tpu.memory_space<vmem>>, vector<1x384xf32>
    %29 = vector.broadcast %28 : vector<1x384xf32> to vector<8x384xf32>
    %30 = arith.addf %27, %29 : vector<8x384xf32>
    %c0_15 = arith.constant 0 : index
    %c0_16 = arith.constant 0 : index
    %c0_17 = arith.constant 0 : index
    %31 = vector.load %arg2[%c0_15, %c0_16, %c0_17] : memref<1x8x8xf32, #tpu.memory_space<vmem>>, vector<1x8x8xf32>
    %32 = vector.shape_cast %31 : vector<1x8x8xf32> to vector<8x8xf32>
    %cst_18 = arith.constant 0.000000e+00 : f32
    %33 = vector.broadcast %cst_18 : f32 to vector<8x128xf32>
    %34 = vector.extract_strided_slice %30 {offsets = [0, 0], sizes = [8, 32], strides = [1, 1]} : vector<8x384xf32> to vector<8x32xf32>
    %35 = vector.extract_strided_slice %30 {offsets = [0, 128], sizes = [8, 32], strides = [1, 1]} : vector<8x384xf32> to vector<8x32xf32>
    %36 = vector.extract_strided_slice %30 {offsets = [0, 256], sizes = [8, 32], strides = [1, 1]} : vector<8x384xf32> to vector<8x32xf32>
    "tpu.trace_start"() <{level = 10 : i32, message = "td,sd->ts"}> : () -> ()
    %cst_19 = arith.constant dense<0.000000e+00> : vector<8x8xf32>
    %37 = tpu.matmul %34, %35, %cst_19 {dimension_numbers = #tpu.dot_dimension_numbers<[1], [1], [0], [0], [0, 0, 1, 0], [], []>} : vector<8x32xf32>, vector<8x32xf32>, vector<8x8xf32> -> vector<8x8xf32>
    "tpu.trace_stop"() : () -> ()
    %cst_20 = arith.constant 0.176776692 : f32
    %38 = vector.broadcast %cst_20 : f32 to vector<8x8xf32>
    %39 = arith.mulf %37, %38 : vector<8x8xf32>
    %40 = arith.addf %39, %32 : vector<8x8xf32>
    %cst_21 = arith.constant dense<0xFF800000> : vector<8xf32>
    %41 = vector.multi_reduction <maximumf>, %40, %cst_21 [1] : vector<8x8xf32> to vector<8xf32>
    %42 = vector.shape_cast %41 : vector<8xf32> to vector<8x1xf32>
    %43 = vector.broadcast %42 : vector<8x1xf32> to vector<8x8xf32>
    %44 = arith.subf %40, %43 : vector<8x8xf32>
    %45 = math.exp %44 : vector<8x8xf32>
    %cst_22 = arith.constant dense<0.000000e+00> : vector<8xf32>
    %46 = vector.multi_reduction <add>, %45, %cst_22 [1] : vector<8x8xf32> to vector<8xf32>
    %47 = vector.shape_cast %46 : vector<8xf32> to vector<8x1xf32>
    %48 = tpu.reciprocal %47 {approx = true} : vector<8x1xf32> -> vector<8x1xf32>
    %49 = vector.broadcast %48 : vector<8x1xf32> to vector<8x8xf32>
    %50 = arith.mulf %45, %49 : vector<8x8xf32>
    %51 = arith.truncf %50 : vector<8x8xf32> to vector<8x8xbf16>
    %52 = arith.truncf %36 : vector<8x32xf32> to vector<8x32xbf16>
    %cst_23 = arith.constant dense<0.000000e+00> : vector<8x32xf32>
    %53 = tpu.matmul %51, %52, %cst_23 {dimension_numbers = #tpu.dot_dimension_numbers<[1], [0], [0], [1], [0, 0, 1, 1], [], []>} : vector<8x8xbf16>, vector<8x32xbf16>, vector<8x32xf32> -> vector<8x32xf32>
    %54 = arith.truncf %53 : vector<8x32xf32> to vector<8x32xbf16>
    %c0_24 = arith.constant 0 : index
    %c0_25 = arith.constant 0 : index
    %55 = vector.load %arg7[%c0_24, %c0_25] : memref<128x128xbf16, #tpu.memory_space<vmem>>, vector<32x128xbf16>
    %cst_26 = arith.constant dense<0.000000e+00> : vector<8x128xf32>
    %56 = tpu.matmul %54, %55, %cst_26 {dimension_numbers = #tpu.dot_dimension_numbers<[1], [0], [0], [1], [0, 0, 1, 1], [], []>} : vector<8x32xbf16>, vector<32x128xbf16>, vector<8x128xf32> -> vector<8x128xf32>
    %57 = arith.addf %33, %56 : vector<8x128xf32>
    %58 = vector.extract_strided_slice %30 {offsets = [0, 32], sizes = [8, 32], strides = [1, 1]} : vector<8x384xf32> to vector<8x32xf32>
    %59 = vector.extract_strided_slice %30 {offsets = [0, 160], sizes = [8, 32], strides = [1, 1]} : vector<8x384xf32> to vector<8x32xf32>
    %60 = vector.extract_strided_slice %30 {offsets = [0, 288], sizes = [8, 32], strides = [1, 1]} : vector<8x384xf32> to vector<8x32xf32>
    "tpu.trace_start"() <{level = 10 : i32, message = "td,sd->ts"}> : () -> ()
    %cst_27 = arith.constant dense<0.000000e+00> : vector<8x8xf32>
    %61 = tpu.matmul %58, %59, %cst_27 {dimension_numbers = #tpu.dot_dimension_numbers<[1], [1], [0], [0], [0, 0, 1, 0], [], []>} : vector<8x32xf32>, vector<8x32xf32>, vector<8x8xf32> -> vector<8x8xf32>
    "tpu.trace_stop"() : () -> ()
    %cst_28 = arith.constant 0.176776692 : f32
    %62 = vector.broadcast %cst_28 : f32 to vector<8x8xf32>
    %63 = arith.mulf %61, %62 : vector<8x8xf32>
    %64 = arith.addf %63, %32 : vector<8x8xf32>
    %cst_29 = arith.constant dense<0xFF800000> : vector<8xf32>
    %65 = vector.multi_reduction <maximumf>, %64, %cst_29 [1] : vector<8x8xf32> to vector<8xf32>
    %66 = vector.shape_cast %65 : vector<8xf32> to vector<8x1xf32>
    %67 = vector.broadcast %66 : vector<8x1xf32> to vector<8x8xf32>
    %68 = arith.subf %64, %67 : vector<8x8xf32>
    %69 = math.exp %68 : vector<8x8xf32>
    %cst_30 = arith.constant dense<0.000000e+00> : vector<8xf32>
    %70 = vector.multi_reduction <add>, %69, %cst_30 [1] : vector<8x8xf32> to vector<8xf32>
    %71 = vector.shape_cast %70 : vector<8xf32> to vector<8x1xf32>
    %72 = tpu.reciprocal %71 {approx = true} : vector<8x1xf32> -> vector<8x1xf32>
    %73 = vector.broadcast %72 : vector<8x1xf32> to vector<8x8xf32>
    %74 = arith.mulf %69, %73 : vector<8x8xf32>
    %75 = arith.truncf %74 : vector<8x8xf32> to vector<8x8xbf16>
    %76 = arith.truncf %60 : vector<8x32xf32> to vector<8x32xbf16>
    %cst_31 = arith.constant dense<0.000000e+00> : vector<8x32xf32>
    %77 = tpu.matmul %75, %76, %cst_31 {dimension_numbers = #tpu.dot_dimension_numbers<[1], [0], [0], [1], [0, 0, 1, 1], [], []>} : vector<8x8xbf16>, vector<8x32xbf16>, vector<8x32xf32> -> vector<8x32xf32>
    %78 = arith.truncf %77 : vector<8x32xf32> to vector<8x32xbf16>
    %c32 = arith.constant 32 : index
    %c0_32 = arith.constant 0 : index
    %79 = vector.load %arg7[%c32, %c0_32] : memref<128x128xbf16, #tpu.memory_space<vmem>>, vector<32x128xbf16>
    %cst_33 = arith.constant dense<0.000000e+00> : vector<8x128xf32>
    %80 = tpu.matmul %78, %79, %cst_33 {dimension_numbers = #tpu.dot_dimension_numbers<[1], [0], [0], [1], [0, 0, 1, 1], [], []>} : vector<8x32xbf16>, vector<32x128xbf16>, vector<8x128xf32> -> vector<8x128xf32>
    %81 = arith.addf %57, %80 : vector<8x128xf32>
    %82 = vector.extract_strided_slice %30 {offsets = [0, 64], sizes = [8, 32], strides = [1, 1]} : vector<8x384xf32> to vector<8x32xf32>
    %83 = vector.extract_strided_slice %30 {offsets = [0, 192], sizes = [8, 32], strides = [1, 1]} : vector<8x384xf32> to vector<8x32xf32>
    %84 = vector.extract_strided_slice %30 {offsets = [0, 320], sizes = [8, 32], strides = [1, 1]} : vector<8x384xf32> to vector<8x32xf32>
    "tpu.trace_start"() <{level = 10 : i32, message = "td,sd->ts"}> : () -> ()
    %cst_34 = arith.constant dense<0.000000e+00> : vector<8x8xf32>
    %85 = tpu.matmul %82, %83, %cst_34 {dimension_numbers = #tpu.dot_dimension_numbers<[1], [1], [0], [0], [0, 0, 1, 0], [], []>} : vector<8x32xf32>, vector<8x32xf32>, vector<8x8xf32> -> vector<8x8xf32>
    "tpu.trace_stop"() : () -> ()
    %cst_35 = arith.constant 0.176776692 : f32
    %86 = vector.broadcast %cst_35 : f32 to vector<8x8xf32>
    %87 = arith.mulf %85, %86 : vector<8x8xf32>
    %88 = arith.addf %87, %32 : vector<8x8xf32>
    %cst_36 = arith.constant dense<0xFF800000> : vector<8xf32>
    %89 = vector.multi_reduction <maximumf>, %88, %cst_36 [1] : vector<8x8xf32> to vector<8xf32>
    %90 = vector.shape_cast %89 : vector<8xf32> to vector<8x1xf32>
    %91 = vector.broadcast %90 : vector<8x1xf32> to vector<8x8xf32>
    %92 = arith.subf %88, %91 : vector<8x8xf32>
    %93 = math.exp %92 : vector<8x8xf32>
    %cst_37 = arith.constant dense<0.000000e+00> : vector<8xf32>
    %94 = vector.multi_reduction <add>, %93, %cst_37 [1] : vector<8x8xf32> to vector<8xf32>
    %95 = vector.shape_cast %94 : vector<8xf32> to vector<8x1xf32>
    %96 = tpu.reciprocal %95 {approx = true} : vector<8x1xf32> -> vector<8x1xf32>
    %97 = vector.broadcast %96 : vector<8x1xf32> to vector<8x8xf32>
    %98 = arith.mulf %93, %97 : vector<8x8xf32>
    %99 = arith.truncf %98 : vector<8x8xf32> to vector<8x8xbf16>
    %100 = arith.truncf %84 : vector<8x32xf32> to vector<8x32xbf16>
    %cst_38 = arith.constant dense<0.000000e+00> : vector<8x32xf32>
    %101 = tpu.matmul %99, %100, %cst_38 {dimension_numbers = #tpu.dot_dimension_numbers<[1], [0], [0], [1], [0, 0, 1, 1], [], []>} : vector<8x8xbf16>, vector<8x32xbf16>, vector<8x32xf32> -> vector<8x32xf32>
    %102 = arith.truncf %101 : vector<8x32xf32> to vector<8x32xbf16>
    %c64 = arith.constant 64 : index
    %c0_39 = arith.constant 0 : index
    %103 = vector.load %arg7[%c64, %c0_39] : memref<128x128xbf16, #tpu.memory_space<vmem>>, vector<32x128xbf16>
    %cst_40 = arith.constant dense<0.000000e+00> : vector<8x128xf32>
    %104 = tpu.matmul %102, %103, %cst_40 {dimension_numbers = #tpu.dot_dimension_numbers<[1], [0], [0], [1], [0, 0, 1, 1], [], []>} : vector<8x32xbf16>, vector<32x128xbf16>, vector<8x128xf32> -> vector<8x128xf32>
    %105 = arith.addf %81, %104 : vector<8x128xf32>
    %106 = vector.extract_strided_slice %30 {offsets = [0, 96], sizes = [8, 32], strides = [1, 1]} : vector<8x384xf32> to vector<8x32xf32>
    %107 = vector.extract_strided_slice %30 {offsets = [0, 224], sizes = [8, 32], strides = [1, 1]} : vector<8x384xf32> to vector<8x32xf32>
    %108 = vector.extract_strided_slice %30 {offsets = [0, 352], sizes = [8, 32], strides = [1, 1]} : vector<8x384xf32> to vector<8x32xf32>
    "tpu.trace_start"() <{level = 10 : i32, message = "td,sd->ts"}> : () -> ()
    %cst_41 = arith.constant dense<0.000000e+00> : vector<8x8xf32>
    %109 = tpu.matmul %106, %107, %cst_41 {dimension_numbers = #tpu.dot_dimension_numbers<[1], [1], [0], [0], [0, 0, 1, 0], [], []>} : vector<8x32xf32>, vector<8x32xf32>, vector<8x8xf32> -> vector<8x8xf32>
    "tpu.trace_stop"() : () -> ()
    %cst_42 = arith.constant 0.176776692 : f32
    %110 = vector.broadcast %cst_42 : f32 to vector<8x8xf32>
    %111 = arith.mulf %109, %110 : vector<8x8xf32>
    %112 = arith.addf %111, %32 : vector<8x8xf32>
    %cst_43 = arith.constant dense<0xFF800000> : vector<8xf32>
    %113 = vector.multi_reduction <maximumf>, %112, %cst_43 [1] : vector<8x8xf32> to vector<8xf32>
    %114 = vector.shape_cast %113 : vector<8xf32> to vector<8x1xf32>
    %115 = vector.broadcast %114 : vector<8x1xf32> to vector<8x8xf32>
    %116 = arith.subf %112, %115 : vector<8x8xf32>
    %117 = math.exp %116 : vector<8x8xf32>
    %cst_44 = arith.constant dense<0.000000e+00> : vector<8xf32>
    %118 = vector.multi_reduction <add>, %117, %cst_44 [1] : vector<8x8xf32> to vector<8xf32>
    %119 = vector.shape_cast %118 : vector<8xf32> to vector<8x1xf32>
    %120 = tpu.reciprocal %119 {approx = true} : vector<8x1xf32> -> vector<8x1xf32>
    %121 = vector.broadcast %120 : vector<8x1xf32> to vector<8x8xf32>
    %122 = arith.mulf %117, %121 : vector<8x8xf32>
    %123 = arith.truncf %122 : vector<8x8xf32> to vector<8x8xbf16>
    %124 = arith.truncf %108 : vector<8x32xf32> to vector<8x32xbf16>
    %cst_45 = arith.constant dense<0.000000e+00> : vector<8x32xf32>
    %125 = tpu.matmul %123, %124, %cst_45 {dimension_numbers = #tpu.dot_dimension_numbers<[1], [0], [0], [1], [0, 0, 1, 1], [], []>} : vector<8x8xbf16>, vector<8x32xbf16>, vector<8x32xf32> -> vector<8x32xf32>
    %126 = arith.truncf %125 : vector<8x32xf32> to vector<8x32xbf16>
    %c96 = arith.constant 96 : index
    %c0_46 = arith.constant 0 : index
    %127 = vector.load %arg7[%c96, %c0_46] : memref<128x128xbf16, #tpu.memory_space<vmem>>, vector<32x128xbf16>
    %cst_47 = arith.constant dense<0.000000e+00> : vector<8x128xf32>
    %128 = tpu.matmul %126, %127, %cst_47 {dimension_numbers = #tpu.dot_dimension_numbers<[1], [0], [0], [1], [0, 0, 1, 1], [], []>} : vector<8x32xbf16>, vector<32x128xbf16>, vector<8x128xf32> -> vector<8x128xf32>
    %129 = arith.addf %105, %128 : vector<8x128xf32>
    %130 = arith.addf %2, %129 : vector<8x128xf32>
    %c0_48 = arith.constant 0 : index
    %c0_49 = arith.constant 0 : index
    %131 = vector.load %arg8[%c0_48, %c0_49] : memref<1x128xf32, #tpu.memory_space<vmem>>, vector<1x128xf32>
    %132 = vector.broadcast %131 : vector<1x128xf32> to vector<8x128xf32>
    %133 = arith.addf %130, %132 : vector<8x128xf32>
    %134 = arith.truncf %133 : vector<8x128xf32> to vector<8x128xbf16>
    %c0_50 = arith.constant 0 : index
    %c0_51 = arith.constant 0 : index
    %c0_52 = arith.constant 0 : index
    %135 = vector.load %arg9[%c0_50, %c0_51, %c0_52] : memref<1x8x128xbf16, #tpu.memory_space<vmem>>, vector<1x8x128xbf16>
    %136 = vector.shape_cast %135 : vector<1x8x128xbf16> to vector<8x128xbf16>
    %137 = vector.shape_cast %134 : vector<8x128xbf16> to vector<1x8x128xbf16>
    tpu.vector_store %arg9[%c0_50, %c0_51, %c0_52], %137 {strides = array<i32>} : memref<1x8x128xbf16, #tpu.memory_space<vmem>>, vector<1x8x128xbf16>,
    return
  }
  func.func @transform_0(%arg0: i32) -> (i32, i32, i32) {
    %c0_i32 = arith.constant 0 : i32
    %c0_i32_0 = arith.constant 0 : i32
    %c0_i32_1 = arith.constant 0 : i32
    return %arg0, %c0_i32, %c0_i32_0 : i32, i32, i32
  }
  func.func @transform_1(%arg0: i32) -> (i32, i32, i32) {
    %c0_i32 = arith.constant 0 : i32
    %c0_i32_0 = arith.constant 0 : i32
    %c0_i32_1 = arith.constant 0 : i32
    return %arg0, %c0_i32, %c0_i32_0 : i32, i32, i32
  }
  func.func @transform_2(%arg0: i32) -> (i32, i32) {
    %c0_i32 = arith.constant 0 : i32
    %c0_i32_0 = arith.constant 0 : i32
    %c0_i32_1 = arith.constant 0 : i32
    return %c0_i32, %c0_i32_0 : i32, i32
  }
  func.func @transform_3(%arg0: i32) -> (i32, i32) {
    %c0_i32 = arith.constant 0 : i32
    %c0_i32_0 = arith.constant 0 : i32
    %c0_i32_1 = arith.constant 0 : i32
    return %c0_i32, %c0_i32_0 : i32, i32
  }
  func.func @transform_4(%arg0: i32) -> (i32, i32) {
    %c0_i32 = arith.constant 0 : i32
    %c0_i32_0 = arith.constant 0 : i32
    %c0_i32_1 = arith.constant 0 : i32
    return %c0_i32, %c0_i32_0 : i32, i32
  }
  func.func @transform_5(%arg0: i32) -> (i32, i32) {
    %c0_i32 = arith.constant 0 : i32
    %c0_i32_0 = arith.constant 0 : i32
    %c0_i32_1 = arith.constant 0 : i32
    return %c0_i32, %c0_i32_0 : i32, i32
  }
  func.func @transform_6(%arg0: i32) -> (i32, i32) {
    %c0_i32 = arith.constant 0 : i32
    %c0_i32_0 = arith.constant 0 : i32
    %c0_i32_1 = arith.constant 0 : i32
    return %c0_i32, %c0_i32_0 : i32, i32
  }
  func.func @transform_7(%arg0: i32) -> (i32, i32) {
    %c0_i32 = arith.constant 0 : i32
    %c0_i32_0 = arith.constant 0 : i32
    %c0_i32_1 = arith.constant 0 : i32
    return %c0_i32, %c0_i32_0 : i32, i32
  }
  func.func @transform_8(%arg0: i32) -> (i32, i32, i32) {
    %c0_i32 = arith.constant 0 : i32
    %c0_i32_0 = arith.constant 0 : i32
    %c0_i32_1 = arith.constant 0 : i32
    return %arg0, %c0_i32, %c0_i32_0 : i32, i32, i32
  }
}

module attributes {stable_mosaic.version = 11 : i64} {
  func.func @_mlp_block_kernel(%arg0: i32, %arg1: memref<1x8x128xbf16, #tpu.memory_space<vmem>>, %arg2: memref<1x128xf32, #tpu.memory_space<vmem>>, %arg3: memref<1x128xf32, #tpu.memory_space<vmem>>, %arg4: memref<128x512xbf16, #tpu.memory_space<vmem>>, %arg5: memref<1x512xf32, #tpu.memory_space<vmem>>, %arg6: memref<512x128xbf16, #tpu.memory_space<vmem>>, %arg7: memref<1x128xf32, #tpu.memory_space<vmem>>, %arg8: memref<1x8x128xbf16, #tpu.memory_space<vmem>>) attributes {dimension_semantics = [#tpu.dimension_semantics<parallel>], iteration_bounds = array<i64: 2>, scalar_prefetch = 0 : i64, scratch_operands = 0 : i64, tpu.core_type = #tpu.core_type<tc>, window_params = [{transform_indices = @transform_0, window_bounds = array<i64: 1, 8, 128>}, {pipeline_mode = #tpu.pipeline_mode<synchronous>, transform_indices = @transform_1, window_bounds = array<i64: 1, 128>}, {pipeline_mode = #tpu.pipeline_mode<synchronous>, transform_indices = @transform_2, window_bounds = array<i64: 1, 128>}, {pipeline_mode = #tpu.pipeline_mode<synchronous>, transform_indices = @transform_3, window_bounds = array<i64: 128, 512>}, {pipeline_mode = #tpu.pipeline_mode<synchronous>, transform_indices = @transform_4, window_bounds = array<i64: 1, 512>}, {pipeline_mode = #tpu.pipeline_mode<synchronous>, transform_indices = @transform_5, window_bounds = array<i64: 512, 128>}, {pipeline_mode = #tpu.pipeline_mode<synchronous>, transform_indices = @transform_6, window_bounds = array<i64: 1, 128>}, {transform_indices = @transform_7, window_bounds = array<i64: 1, 8, 128>}]} {
    %c0 = arith.constant 0 : index
    %c0_0 = arith.constant 0 : index
    %c0_1 = arith.constant 0 : index
    %0 = vector.load %arg1[%c0, %c0_0, %c0_1] : memref<1x8x128xbf16, #tpu.memory_space<vmem>>, vector<1x8x128xbf16>
    %1 = vector.shape_cast %0 : vector<1x8x128xbf16> to vector<8x128xbf16>
    %2 = arith.extf %1 : vector<8x128xbf16> to vector<8x128xf32>
    %c0_2 = arith.constant 0 : index
    %c0_3 = arith.constant 0 : index
    %3 = vector.load %arg2[%c0_2, %c0_3] : memref<1x128xf32, #tpu.memory_space<vmem>>, vector<1x128xf32>
    %c0_4 = arith.constant 0 : index
    %c0_5 = arith.constant 0 : index
    %4 = vector.load %arg3[%c0_4, %c0_5] : memref<1x128xf32, #tpu.memory_space<vmem>>, vector<1x128xf32>
    %cst = arith.constant dense<0.000000e+00> : vector<8xf32>
    %5 = vector.multi_reduction <add>, %2, %cst [1] : vector<8x128xf32> to vector<8xf32>
    %6 = vector.shape_cast %5 : vector<8xf32> to vector<8x1xf32>
    %cst_6 = arith.constant 1.280000e+02 : f32
    %7 = vector.broadcast %cst_6 : f32 to vector<8x1xf32>
    %8 = arith.divf %6, %7 : vector<8x1xf32>
    %9 = vector.broadcast %8 : vector<8x1xf32> to vector<8x128xf32>
    %10 = arith.subf %2, %9 : vector<8x128xf32>
    %11 = arith.mulf %10, %10 : vector<8x128xf32>
    %cst_7 = arith.constant dense<0.000000e+00> : vector<8xf32>
    %12 = vector.multi_reduction <add>, %11, %cst_7 [1] : vector<8x128xf32> to vector<8xf32>
    %13 = vector.shape_cast %12 : vector<8xf32> to vector<8x1xf32>
    %cst_8 = arith.constant 1.280000e+02 : f32
    %14 = vector.broadcast %cst_8 : f32 to vector<8x1xf32>
    %15 = arith.divf %13, %14 : vector<8x1xf32>
    %cst_9 = arith.constant 9.99999974E-6 : f32
    %16 = vector.broadcast %cst_9 : f32 to vector<8x1xf32>
    %17 = arith.addf %15, %16 : vector<8x1xf32>
    %18 = math.rsqrt %17 : vector<8x1xf32>
    %19 = vector.broadcast %18 : vector<8x1xf32> to vector<8x128xf32>
    %20 = arith.mulf %10, %19 : vector<8x128xf32>
    %21 = vector.broadcast %3 : vector<1x128xf32> to vector<8x128xf32>
    %22 = arith.mulf %20, %21 : vector<8x128xf32>
    %23 = vector.broadcast %4 : vector<1x128xf32> to vector<8x128xf32>
    %24 = arith.addf %22, %23 : vector<8x128xf32>
    %25 = arith.truncf %24 : vector<8x128xf32> to vector<8x128xbf16>
    %c0_10 = arith.constant 0 : index
    %c0_11 = arith.constant 0 : index
    %26 = vector.load %arg4[%c0_10, %c0_11] : memref<128x512xbf16, #tpu.memory_space<vmem>>, vector<128x512xbf16>
    %cst_12 = arith.constant dense<0.000000e+00> : vector<8x512xf32>
    %27 = tpu.matmul %25, %26, %cst_12 {dimension_numbers = #tpu.dot_dimension_numbers<[1], [0], [0], [1], [0, 0, 1, 1], [], []>} : vector<8x128xbf16>, vector<128x512xbf16>, vector<8x512xf32> -> vector<8x512xf32>
    %c0_13 = arith.constant 0 : index
    %c0_14 = arith.constant 0 : index
    %28 = vector.load %arg5[%c0_13, %c0_14] : memref<1x512xf32, #tpu.memory_space<vmem>>, vector<1x512xf32>
    %29 = vector.broadcast %28 : vector<1x512xf32> to vector<8x512xf32>
    %30 = arith.addf %27, %29 : vector<8x512xf32>
    %31 = arith.mulf %30, %30 : vector<8x512xf32>
    %32 = arith.mulf %30, %31 : vector<8x512xf32>
    %cst_15 = arith.constant 4.471500e-02 : f32
    %33 = vector.broadcast %cst_15 : f32 to vector<8x512xf32>
    %34 = arith.mulf %33, %32 : vector<8x512xf32>
    %35 = arith.addf %30, %34 : vector<8x512xf32>
    %cst_16 = arith.constant 0.797884583 : f32
    %36 = vector.broadcast %cst_16 : f32 to vector<8x512xf32>
    %37 = arith.mulf %36, %35 : vector<8x512xf32>
    %38 = math.tanh %37 : vector<8x512xf32>
    %cst_17 = arith.constant 1.000000e+00 : f32
    %39 = vector.broadcast %cst_17 : f32 to vector<8x512xf32>
    %40 = arith.addf %39, %38 : vector<8x512xf32>
    %cst_18 = arith.constant 5.000000e-01 : f32
    %41 = vector.broadcast %cst_18 : f32 to vector<8x512xf32>
    %42 = arith.mulf %41, %40 : vector<8x512xf32>
    %43 = arith.mulf %30, %42 : vector<8x512xf32>
    %44 = arith.truncf %43 : vector<8x512xf32> to vector<8x512xbf16>
    %c0_19 = arith.constant 0 : index
    %c0_20 = arith.constant 0 : index
    %45 = vector.load %arg6[%c0_19, %c0_20] : memref<512x128xbf16, #tpu.memory_space<vmem>>, vector<512x128xbf16>
    %cst_21 = arith.constant dense<0.000000e+00> : vector<8x128xf32>
    %46 = tpu.matmul %44, %45, %cst_21 {dimension_numbers = #tpu.dot_dimension_numbers<[1], [0], [0], [1], [0, 0, 1, 1], [], []>} : vector<8x512xbf16>, vector<512x128xbf16>, vector<8x128xf32> -> vector<8x128xf32>
    %c0_22 = arith.constant 0 : index
    %c0_23 = arith.constant 0 : index
    %47 = vector.load %arg7[%c0_22, %c0_23] : memref<1x128xf32, #tpu.memory_space<vmem>>, vector<1x128xf32>
    %48 = vector.broadcast %47 : vector<1x128xf32> to vector<8x128xf32>
    %49 = arith.addf %46, %48 : vector<8x128xf32>
    %50 = arith.addf %2, %49 : vector<8x128xf32>
    %51 = arith.truncf %50 : vector<8x128xf32> to vector<8x128xbf16>
    %c0_24 = arith.constant 0 : index
    %c0_25 = arith.constant 0 : index
    %c0_26 = arith.constant 0 : index
    %52 = vector.load %arg8[%c0_24, %c0_25, %c0_26] : memref<1x8x128xbf16, #tpu.memory_space<vmem>>, vector<1x8x128xbf16>
    %53 = vector.shape_cast %52 : vector<1x8x128xbf16> to vector<8x128xbf16>
    %54 = vector.shape_cast %51 : vector<8x128xbf16> to vector<1x8x128xbf16>
    tpu.vector_store %arg8[%c0_24, %c0_25, %c0_26], %54 {strides = array<i32>} : memref<1x8x128xbf16, #tpu.memory_space<vmem>>, vector<1x8x128xbf16>,
    return
  }
  func.func @transform_0(%arg0: i32) -> (i32, i32, i32) {
    %c0_i32 = arith.constant 0 : i32
    %c0_i32_0 = arith.constant 0 : i32
    %c0_i32_1 = arith.constant 0 : i32
    return %arg0, %c0_i32, %c0_i32_0 : i32, i32, i32
  }
  func.func @transform_1(%arg0: i32) -> (i32, i32) {
    %c0_i32 = arith.constant 0 : i32
    %c0_i32_0 = arith.constant 0 : i32
    %c0_i32_1 = arith.constant 0 : i32
    return %c0_i32, %c0_i32_0 : i32, i32
  }
  func.func @transform_2(%arg0: i32) -> (i32, i32) {
    %c0_i32 = arith.constant 0 : i32
    %c0_i32_0 = arith.constant 0 : i32
    %c0_i32_1 = arith.constant 0 : i32
    return %c0_i32, %c0_i32_0 : i32, i32
  }
  func.func @transform_3(%arg0: i32) -> (i32, i32) {
    %c0_i32 = arith.constant 0 : i32
    %c0_i32_0 = arith.constant 0 : i32
    %c0_i32_1 = arith.constant 0 : i32
    return %c0_i32, %c0_i32_0 : i32, i32
  }
  func.func @transform_4(%arg0: i32) -> (i32, i32) {
    %c0_i32 = arith.constant 0 : i32
    %c0_i32_0 = arith.constant 0 : i32
    %c0_i32_1 = arith.constant 0 : i32
    return %c0_i32, %c0_i32_0 : i32, i32
  }
  func.func @transform_5(%arg0: i32) -> (i32, i32) {
    %c0_i32 = arith.constant 0 : i32
    %c0_i32_0 = arith.constant 0 : i32
    %c0_i32_1 = arith.constant 0 : i32
    return %c0_i32, %c0_i32_0 : i32, i32
  }
  func.func @transform_6(%arg0: i32) -> (i32, i32) {
    %c0_i32 = arith.constant 0 : i32
    %c0_i32_0 = arith.constant 0 : i32
    %c0_i32_1 = arith.constant 0 : i32
    return %c0_i32, %c0_i32_0 : i32, i32
  }
  func.func @transform_7(%arg0: i32) -> (i32, i32, i32) {
    %c0_i32 = arith.constant 0 : i32
    %c0_i32_0 = arith.constant 0 : i32
    %c0_i32_1 = arith.constant 0 : i32
    return %arg0, %c0_i32, %c0_i32_0 : i32, i32, i32
  }
}

module attributes {stable_mosaic.version = 11 : i64} {
  func.func @_head_block_kernel(%arg0: i32, %arg1: memref<1x8x128xbf16, #tpu.memory_space<vmem>>, %arg2: memref<1x128xf32, #tpu.memory_space<vmem>>, %arg3: memref<1x128xf32, #tpu.memory_space<vmem>>, %arg4: memref<128x384xbf16, #tpu.memory_space<vmem>>, %arg5: memref<1x8x384xf32, #tpu.memory_space<vmem>>) attributes {dimension_semantics = [#tpu.dimension_semantics<parallel>], iteration_bounds = array<i64: 2>, scalar_prefetch = 0 : i64, scratch_operands = 0 : i64, tpu.core_type = #tpu.core_type<tc>, window_params = [{transform_indices = @transform_0, window_bounds = array<i64: 1, 8, 128>}, {pipeline_mode = #tpu.pipeline_mode<synchronous>, transform_indices = @transform_1, window_bounds = array<i64: 1, 128>}, {pipeline_mode = #tpu.pipeline_mode<synchronous>, transform_indices = @transform_2, window_bounds = array<i64: 1, 128>}, {pipeline_mode = #tpu.pipeline_mode<synchronous>, transform_indices = @transform_3, window_bounds = array<i64: 128, 384>}, {transform_indices = @transform_4, window_bounds = array<i64: 1, 8, 384>}]} {
    %c0 = arith.constant 0 : index
    %c0_0 = arith.constant 0 : index
    %c0_1 = arith.constant 0 : index
    %0 = vector.load %arg1[%c0, %c0_0, %c0_1] : memref<1x8x128xbf16, #tpu.memory_space<vmem>>, vector<1x8x128xbf16>
    %1 = vector.shape_cast %0 : vector<1x8x128xbf16> to vector<8x128xbf16>
    %2 = arith.extf %1 : vector<8x128xbf16> to vector<8x128xf32>
    %c0_2 = arith.constant 0 : index
    %c0_3 = arith.constant 0 : index
    %3 = vector.load %arg2[%c0_2, %c0_3] : memref<1x128xf32, #tpu.memory_space<vmem>>, vector<1x128xf32>
    %c0_4 = arith.constant 0 : index
    %c0_5 = arith.constant 0 : index
    %4 = vector.load %arg3[%c0_4, %c0_5] : memref<1x128xf32, #tpu.memory_space<vmem>>, vector<1x128xf32>
    %cst = arith.constant dense<0.000000e+00> : vector<8xf32>
    %5 = vector.multi_reduction <add>, %2, %cst [1] : vector<8x128xf32> to vector<8xf32>
    %6 = vector.shape_cast %5 : vector<8xf32> to vector<8x1xf32>
    %cst_6 = arith.constant 1.280000e+02 : f32
    %7 = vector.broadcast %cst_6 : f32 to vector<8x1xf32>
    %8 = arith.divf %6, %7 : vector<8x1xf32>
    %9 = vector.broadcast %8 : vector<8x1xf32> to vector<8x128xf32>
    %10 = arith.subf %2, %9 : vector<8x128xf32>
    %11 = arith.mulf %10, %10 : vector<8x128xf32>
    %cst_7 = arith.constant dense<0.000000e+00> : vector<8xf32>
    %12 = vector.multi_reduction <add>, %11, %cst_7 [1] : vector<8x128xf32> to vector<8xf32>
    %13 = vector.shape_cast %12 : vector<8xf32> to vector<8x1xf32>
    %cst_8 = arith.constant 1.280000e+02 : f32
    %14 = vector.broadcast %cst_8 : f32 to vector<8x1xf32>
    %15 = arith.divf %13, %14 : vector<8x1xf32>
    %cst_9 = arith.constant 9.99999974E-6 : f32
    %16 = vector.broadcast %cst_9 : f32 to vector<8x1xf32>
    %17 = arith.addf %15, %16 : vector<8x1xf32>
    %18 = math.rsqrt %17 : vector<8x1xf32>
    %19 = vector.broadcast %18 : vector<8x1xf32> to vector<8x128xf32>
    %20 = arith.mulf %10, %19 : vector<8x128xf32>
    %21 = vector.broadcast %3 : vector<1x128xf32> to vector<8x128xf32>
    %22 = arith.mulf %20, %21 : vector<8x128xf32>
    %23 = vector.broadcast %4 : vector<1x128xf32> to vector<8x128xf32>
    %24 = arith.addf %22, %23 : vector<8x128xf32>
    %25 = arith.truncf %24 : vector<8x128xf32> to vector<8x128xbf16>
    %c0_10 = arith.constant 0 : index
    %c0_11 = arith.constant 0 : index
    %26 = vector.load %arg4[%c0_10, %c0_11] : memref<128x384xbf16, #tpu.memory_space<vmem>>, vector<128x384xbf16>
    %cst_12 = arith.constant dense<0.000000e+00> : vector<8x384xf32>
    %27 = tpu.matmul %25, %26, %cst_12 {dimension_numbers = #tpu.dot_dimension_numbers<[1], [0], [0], [1], [0, 0, 1, 1], [], []>} : vector<8x128xbf16>, vector<128x384xbf16>, vector<8x384xf32> -> vector<8x384xf32>
    %c0_13 = arith.constant 0 : index
    %c0_14 = arith.constant 0 : index
    %c0_15 = arith.constant 0 : index
    %28 = vector.load %arg5[%c0_13, %c0_14, %c0_15] : memref<1x8x384xf32, #tpu.memory_space<vmem>>, vector<1x8x384xf32>
    %29 = vector.shape_cast %28 : vector<1x8x384xf32> to vector<8x384xf32>
    %30 = vector.shape_cast %27 : vector<8x384xf32> to vector<1x8x384xf32>
    tpu.vector_store %arg5[%c0_13, %c0_14, %c0_15], %30 {strides = array<i32>} : memref<1x8x384xf32, #tpu.memory_space<vmem>>, vector<1x8x384xf32>,
    return
  }
  func.func @transform_0(%arg0: i32) -> (i32, i32, i32) {
    %c0_i32 = arith.constant 0 : i32
    %c0_i32_0 = arith.constant 0 : i32
    %c0_i32_1 = arith.constant 0 : i32
    return %arg0, %c0_i32, %c0_i32_0 : i32, i32, i32
  }
  func.func @transform_1(%arg0: i32) -> (i32, i32) {
    %c0_i32 = arith.constant 0 : i32
    %c0_i32_0 = arith.constant 0 : i32
    %c0_i32_1 = arith.constant 0 : i32
    return %c0_i32, %c0_i32_0 : i32, i32
  }
  func.func @transform_2(%arg0: i32) -> (i32, i32) {
    %c0_i32 = arith.constant 0 : i32
    %c0_i32_0 = arith.constant 0 : i32
    %c0_i32_1 = arith.constant 0 : i32
    return %c0_i32, %c0_i32_0 : i32, i32
  }
  func.func @transform_3(%arg0: i32) -> (i32, i32) {
    %c0_i32 = arith.constant 0 : i32
    %c0_i32_0 = arith.constant 0 : i32
    %c0_i32_1 = arith.constant 0 : i32
    return %c0_i32, %c0_i32_0 : i32, i32
  }
  func.func @transform_4(%arg0: i32) -> (i32, i32, i32) {
    %c0_i32 = arith.constant 0 : i32
    %c0_i32_0 = arith.constant 0 : i32
    %c0_i32_1 = arith.constant 0 : i32
    return %arg0, %c0_i32, %c0_i32_0 : i32, i32, i32
  }
}

</mosaic_0001>

<llo_original>
// kernel: gpt_actor_forward.6
$region0: #{gpt_actor_forward.6}
  #allocation0 [shape = 'u32[]', space=smem, size = 0x4, offset = 0x4, fixed_abs, tag = 'smem constant byte address 0x4 - core index']
  #allocation1 [shape = 'u32[144,128]{1,0:T(1,128)}', space=vmem, size = 0x12000, scoped, tag = 'internal scratch']
  %s0 = inlined_call_operand.vmem [shape: bf16[2,8,128], index: 0, kind: input, shape index: {}]
  %s1 = inlined_call_operand.vmem [shape: f32[1,128], index: 1, kind: input, shape index: {}]
  %s2 = inlined_call_operand.vmem [shape: f32[1,128], index: 2, kind: input, shape index: {}]
  %s3 = inlined_call_operand.vmem [shape: bf16[128,512], index: 3, kind: input, shape index: {}]
  %s4 = inlined_call_operand.vmem [shape: f32[1,512], index: 4, kind: input, shape index: {}]
  %s5 = inlined_call_operand.vmem [shape: bf16[512,128], index: 5, kind: input, shape index: {}]
  %s6 = inlined_call_operand.hbm [shape: f32[1,128], index: 6, kind: input, shape index: {}]
  %s7 = inlined_call_operand.vmem [shape: bf16[2,8,128], index: 7, kind: output, shape index: {}]
  %s8 = sld [smem:[#allocation0]]
  $region65: #{gpt_actor_forward.6} parent=0
    _
  %s10 = ssub.s32 1, %s8
  %s11 = scalar_select 0, %s10, %s8
  $region1: #{gpt_actor_forward.6} parent=0
    #allocation2 [shape = 'u8[512]{0}', space=vmem, size = 0x400, scoped, tag = 'input window, operand 6, single buffered']
    #allocation3 [shape = 's32[2]{0}', space=sflag, size = 0x8, scoped, tag = 'scoped memory for gpt_actor_forward.6']
    %12 = vsyncpa [#allocation3], 0
    loop: start=0, step=1, limit=4
    $region2: #{gpt_actor_forward.6} parent=1 // loop_pre_header
      _
    $region3: #{gpt_actor_forward.6} parent=1 // loop_header
      %s14 = sphi 0, %s18
      %p15 = scmp.ge.s32.totalorder %s14, 4
      %s24 = sphi 0, %s26
      %s27 = sphi 0, %s24
      %s28 = sphi 0, %s27
      %s44 = sphi 0, %s28
      %s48 = sphi 0, %s48
      %s50 = sphi 0, %s48
      %s51 = sphi 0, %s50
      %s65 = sphi 0, %s51
      %s69 = sphi 0, %s69
      %s71 = sphi 0, %s69
      %s72 = sphi 0, %s71
      %s86 = sphi 0, %s72
      %s90 = sphi 0, %s90
      %s92 = sphi 0, %s90
      %s93 = sphi 0, %s92
      %s107 = sphi 0, %s93
      %s111 = sphi 0, %s111
      %s113 = sphi 0, %s111
      %s114 = sphi 0, %s113
      %s128 = sphi 0, %s114
      %s132 = sphi 0, %s132
      %s134 = sphi 0, %s132
      %s135 = sphi 0, %s134
      %s149 = sphi 0, %s135
      %s153 = sphi 0, %s153
      %s155 = sphi 0, %s153
      %s156 = sphi 0, %s155
      %s170 = sphi 0, %s156
      %s176 = sphi 0, %s178
      %s179 = sphi 0, %s176
      %s180 = sphi 0, %s179
      %s196 = sphi 0, %s180
    $region4: #{gpt_actor_forward.6} parent=1 // loop_header_branch
      %17 = sbr.rel (%p15) target = $region8
    $region5: #{gpt_actor_forward.6} parent=1 // loop_body
      %s19 = ssub.s32 %s14, 1
      %s20 = ssub.s32 %s14, 2
      %s21 = sadd.s32 %s14, 1
      %s22 = ssub.s32 %s14, %s21
      %p23 = scmp.eq.s32.totalorder %s22, 0
      %s25 = sadd.s32 %s24, 1
      %s26 = scalar_select %p23, %s24, %s25
      %p29 = pneg %p23
      %p30 = scmp.eq.s32.totalorder %s14, 1
      %p31 = por %p29, %p30
      %p32 = scmp.ne.s32.totalorder %s24, %s27
      %p33 = scmp.eq.s32.totalorder %s14, 0
      %p34 = por %p32, %p33
      %p35 = scmp.ne.s32.totalorder %s24, %s27
      %p36 = scmp.eq.s32.totalorder %s19, 1
      %p37 = por %p35, %p36
      %p38 = scmp.ne.s32.totalorder %s27, %s28
      %p39 = scmp.eq.s32.totalorder %s19, 0
      %p40 = por %p38, %p39
      %p41 = scmp.ne.s32.totalorder %s27, %s28
      %p42 = scmp.eq.s32.totalorder %s20, 1
      %p43 = por %p41, %p42
      %p45 = scmp.ne.s32.totalorder %s28, %s44
      %p46 = scmp.eq.s32.totalorder %s20, 0
      %p47 = por %p45, %p46
      %s49 = sadd.s32 %s48, 1
      %p52 = scmp.eq.s32.totalorder %s14, 1
      %p53 = scmp.ne.s32.totalorder %s48, %s50
      %p54 = scmp.eq.s32.totalorder %s14, 0
      %p55 = por %p53, %p54
      %p56 = scmp.ne.s32.totalorder %s48, %s50
      %p57 = scmp.eq.s32.totalorder %s19, 1
      %p58 = por %p56, %p57
      %p59 = scmp.ne.s32.totalorder %s50, %s51
      %p60 = scmp.eq.s32.totalorder %s19, 0
      %p61 = por %p59, %p60
      %p62 = scmp.ne.s32.totalorder %s50, %s51
      %p63 = scmp.eq.s32.totalorder %s20, 1
      %p64 = por %p62, %p63
      %p66 = scmp.ne.s32.totalorder %s51, %s65
      %p67 = scmp.eq.s32.totalorder %s20, 0
      %p68 = por %p66, %p67
      %s70 = sadd.s32 %s69, 1
      %p73 = scmp.eq.s32.totalorder %s14, 1
      %p74 = scmp.ne.s32.totalorder %s69, %s71
      %p75 = scmp.eq.s32.totalorder %s14, 0
      %p76 = por %p74, %p75
      %p77 = scmp.ne.s32.totalorder %s69, %s71
      %p78 = scmp.eq.s32.totalorder %s19, 1
      %p79 = por %p77, %p78
      %p80 = scmp.ne.s32.totalorder %s71, %s72
      %p81 = scmp.eq.s32.totalorder %s19, 0
      %p82 = por %p80, %p81
      %p83 = scmp.ne.s32.totalorder %s71, %s72
      %p84 = scmp.eq.s32.totalorder %s20, 1
      %p85 = por %p83, %p84
      %p87 = scmp.ne.s32.totalorder %s72, %s86
      %p88 = scmp.eq.s32.totalorder %s20, 0
      %p89 = por %p87, %p88
      %s91 = sadd.s32 %s90, 1
      %p94 = scmp.eq.s32.totalorder %s14, 1
      %p95 = scmp.ne.s32.totalorder %s90, %s92
      %p96 = scmp.eq.s32.totalorder %s14, 0
      %p97 = por %p95, %p96
      %p98 = scmp.ne.s32.totalorder %s90, %s92
      %p99 = scmp.eq.s32.totalorder %s19, 1
      %p100 = por %p98, %p99
      %p101 = scmp.ne.s32.totalorder %s92, %s93
      %p102 = scmp.eq.s32.totalorder %s19, 0
      %p103 = por %p101, %p102
      %p104 = scmp.ne.s32.totalorder %s92, %s93
      %p105 = scmp.eq.s32.totalorder %s20, 1
      %p106 = por %p104, %p105
      %p108 = scmp.ne.s32.totalorder %s93, %s107
      %p109 = scmp.eq.s32.totalorder %s20, 0
      %p110 = por %p108, %p109
      %s112 = sadd.s32 %s111, 1
      %p115 = scmp.eq.s32.totalorder %s14, 1
      %p116 = scmp.ne.s32.totalorder %s111, %s113
      %p117 = scmp.eq.s32.totalorder %s14, 0
      %p118 = por %p116, %p117
      %p119 = scmp.ne.s32.totalorder %s111, %s113
      %p120 = scmp.eq.s32.totalorder %s19, 1
      %p121 = por %p119, %p120
      %p122 = scmp.ne.s32.totalorder %s113, %s114
      %p123 = scmp.eq.s32.totalorder %s19, 0
      %p124 = por %p122, %p123
      %p125 = scmp.ne.s32.totalorder %s113, %s114
      %p126 = scmp.eq.s32.totalorder %s20, 1
      %p127 = por %p125, %p126
      %p129 = scmp.ne.s32.totalorder %s114, %s128
      %p130 = scmp.eq.s32.totalorder %s20, 0
      %p131 = por %p129, %p130
      %s133 = sadd.s32 %s132, 1
      %p136 = scmp.eq.s32.totalorder %s14, 1
      %p137 = scmp.ne.s32.totalorder %s132, %s134
      %p138 = scmp.eq.s32.totalorder %s14, 0
      %p139 = por %p137, %p138
      %p140 = scmp.ne.s32.totalorder %s132, %s134
      %p141 = scmp.eq.s32.totalorder %s19, 1
      %p142 = por %p140, %p141
      %p143 = scmp.ne.s32.totalorder %s134, %s135
      %p144 = scmp.eq.s32.totalorder %s19, 0
      %p145 = por %p143, %p144
      %p146 = scmp.ne.s32.totalorder %s134, %s135
      %p147 = scmp.eq.s32.totalorder %s20, 1
      %p148 = por %p146, %p147
      %p150 = scmp.ne.s32.totalorder %s135, %s149
      %p151 = scmp.eq.s32.totalorder %s20, 0
      %p152 = por %p150, %p151
      %s154 = sadd.s32 %s153, 1
      %p157 = scmp.eq.s32.totalorder %s14, 1
      %p158 = scmp.ne.s32.totalorder %s153, %s155
      %p159 = scmp.eq.s32.totalorder %s14, 0
      %p160 = por %p158, %p159
      %p161 = scmp.ne.s32.totalorder %s153, %s155
      %p162 = scmp.eq.s32.totalorder %s19, 1
      %p163 = por %p161, %p162
      %p164 = scmp.ne.s32.totalorder %s155, %s156
      %p165 = scmp.eq.s32.totalorder %s19, 0
      %p166 = por %p164, %p165
      %p167 = scmp.ne.s32.totalorder %s155, %s156
      %p168 = scmp.eq.s32.totalorder %s20, 1
      %p169 = por %p167, %p168
      %p171 = scmp.ne.s32.totalorder %s156, %s170
      %p172 = scmp.eq.s32.totalorder %s20, 0
      %p173 = por %p171, %p172
      %s174 = ssub.s32 %s14, %s21
      %p175 = scmp.eq.s32.totalorder %s174, 0
      %s177 = sadd.s32 %s176, 1
      %s178 = scalar_select %p175, %s176, %s177
      %p181 = pneg %p175
      %p182 = scmp.eq.s32.totalorder %s14, 1
      %p183 = por %p181, %p182
      %p184 = scmp.ne.s32.totalorder %s176, %s179
      %p185 = scmp.eq.s32.totalorder %s14, 0
      %p186 = por %p184, %p185
      %p187 = scmp.ne.s32.totalorder %s176, %s179
      %p188 = scmp.eq.s32.totalorder %s19, 1
      %p189 = por %p187, %p188
      %p190 = scmp.ne.s32.totalorder %s179, %s180
      %p191 = scmp.eq.s32.totalorder %s19, 0
      %p192 = por %p190, %p191
      %p193 = scmp.ne.s32.totalorder %s179, %s180
      %p194 = scmp.eq.s32.totalorder %s20, 1
      %p195 = por %p193, %p194
      %p197 = scmp.ne.s32.totalorder %s180, %s196
      %p198 = scmp.eq.s32.totalorder %s20, 0
      %p199 = por %p197, %p198
      %p200 = scmp.le.s32.totalorder 1, %s14
      %p201 = scmp.lt.s32.totalorder %s14, 3
      %p202 = pnand %p200, %p201
      %p203 = pneg %p202
      // Predicated region
      $region9: #{gpt_actor_forward.6} parent=5 // pred_check
        _
      $region10: #{gpt_actor_forward.6} parent=5 // pred_check_branch
        %205 = sbr.rel (%p202) target = $region12
      $region11: #{gpt_actor_forward.6} parent=5 // pred_region
        %s206 = ssub.s32 %s14, 1
        // Predicated region
        $region13: #{gpt_actor_forward.6} parent=11 // pred_check
          %p207 = pneg %p61
        $region14: #{gpt_actor_forward.6} parent=11 // pred_check_branch
          %209 = sbr.rel (%p207) target = $region16
        $region15: #{gpt_actor_forward.6} parent=11 // pred_region
          _
        $region16: #{gpt_actor_forward.6} parent=11 // pred_fallthru
          _
        // Predicated region
        $region17: #{gpt_actor_forward.6} parent=11 // pred_check
          %p210 = pneg %p82
        $region18: #{gpt_actor_forward.6} parent=11 // pred_check_branch
          %212 = sbr.rel (%p210) target = $region20
        $region19: #{gpt_actor_forward.6} parent=11 // pred_region
          _
        $region20: #{gpt_actor_forward.6} parent=11 // pred_fallthru
          _
        // Predicated region
        $region21: #{gpt_actor_forward.6} parent=11 // pred_check
          %p213 = pneg %p103
        $region22: #{gpt_actor_forward.6} parent=11 // pred_check_branch
          %215 = sbr.rel (%p213) target = $region24
        $region23: #{gpt_actor_forward.6} parent=11 // pred_region
          _
        $region24: #{gpt_actor_forward.6} parent=11 // pred_fallthru
          _
        // Predicated region
        $region25: #{gpt_actor_forward.6} parent=11 // pred_check
          %p216 = pneg %p124
        $region26: #{gpt_actor_forward.6} parent=11 // pred_check_branch
          %218 = sbr.rel (%p216) target = $region28
        $region27: #{gpt_actor_forward.6} parent=11 // pred_region
          _
        $region28: #{gpt_actor_forward.6} parent=11 // pred_fallthru
          _
        // Predicated region
        $region29: #{gpt_actor_forward.6} parent=11 // pred_check
          %p219 = pneg %p145
        $region30: #{gpt_actor_forward.6} parent=11 // pred_check_branch
          %221 = sbr.rel (%p219) target = $region32
        $region31: #{gpt_actor_forward.6} parent=11 // pred_region
          _
        $region32: #{gpt_actor_forward.6} parent=11 // pred_fallthru
          _
        // Predicated region
        $region33: #{gpt_actor_forward.6} parent=11 // pred_check
          %p222 = pneg %p166
        $region34: #{gpt_actor_forward.6} parent=11 // pred_check_branch
          %224 = sbr.rel (%p222) target = $region36
        $region35: #{gpt_actor_forward.6} parent=11 // pred_region
          %s226 = ssub.s32 16, 16
          %227 = vsyncadd [#allocation3], %s226
          %s229 = sshll.u32 [#allocation2], 4
          %s230 = int_to_ptr.vmem [resolvable:$true] %s229
          %232 = dma.hbm_to_vmem [thread:$0]  %s6, 16, %s230, [#allocation3]
        $region36: #{gpt_actor_forward.6} parent=11 // pred_fallthru
          _
      $region12: #{gpt_actor_forward.6} parent=5 // pred_fallthru
        _
      %p233 = scmp.lt.s32.totalorder %s14, 2
      // Predicated region
      $region37: #{gpt_actor_forward.6} parent=5 // pred_check
        %p234 = pneg %p233
      $region38: #{gpt_actor_forward.6} parent=5 // pred_check_branch
        %236 = sbr.rel (%p234) target = $region40
      $region39: #{gpt_actor_forward.6} parent=5 // pred_region
        // Predicated region
        $region41: #{gpt_actor_forward.6} parent=39 // pred_check
          %p237 = pneg %p34
        $region42: #{gpt_actor_forward.6} parent=39 // pred_check_branch
          %239 = sbr.rel (%p237) target = $region44
        $region43: #{gpt_actor_forward.6} parent=39 // pred_region
          %p240 = scmp.lt.s32.totalorder %s14, 1
          %s241 = scalar_select %p240, %s14, 1
          %s242 = smul.addr %s241, 4
          %s243 = scalar_lea.vmem %s0, %s242
        $region44: #{gpt_actor_forward.6} parent=39 // pred_fallthru
          _
      $region40: #{gpt_actor_forward.6} parent=5 // pred_fallthru
        _
      %p244 = scmp.le.s32.totalorder 1, %s14
      %p245 = scmp.lt.s32.totalorder %s14, 3
      %p246 = pnand %p244, %p245
      %p247 = pneg %p246
      // Predicated region
      $region45: #{gpt_actor_forward.6} parent=5 // pred_check
        _
      $region46: #{gpt_actor_forward.6} parent=5 // pred_check_branch
        %249 = sbr.rel (%p246) target = $region48
      $region47: #{gpt_actor_forward.6} parent=5 // pred_region
        %s250 = ssub.s32 %s14, 1
        // Predicated region
        $region49: #{gpt_actor_forward.6} parent=47 // pred_check
          %p251 = pneg %p166
        $region50: #{gpt_actor_forward.6} parent=47 // pred_check_branch
          %253 = sbr.rel (%p251) target = $region52
        $region51: #{gpt_actor_forward.6} parent=47 // pred_region
          %254 = dma.done [#allocation3], 16
        $region52: #{gpt_actor_forward.6} parent=47 // pred_fallthru
          _
        %p255 = scmp.lt.s32.totalorder %s19, 1
        %s256 = scalar_select %p255, %s19, 1
        %s257 = smul.addr %s256, 4
        %s258 = scalar_lea.vmem %s0, %s257
        %p259 = pneg %p40
        %p260 = pneg %p37
        %p261 = pneg %p61
        %p262 = pneg %p58
        %p263 = pneg %p82
        %p264 = pneg %p79
        %p265 = pneg %p103
        %p266 = pneg %p100
        %p267 = pneg %p124
        %p268 = pneg %p121
        %p269 = pneg %p145
        %p270 = pneg %p142
        %p271 = pneg %p166
        %p272 = pneg %p163
        %p273 = pneg %p192
        %p274 = pneg %p189
        %p275 = scmp.lt.s32.totalorder %s19, 1
        %s276 = scalar_select %p275, %s19, 1
        %s277 = smul.addr %s276, 4
        %s278 = scalar_lea.vmem %s7, %s277
        %p279 = scmp.lt.s32.totalorder %s19, 1
        %s280 = scalar_select %p279, %s19, 1
        %s281 = smul.addr %s280, 4
        %s282 = scalar_lea.vmem %s0, %s281
        %p283 = scmp.lt.s32.totalorder %s19, 1
        %s284 = scalar_select %p283, %s19, 1
        %s285 = smul.addr %s284, 4
        %s286 = scalar_lea.vmem %s7, %s285
        %v288 = vld [vmem:[%s282] sm:$0xf]
        %v289 = vunpack.c.l.bf16 %v288
        %v290 = vld [vmem:[%s1] sm:$0x1]
        %v291 = vld [vmem:[%s2] sm:$0x1]
        %292 = vadd.xlane.f32.xlu0 %v289
        %v293 = vpop.xlane.xlu0 %292
        %v294 = vrcp.pop 128.0
        %v295 = vmul.f32 %v293, %v294
        %v296 = vsub.f32 %v289, %v295
        %v297 = vmul.f32 %v296, %v296
        %298 = vadd.xlane.f32.xlu0 %v297
        %v299 = vpop.xlane.xlu0 %298
        %v300 = vmul.f32 %v299, %v294
        %v301 = vadd.f32 %v300, 1e-05
        %v302 = vrsqrt.pop %v301
        %v303 = vmul.f32 %v296, %v302
        %v305 = vlaneseq
        %v306 = vshrl.u32 %v305, 7
        %v307 = vsub.s32 0, %v306
        %v308 = vrot.slane %v290, %v307
        %v310 = vmul.f32 %v303, %v308
        %v312 = vlaneseq
        %v313 = vshrl.u32 %v312, 7
        %v314 = vsub.s32 0, %v313
        %v315 = vrot.slane %v291, %v314
        %v317 = vadd.f32 %v310, %v315
        %v318 = vpack.c.bf16 %v317, %v317
        %v319 = vld [vmem:[%s3] sm:$0xff]
        %v320 = vld [vmem:[%s3 + $0x8] sm:$0xff]
        %v321 = vld [vmem:[%s3 + $0x10] sm:$0xff]
        %v322 = vld [vmem:[%s3 + $0x18] sm:$0xff]
        %v323 = vld [vmem:[%s3 + $0x20] sm:$0xff]
        %v324 = vld [vmem:[%s3 + $0x28] sm:$0xff]
        %v325 = vld [vmem:[%s3 + $0x30] sm:$0xff]
        %v326 = vld [vmem:[%s3 + $0x38] sm:$0xff]
        %v327 = vld [vmem:[%s3 + $0x40] sm:$0xff]
        %v328 = vld [vmem:[%s3 + $0x48] sm:$0xff]
        %v329 = vld [vmem:[%s3 + $0x50] sm:$0xff]
        %v330 = vld [vmem:[%s3 + $0x58] sm:$0xff]
        %v331 = vld [vmem:[%s3 + $0x60] sm:$0xff]
        %v332 = vld [vmem:[%s3 + $0x68] sm:$0xff]
        %v333 = vld [vmem:[%s3 + $0x70] sm:$0xff]
        %v334 = vld [vmem:[%s3 + $0x78] sm:$0xff]
        %v335 = vld [vmem:[%s3 + $0x80] sm:$0xff]
        %v336 = vld [vmem:[%s3 + $0x88] sm:$0xff]
        %v337 = vld [vmem:[%s3 + $0x90] sm:$0xff]
        %v338 = vld [vmem:[%s3 + $0x98] sm:$0xff]
        %v339 = vld [vmem:[%s3 + $0xa0] sm:$0xff]
        %v340 = vld [vmem:[%s3 + $0xa8] sm:$0xff]
        %v341 = vld [vmem:[%s3 + $0xb0] sm:$0xff]
        %v342 = vld [vmem:[%s3 + $0xb8] sm:$0xff]
        %v343 = vld [vmem:[%s3 + $0xc0] sm:$0xff]
        %v344 = vld [vmem:[%s3 + $0xc8] sm:$0xff]
        %v345 = vld [vmem:[%s3 + $0xd0] sm:$0xff]
        %v346 = vld [vmem:[%s3 + $0xd8] sm:$0xff]
        %v347 = vld [vmem:[%s3 + $0xe0] sm:$0xff]
        %v348 = vld [vmem:[%s3 + $0xe8] sm:$0xff]
        %v349 = vld [vmem:[%s3 + $0xf0] sm:$0xff]
        %v350 = vld [vmem:[%s3 + $0xf8] sm:$0xff]
        %v351 = vld [vmem:[%s4] sm:$0xf]
        %v353 = vlaneseq
        %v354 = vshrl.u32 %v353, 7
        %v355 = vsub.s32 0, %v354
        %v356 = vrot.slane %v351, %v355
        %v357 = vlaneseq
        %v358 = vshrl.u32 %v357, 7
        %v359 = vsub.s32 1, %v358
        %v360 = vrot.slane %v351, %v359
        %v361 = vlaneseq
        %v362 = vshrl.u32 %v361, 7
        %v363 = vsub.s32 2, %v362
        %v364 = vrot.slane %v351, %v363
        %v365 = vlaneseq
        %v366 = vshrl.u32 %v365, 7
        %v367 = vsub.s32 3, %v366
        %v368 = vrot.slane %v351, %v367
        %v405 = vunpack.c.l.b16 %v319
        %v406 = vunpack.c.h.b16 %v319
        %v407 = vunpack.c.l.b16 %v320
        %v408 = vunpack.c.h.b16 %v320
        %v409 = vunpack.c.l.b16 %v321
        %v410 = vunpack.c.h.b16 %v321
        %v411 = vunpack.c.l.b16 %v322
        %v412 = vunpack.c.h.b16 %v322
        %v413 = vunpack.c.l.b16 %v323
        %v414 = vunpack.c.h.b16 %v323
        %v415 = vunpack.c.l.b16 %v324
        %v416 = vunpack.c.h.b16 %v324
        %v417 = vunpack.c.l.b16 %v325
        %v418 = vunpack.c.h.b16 %v325
        %v419 = vunpack.c.l.b16 %v326
        %v420 = vunpack.c.h.b16 %v326
        %v421 = vunpack.c.l.b16 %v327
        %v422 = vunpack.c.h.b16 %v327
        %v423 = vunpack.c.l.b16 %v328
        %v424 = vunpack.c.h.b16 %v328
        %v425 = vunpack.c.l.b16 %v329
        %v426 = vunpack.c.h.b16 %v329
        %v427 = vunpack.c.l.b16 %v330
        %v428 = vunpack.c.h.b16 %v330
        %v429 = vunpack.c.l.b16 %v331
        %v430 = vunpack.c.h.b16 %v331
        %v431 = vunpack.c.l.b16 %v332
        %v432 = vunpack.c.h.b16 %v332
        %v433 = vunpack.c.l.b16 %v333
        %v434 = vunpack.c.h.b16 %v333
        %v435 = vunpack.c.l.b16 %v334
        %v436 = vunpack.c.h.b16 %v334
        %v437 = vunpack.c.l.b16 %v335
        %v438 = vunpack.c.h.b16 %v335
        %v439 = vunpack.c.l.b16 %v336
        %v440 = vunpack.c.h.b16 %v336
        %v441 = vunpack.c.l.b16 %v337
        %v442 = vunpack.c.h.b16 %v337
        %v443 = vunpack.c.l.b16 %v338
        %v444 = vunpack.c.h.b16 %v338
        %v445 = vunpack.c.l.b16 %v339
        %v446 = vunpack.c.h.b16 %v339
        %v447 = vunpack.c.l.b16 %v340
        %v448 = vunpack.c.h.b16 %v340
        %v449 = vunpack.c.l.b16 %v341
        %v450 = vunpack.c.h.b16 %v341
        %v451 = vunpack.c.l.b16 %v342
        %v452 = vunpack.c.h.b16 %v342
        %v453 = vunpack.c.l.b16 %v343
        %v454 = vunpack.c.h.b16 %v343
        %v455 = vunpack.c.l.b16 %v344
        %v456 = vunpack.c.h.b16 %v344
        %v457 = vunpack.c.l.b16 %v345
        %v458 = vunpack.c.h.b16 %v345
        %v459 = vunpack.c.l.b16 %v346
        %v460 = vunpack.c.h.b16 %v346
        %v461 = vunpack.c.l.b16 %v347
        %v462 = vunpack.c.h.b16 %v347
        %v463 = vunpack.c.l.b16 %v348
        %v464 = vunpack.c.h.b16 %v348
        %v465 = vunpack.c.l.b16 %v349
        %v466 = vunpack.c.h.b16 %v349
        %v467 = vunpack.c.l.b16 %v350
        %v468 = vunpack.c.h.b16 %v350
        %v469 = vpack.c.b16 %v409, %v405
        %v470 = vpack.c.b16 %v410, %v406
        %v471 = vpack.c.b16 %v411, %v407
        %v472 = vpack.c.b16 %v412, %v408
        %v473 = vpack.c.b16 %v417, %v413
        %v474 = vpack.c.b16 %v418, %v414
        %v475 = vpack.c.b16 %v419, %v415
        %v476 = vpack.c.b16 %v420, %v416
        %v477 = vpack.c.b16 %v425, %v421
        %v478 = vpack.c.b16 %v426, %v422
        %v479 = vpack.c.b16 %v427, %v423
        %v480 = vpack.c.b16 %v428, %v424
        %v481 = vpack.c.b16 %v433, %v429
        %v482 = vpack.c.b16 %v434, %v430
        %v483 = vpack.c.b16 %v435, %v431
        %v484 = vpack.c.b16 %v436, %v432
        %v485 = vpack.c.b16 %v441, %v437
        %v486 = vpack.c.b16 %v442, %v438
        %v487 = vpack.c.b16 %v443, %v439
        %v488 = vpack.c.b16 %v444, %v440
        %v489 = vpack.c.b16 %v449, %v445
        %v490 = vpack.c.b16 %v450, %v446
        %v491 = vpack.c.b16 %v451, %v447
        %v492 = vpack.c.b16 %v452, %v448
        %v493 = vpack.c.b16 %v457, %v453
        %v494 = vpack.c.b16 %v458, %v454
        %v495 = vpack.c.b16 %v459, %v455
        %v496 = vpack.c.b16 %v460, %v456
        %v497 = vpack.c.b16 %v465, %v461
        %v498 = vpack.c.b16 %v466, %v462
        %v499 = vpack.c.b16 %v467, %v463
        %v500 = vpack.c.b16 %v468, %v464
        %533 = vmatprep.subr.bf16.mxu0 %v498
        %534 = vmatpush1.bf16.msra.mxu0 %v497
        %535 = vmatprep.subr.bf16.mxu0 %v494
        %536 = vmatpush1.bf16.msra.mxu0 %v493
        %537 = vmatprep.subr.bf16.mxu0 %v490
        %538 = vmatpush1.bf16.msra.mxu0 %v489
        %539 = vmatprep.subr.bf16.mxu0 %v486
        %540 = vmatpush1.bf16.msra.mxu0 %v485
        %541 = vmatprep.subr.bf16.mxu0 %v482
        %542 = vmatpush1.bf16.msra.mxu0 %v481
        %543 = vmatprep.subr.bf16.mxu0 %v478
        %544 = vmatpush1.bf16.msra.mxu0 %v477
        %545 = vmatprep.subr.bf16.mxu0 %v474
        %546 = vmatpush1.bf16.msra.mxu0 %v473
        %547 = vmatprep.subr.bf16.mxu0 %v470
        %548 = vmatpush1.bf16.msra.mxu0 %v469
        %549 = vmatprep.subr.bf16.mxu0 0
        %550 = vmatpush2.bf16.msra.mxu0 0
        %551 = vmatprep.subr.bf16.mxu0 0
        %552 = vmatpush2.bf16.msra.mxu0 0
        %553 = vmatprep.subr.bf16.mxu0 0
        %554 = vmatpush2.bf16.msra.mxu0 0
        %555 = vmatprep.subr.bf16.mxu0 0
        %556 = vmatpush2.bf16.msra.mxu0 0
        %557 = vmatprep.subr.bf16.mxu0 0
        %558 = vmatpush2.bf16.msra.mxu0 0
        %559 = vmatprep.subr.bf16.mxu0 0
        %560 = vmatpush2.bf16.msra.mxu0 0
        %561 = vmatprep.subr.bf16.mxu0 0
        %562 = vmatpush2.bf16.msra.mxu0 0
        %563 = vmatprep.subr.bf16.mxu0 0
        %564 = vmatpush2.bf16.msra.mxu0 0
        %565 = vmatprep.mubr.bf16.mxu0 0
        %566 = vmatmul.mubr.bf16.gmra.mxu0 %v318
        %v567 = vpop.f32.mrf.mxu0
        %v568 = vadd.f32 %v356, %v567
        %v569 = vpop.f32.mrf.mxu0
        %v570 = vadd.f32 %v360, %v569
        %v571 = vpop.f32.mrf.mxu0
        %v572 = vpop.f32.mrf.mxu0
        %573 = vdwg.mxu0
        %574 = vmatprep.subr.bf16.mxu0 %v500
        %575 = vmatpush1.bf16.msra.mxu0 %v499
        %576 = vmatprep.subr.bf16.mxu0 %v496
        %577 = vmatpush1.bf16.msra.mxu0 %v495
        %578 = vmatprep.subr.bf16.mxu0 %v492
        %579 = vmatpush1.bf16.msra.mxu0 %v491
        %580 = vmatprep.subr.bf16.mxu0 %v488
        %581 = vmatpush1.bf16.msra.mxu0 %v487
        %582 = vmatprep.subr.bf16.mxu0 %v484
        %583 = vmatpush1.bf16.msra.mxu0 %v483
        %584 = vmatprep.subr.bf16.mxu0 %v480
        %585 = vmatpush1.bf16.msra.mxu0 %v479
        %586 = vmatprep.subr.bf16.mxu0 %v476
        %587 = vmatpush1.bf16.msra.mxu0 %v475
        %588 = vmatprep.subr.bf16.mxu0 %v472
        %589 = vmatpush1.bf16.msra.mxu0 %v471
        %590 = vmatprep.subr.bf16.mxu0 0
        %591 = vmatpush2.bf16.msra.mxu0 0
        %592 = vmatprep.subr.bf16.mxu0 0
        %593 = vmatpush2.bf16.msra.mxu0 0
        %594 = vmatprep.subr.bf16.mxu0 0
        %595 = vmatpush2.bf16.msra.mxu0 0
        %596 = vmatprep.subr.bf16.mxu0 0
        %597 = vmatpush2.bf16.msra.mxu0 0
        %598 = vmatprep.subr.bf16.mxu0 0
        %599 = vmatpush2.bf16.msra.mxu0 0
        %600 = vmatprep.subr.bf16.mxu0 0
        %601 = vmatpush2.bf16.msra.mxu0 0
        %602 = vmatprep.subr.bf16.mxu0 0
        %603 = vmatpush2.bf16.msra.mxu0 0
        %604 = vmatprep.subr.bf16.mxu0 0
        %605 = vmatpush2.bf16.msra.mxu0 0
        %606 = vmatprep.mubr.bf16.mxu0 0
        %607 = vmatmul.mubr.bf16.gmra.mxu0 %v318
        %v608 = vpop.f32.mrf.mxu0
        %v609 = vadd.f32 %v364, %v608
        %v610 = vpop.f32.mrf.mxu0
        %v611 = vadd.f32 %v368, %v610
        %v612 = vpop.f32.mrf.mxu0
        %v613 = vpop.f32.mrf.mxu0
        %614 = vdwg.mxu0
        %v615 = vmul.f32 %v568, %v568
        %v616 = vmul.f32 %v570, %v570
        %v617 = vmul.f32 %v609, %v609
        %v618 = vmul.f32 %v611, %v611
        %v619 = vmul.f32 %v568, %v615
        %v620 = vmul.f32 %v570, %v616
        %v621 = vmul.f32 %v609, %v617
        %v622 = vmul.f32 %v611, %v618
        %v623 = vmul.f32 %v619, 0.044715
        %v624 = vmul.f32 %v620, 0.044715
        %v625 = vmul.f32 %v621, 0.044715
        %v626 = vmul.f32 %v622, 0.044715
        %v627 = vadd.f32 %v568, %v623
        %v628 = vadd.f32 %v570, %v624
        %v629 = vadd.f32 %v609, %v625
        %v630 = vadd.f32 %v611, %v626
        %v631 = vmul.f32 %v627, 0.7978846
        %v632 = vmul.f32 %v628, 0.7978846
        %v633 = vmul.f32 %v629, 0.7978846
        %v634 = vmul.f32 %v630, 0.7978846
        %v635 = vtanh.pop %v631
        %v636 = vtanh.pop %v632
        %v637 = vtanh.pop %v633
        %v638 = vtanh.pop %v634
        %v639 = vadd.f32 %v635, 1.0
        %v640 = vadd.f32 %v636, 1.0
        %v641 = vadd.f32 %v637, 1.0
        %v642 = vadd.f32 %v638, 1.0
        %v643 = vmul.f32 %v639, 0.5
        %v644 = vmul.f32 %v640, 0.5
        %v645 = vmul.f32 %v641, 0.5
        %v646 = vmul.f32 %v642, 0.5
        %v647 = vmul.f32 %v568, %v643
        %v648 = vmul.f32 %v570, %v644
        %v649 = vmul.f32 %v609, %v645
        %v650 = vmul.f32 %v611, %v646
        %v651 = vpack.c.bf16 %v647, %v647
        %v652 = vpack.c.bf16 %v648, %v648
        %v653 = vpack.c.bf16 %v649, %v649
        %v654 = vpack.c.bf16 %v650, %v650
        %v655 = vld [vmem:[%s5] sm:$0xf]
        %v656 = vld [vmem:[%s5 + $0x4] sm:$0xf]
        %v657 = vld [vmem:[%s5 + $0x8] sm:$0xf]
        %v658 = vld [vmem:[%s5 + $0xc] sm:$0xf]
        %v659 = vld [vmem:[%s5 + $0x10] sm:$0xf]
        %v660 = vld [vmem:[%s5 + $0x14] sm:$0xf]
        %v661 = vld [vmem:[%s5 + $0x18] sm:$0xf]
        %v662 = vld [vmem:[%s5 + $0x1c] sm:$0xf]
        %v663 = vld [vmem:[%s5 + $0x20] sm:$0xf]
        %v664 = vld [vmem:[%s5 + $0x24] sm:$0xf]
        %v665 = vld [vmem:[%s5 + $0x28] sm:$0xf]
        %v666 = vld [vmem:[%s5 + $0x2c] sm:$0xf]
        %v667 = vld [vmem:[%s5 + $0x30] sm:$0xf]
        %v668 = vld [vmem:[%s5 + $0x34] sm:$0xf]
        %v669 = vld [vmem:[%s5 + $0x38] sm:$0xf]
        %v670 = vld [vmem:[%s5 + $0x3c] sm:$0xf]
        %v671 = vld [vmem:[%s5 + $0x40] sm:$0xf]
        %v672 = vld [vmem:[%s5 + $0x44] sm:$0xf]
        %v673 = vld [vmem:[%s5 + $0x48] sm:$0xf]
        %v674 = vld [vmem:[%s5 + $0x4c] sm:$0xf]
        %v675 = vld [vmem:[%s5 + $0x50] sm:$0xf]
        %v676 = vld [vmem:[%s5 + $0x54] sm:$0xf]
        %v677 = vld [vmem:[%s5 + $0x58] sm:$0xf]
        %v678 = vld [vmem:[%s5 + $0x5c] sm:$0xf]
        %v679 = vld [vmem:[%s5 + $0x60] sm:$0xf]
        %v680 = vld [vmem:[%s5 + $0x64] sm:$0xf]
        %v681 = vld [vmem:[%s5 + $0x68] sm:$0xf]
        %v682 = vld [vmem:[%s5 + $0x6c] sm:$0xf]
        %v683 = vld [vmem:[%s5 + $0x70] sm:$0xf]
        %v684 = vld [vmem:[%s5 + $0x74] sm:$0xf]
        %v685 = vld [vmem:[%s5 + $0x78] sm:$0xf]
        %v686 = vld [vmem:[%s5 + $0x7c] sm:$0xf]
        %v687 = vld [vmem:[%s5 + $0x80] sm:$0xf]
        %v688 = vld [vmem:[%s5 + $0x84] sm:$0xf]
        %v689 = vld [vmem:[%s5 + $0x88] sm:$0xf]
        %v690 = vld [vmem:[%s5 + $0x8c] sm:$0xf]
        %v691 = vld [vmem:[%s5 + $0x90] sm:$0xf]
        %v692 = vld [vmem:[%s5 + $0x94] sm:$0xf]
        %v693 = vld [vmem:[%s5 + $0x98] sm:$0xf]
        %v694 = vld [vmem:[%s5 + $0x9c] sm:$0xf]
        %v695 = vld [vmem:[%s5 + $0xa0] sm:$0xf]
        %v696 = vld [vmem:[%s5 + $0xa4] sm:$0xf]
        %v697 = vld [vmem:[%s5 + $0xa8] sm:$0xf]
        %v698 = vld [vmem:[%s5 + $0xac] sm:$0xf]
        %v699 = vld [vmem:[%s5 + $0xb0] sm:$0xf]
        %v700 = vld [vmem:[%s5 + $0xb4] sm:$0xf]
        %v701 = vld [vmem:[%s5 + $0xb8] sm:$0xf]
        %v702 = vld [vmem:[%s5 + $0xbc] sm:$0xf]
        %v703 = vld [vmem:[%s5 + $0xc0] sm:$0xf]
        %v704 = vld [vmem:[%s5 + $0xc4] sm:$0xf]
        %v705 = vld [vmem:[%s5 + $0xc8] sm:$0xf]
        %v706 = vld [vmem:[%s5 + $0xcc] sm:$0xf]
        %v707 = vld [vmem:[%s5 + $0xd0] sm:$0xf]
        %v708 = vld [vmem:[%s5 + $0xd4] sm:$0xf]
        %v709 = vld [vmem:[%s5 + $0xd8] sm:$0xf]
        %v710 = vld [vmem:[%s5 + $0xdc] sm:$0xf]
        %v711 = vld [vmem:[%s5 + $0xe0] sm:$0xf]
        %v712 = vld [vmem:[%s5 + $0xe4] sm:$0xf]
        %v713 = vld [vmem:[%s5 + $0xe8] sm:$0xf]
        %v714 = vld [vmem:[%s5 + $0xec] sm:$0xf]
        %v715 = vld [vmem:[%s5 + $0xf0] sm:$0xf]
        %v716 = vld [vmem:[%s5 + $0xf4] sm:$0xf]
        %v717 = vld [vmem:[%s5 + $0xf8] sm:$0xf]
        %v718 = vld [vmem:[%s5 + $0xfc] sm:$0xf]
        %v719 = vld [vmem:[#allocation2] sm:$0x1]
        %v721 = vlaneseq
        %v722 = vshrl.u32 %v721, 7
        %v723 = vsub.s32 0, %v722
        %v724 = vrot.slane %v719, %v723
        %v790 = vunpack.c.l.b16 %v655
        %v791 = vunpack.c.l.b16 %v656
        %v792 = vunpack.c.l.b16 %v657
        %v793 = vunpack.c.l.b16 %v658
        %v794 = vunpack.c.l.b16 %v659
        %v795 = vunpack.c.l.b16 %v660
        %v796 = vunpack.c.l.b16 %v661
        %v797 = vunpack.c.l.b16 %v662
        %v798 = vunpack.c.l.b16 %v663
        %v799 = vunpack.c.l.b16 %v664
        %v800 = vunpack.c.l.b16 %v665
        %v801 = vunpack.c.l.b16 %v666
        %v802 = vunpack.c.l.b16 %v667
        %v803 = vunpack.c.l.b16 %v668
        %v804 = vunpack.c.l.b16 %v669
        %v805 = vunpack.c.l.b16 %v670
        %v806 = vunpack.c.l.b16 %v671
        %v807 = vunpack.c.l.b16 %v672
        %v808 = vunpack.c.l.b16 %v673
        %v809 = vunpack.c.l.b16 %v674
        %v810 = vunpack.c.l.b16 %v675
        %v811 = vunpack.c.l.b16 %v676
        %v812 = vunpack.c.l.b16 %v677
        %v813 = vunpack.c.l.b16 %v678
        %v814 = vunpack.c.l.b16 %v679
        %v815 = vunpack.c.l.b16 %v680
        %v816 = vunpack.c.l.b16 %v681
        %v817 = vunpack.c.l.b16 %v682
        %v818 = vunpack.c.l.b16 %v683
        %v819 = vunpack.c.l.b16 %v684
        %v820 = vunpack.c.l.b16 %v685
        %v821 = vunpack.c.l.b16 %v686
        %v822 = vunpack.c.l.b16 %v687
        %v823 = vunpack.c.l.b16 %v688
        %v824 = vunpack.c.l.b16 %v689
        %v825 = vunpack.c.l.b16 %v690
        %v826 = vunpack.c.l.b16 %v691
        %v827 = vunpack.c.l.b16 %v692
        %v828 = vunpack.c.l.b16 %v693
        %v829 = vunpack.c.l.b16 %v694
        %v830 = vunpack.c.l.b16 %v695
        %v831 = vunpack.c.l.b16 %v696
        %v832 = vunpack.c.l.b16 %v697
        %v833 = vunpack.c.l.b16 %v698
        %v834 = vunpack.c.l.b16 %v699
        %v835 = vunpack.c.l.b16 %v700
        %v836 = vunpack.c.l.b16 %v701
        %v837 = vunpack.c.l.b16 %v702
        %v838 = vunpack.c.l.b16 %v703
        %v839 = vunpack.c.l.b16 %v704
        %v840 = vunpack.c.l.b16 %v705
        %v841 = vunpack.c.l.b16 %v706
        %v842 = vunpack.c.l.b16 %v707
        %v843 = vunpack.c.l.b16 %v708
        %v844 = vunpack.c.l.b16 %v709
        %v845 = vunpack.c.l.b16 %v710
        %v846 = vunpack.c.l.b16 %v711
        %v847 = vunpack.c.l.b16 %v712
        %v848 = vunpack.c.l.b16 %v713
        %v849 = vunpack.c.l.b16 %v714
        %v850 = vunpack.c.l.b16 %v715
        %v851 = vunpack.c.l.b16 %v716
        %v852 = vunpack.c.l.b16 %v717
        %v853 = vunpack.c.l.b16 %v718
        %v854 = vpack.c.b16 %v791, %v790
        %v855 = vpack.c.b16 %v793, %v792
        %v856 = vpack.c.b16 %v795, %v794
        %v857 = vpack.c.b16 %v797, %v796
        %v858 = vpack.c.b16 %v799, %v798
        %v859 = vpack.c.b16 %v801, %v800
        %v860 = vpack.c.b16 %v803, %v802
        %v861 = vpack.c.b16 %v805, %v804
        %v862 = vpack.c.b16 %v807, %v806
        %v863 = vpack.c.b16 %v809, %v808
        %v864 = vpack.c.b16 %v811, %v810
        %v865 = vpack.c.b16 %v813, %v812
        %v866 = vpack.c.b16 %v815, %v814
        %v867 = vpack.c.b16 %v817, %v816
        %v868 = vpack.c.b16 %v819, %v818
        %v869 = vpack.c.b16 %v821, %v820
        %v870 = vpack.c.b16 %v823, %v822
        %v871 = vpack.c.b16 %v825, %v824
        %v872 = vpack.c.b16 %v827, %v826
        %v873 = vpack.c.b16 %v829, %v828
        %v874 = vpack.c.b16 %v831, %v830
        %v875 = vpack.c.b16 %v833, %v832
        %v876 = vpack.c.b16 %v835, %v834
        %v877 = vpack.c.b16 %v837, %v836
        %v878 = vpack.c.b16 %v839, %v838
        %v879 = vpack.c.b16 %v841, %v840
        %v880 = vpack.c.b16 %v843, %v842
        %v881 = vpack.c.b16 %v845, %v844
        %v882 = vpack.c.b16 %v847, %v846
        %v883 = vpack.c.b16 %v849, %v848
        %v884 = vpack.c.b16 %v851, %v850
        %v885 = vpack.c.b16 %v853, %v852
        %918 = vmatprep.subr.bf16.mxu0 0
        %919 = vmatpush1.bf16.msra.mxu0 %v861
        %920 = vmatprep.subr.bf16.mxu0 0
        %921 = vmatpush1.bf16.msra.mxu0 %v860
        %922 = vmatprep.subr.bf16.mxu0 0
        %923 = vmatpush1.bf16.msra.mxu0 %v859
        %924 = vmatprep.subr.bf16.mxu0 0
        %925 = vmatpush1.bf16.msra.mxu0 %v858
        %926 = vmatprep.subr.bf16.mxu0 0
        %927 = vmatpush1.bf16.msra.mxu0 %v857
        %928 = vmatprep.subr.bf16.mxu0 0
        %929 = vmatpush1.bf16.msra.mxu0 %v856
        %930 = vmatprep.subr.bf16.mxu0 0
        %931 = vmatpush1.bf16.msra.mxu0 %v855
        %932 = vmatprep.subr.bf16.mxu0 0
        %933 = vmatpush1.bf16.msra.mxu0 %v854
        %934 = vmatprep.subr.bf16.mxu0 0
        %935 = vmatpush2.bf16.msra.mxu0 %v869
        %936 = vmatprep.subr.bf16.mxu0 0
        %937 = vmatpush2.bf16.msra.mxu0 %v868
        %938 = vmatprep.subr.bf16.mxu0 0
        %939 = vmatpush2.bf16.msra.mxu0 %v867
        %940 = vmatprep.subr.bf16.mxu0 0
        %941 = vmatpush2.bf16.msra.mxu0 %v866
        %942 = vmatprep.subr.bf16.mxu0 0
        %943 = vmatpush2.bf16.msra.mxu0 %v865
        %944 = vmatprep.subr.bf16.mxu0 0
        %945 = vmatpush2.bf16.msra.mxu0 %v864
        %946 = vmatprep.subr.bf16.mxu0 0
        %947 = vmatpush2.bf16.msra.mxu0 %v863
        %948 = vmatprep.subr.bf16.mxu0 0
        %949 = vmatpush2.bf16.msra.mxu0 %v862
        %950 = vmatprep.mubr.bf16.mxu0 %v652
        %951 = vmatmul.mubr.bf16.gmra.mxu0 %v651
        %v952 = vpop.f32.mrf.mxu0
        %v953 = vadd.f32 %v724, %v952
        %v954 = vpop.f32.mrf.mxu0
        %v955 = vpop.f32.mrf.mxu0
        %v956 = vpop.f32.mrf.mxu0
        %957 = vdwg.mxu0
        %958 = vmatprep.subr.bf16.mxu0 0
        %959 = vmatpush1.bf16.msra.mxu0 %v877
        %960 = vmatprep.subr.bf16.mxu0 0
        %961 = vmatpush1.bf16.msra.mxu0 %v876
        %962 = vmatprep.subr.bf16.mxu0 0
        %963 = vmatpush1.bf16.msra.mxu0 %v875
        %964 = vmatprep.subr.bf16.mxu0 0
        %965 = vmatpush1.bf16.msra.mxu0 %v874
        %966 = vmatprep.subr.bf16.mxu0 0
        %967 = vmatpush1.bf16.msra.mxu0 %v873
        %968 = vmatprep.subr.bf16.mxu0 0
        %969 = vmatpush1.bf16.msra.mxu0 %v872
        %970 = vmatprep.subr.bf16.mxu0 0
        %971 = vmatpush1.bf16.msra.mxu0 %v871
        %972 = vmatprep.subr.bf16.mxu0 0
        %973 = vmatpush1.bf16.msra.mxu0 %v870
        %974 = vmatprep.subr.bf16.mxu0 0
        %975 = vmatpush2.bf16.msra.mxu0 %v885
        %976 = vmatprep.subr.bf16.mxu0 0
        %977 = vmatpush2.bf16.msra.mxu0 %v884
        %978 = vmatprep.subr.bf16.mxu0 0
        %979 = vmatpush2.bf16.msra.mxu0 %v883
        %980 = vmatprep.subr.bf16.mxu0 0
        %981 = vmatpush2.bf16.msra.mxu0 %v882
        %982 = vmatprep.subr.bf16.mxu0 0
        %983 = vmatpush2.bf16.msra.mxu0 %v881
        %984 = vmatprep.subr.bf16.mxu0 0
        %985 = vmatpush2.bf16.msra.mxu0 %v880
        %986 = vmatprep.subr.bf16.mxu0 0
        %987 = vmatpush2.bf16.msra.mxu0 %v879
        %988 = vmatprep.subr.bf16.mxu0 0
        %989 = vmatpush2.bf16.msra.mxu0 %v878
        %990 = vmatprep.mubr.bf16.mxu0 %v654
        %991 = vmatmul.mubr.bf16.gmra.mxu0 %v653
        %v992 = vpop.f32.mrf.mxu0
        %v993 = vadd.f32 %v953, %v992
        %v994 = vpop.f32.mrf.mxu0
        %v995 = vpop.f32.mrf.mxu0
        %v996 = vpop.f32.mrf.mxu0
        %997 = vdwg.mxu0
        %v998 = vadd.f32 %v289, %v993
        %v999 = vpack.c.bf16 %v998, %v998
        %1000 = vst [vmem:[%s286] sm:$0xf] %v999
        %p1001 = scmp.lt.s32.totalorder %s19, 1
        %s1002 = scalar_select %p1001, %s19, 1
        %s1003 = smul.addr %s1002, 4
        %s1004 = scalar_lea.vmem %s7, %s1003
        // Predicated region
        $region53: #{gpt_actor_forward.6} parent=47 // pred_check
          %p1005 = pneg %p189
        $region54: #{gpt_actor_forward.6} parent=47 // pred_check_branch
          %1007 = sbr.rel (%p1005) target = $region56
        $region55: #{gpt_actor_forward.6} parent=47 // pred_region
          _
        $region56: #{gpt_actor_forward.6} parent=47 // pred_fallthru
          _
      $region48: #{gpt_actor_forward.6} parent=5 // pred_fallthru
        _
      %p1008 = scmp.le.s32.totalorder 2, %s14
      // Predicated region
      $region57: #{gpt_actor_forward.6} parent=5 // pred_check
        %p1009 = pneg %p1008
      $region58: #{gpt_actor_forward.6} parent=5 // pred_check_branch
        %1011 = sbr.rel (%p1009) target = $region60
      $region59: #{gpt_actor_forward.6} parent=5 // pred_region
        %s1012 = ssub.s32 %s14, 2
        // Predicated region
        $region61: #{gpt_actor_forward.6} parent=59 // pred_check
          %p1013 = pneg %p195
        $region62: #{gpt_actor_forward.6} parent=59 // pred_check_branch
          %1015 = sbr.rel (%p1013) target = $region64
        $region63: #{gpt_actor_forward.6} parent=59 // pred_region
          %p1016 = scmp.lt.s32.totalorder %s20, 1
          %s1017 = scalar_select %p1016, %s20, 1
          %s1018 = smul.addr %s1017, 4
          %s1019 = scalar_lea.vmem %s7, %s1018
        $region64: #{gpt_actor_forward.6} parent=59 // pred_fallthru
          _
      $region60: #{gpt_actor_forward.6} parent=5 // pred_fallthru
        _
    $region6: #{gpt_actor_forward.6} parent=1 // loop_footer
      %s18 = sadd.s32 1, %s14
    $region7: #{gpt_actor_forward.6} parent=1 // loop_footer_branch
      %13 = sbr.rel target = $region3
    $region8: #{gpt_actor_forward.6} parent=1 // loop_exit
      _
    %1020 = vsyncpa [#allocation3], 1
    %s1021 = scalar_lea.sflag [#allocation3], 1
    %1022 = vsyncpa %s1021, 1

// kernel: gpt_actor_forward.8
$region0: #{gpt_actor_forward.8}
  #allocation0 [shape = 'u32[]', space=smem, size = 0x4, offset = 0x4, fixed_abs, tag = 'smem constant byte address 0x4 - core index']
  #allocation1 [shape = 'u32[144,128]{1,0:T(1,128)}', space=vmem, size = 0x12000, scoped, tag = 'internal scratch']
  %s0 = inlined_call_operand.vmem [shape: bf16[2,8,128], index: 0, kind: input, shape index: {}]
  %s1 = inlined_call_operand.vmem [shape: f32[1,128], index: 1, kind: input, shape index: {}]
  %s2 = inlined_call_operand.vmem [shape: f32[1,128], index: 2, kind: input, shape index: {}]
  %s3 = inlined_call_operand.vmem [shape: bf16[128,512], index: 3, kind: input, shape index: {}]
  %s4 = inlined_call_operand.vmem [shape: f32[1,512], index: 4, kind: input, shape index: {}]
  %s5 = inlined_call_operand.vmem [shape: bf16[512,128], index: 5, kind: input, shape index: {}]
  %s6 = inlined_call_operand.vmem [shape: f32[1,128], index: 6, kind: input, shape index: {}]
  %s7 = inlined_call_operand.vmem [shape: bf16[2,8,128], index: 7, kind: output, shape index: {}]
  %s8 = sld [smem:[#allocation0]]
  $region61: #{gpt_actor_forward.8} parent=0
    _
  %s10 = ssub.s32 1, %s8
  %s11 = scalar_select 0, %s10, %s8
  loop: start=0, step=1, limit=4
  $region2: #{gpt_actor_forward.8} parent=0 // loop_pre_header
    _
  $region3: #{gpt_actor_forward.8} parent=0 // loop_header
    %s13 = sphi 0, %s17
    %p14 = scmp.ge.s32.totalorder %s13, 4
    %s23 = sphi 0, %s25
    %s26 = sphi 0, %s23
    %s27 = sphi 0, %s26
    %s43 = sphi 0, %s27
    %s47 = sphi 0, %s47
    %s49 = sphi 0, %s47
    %s50 = sphi 0, %s49
    %s64 = sphi 0, %s50
    %s68 = sphi 0, %s68
    %s70 = sphi 0, %s68
    %s71 = sphi 0, %s70
    %s85 = sphi 0, %s71
    %s89 = sphi 0, %s89
    %s91 = sphi 0, %s89
    %s92 = sphi 0, %s91
    %s106 = sphi 0, %s92
    %s110 = sphi 0, %s110
    %s112 = sphi 0, %s110
    %s113 = sphi 0, %s112
    %s127 = sphi 0, %s113
    %s131 = sphi 0, %s131
    %s133 = sphi 0, %s131
    %s134 = sphi 0, %s133
    %s148 = sphi 0, %s134
    %s152 = sphi 0, %s152
    %s154 = sphi 0, %s152
    %s155 = sphi 0, %s154
    %s169 = sphi 0, %s155
    %s175 = sphi 0, %s177
    %s178 = sphi 0, %s175
    %s179 = sphi 0, %s178
    %s195 = sphi 0, %s179
  $region4: #{gpt_actor_forward.8} parent=0 // loop_header_branch
    %16 = sbr.rel (%p14) target = $region8
  $region5: #{gpt_actor_forward.8} parent=0 // loop_body
    %s18 = ssub.s32 %s13, 1
    %s19 = ssub.s32 %s13, 2
    %s20 = sadd.s32 %s13, 1
    %s21 = ssub.s32 %s13, %s20
    %p22 = scmp.eq.s32.totalorder %s21, 0
    %s24 = sadd.s32 %s23, 1
    %s25 = scalar_select %p22, %s23, %s24
    %p28 = pneg %p22
    %p29 = scmp.eq.s32.totalorder %s13, 1
    %p30 = por %p28, %p29
    %p31 = scmp.ne.s32.totalorder %s23, %s26
    %p32 = scmp.eq.s32.totalorder %s13, 0
    %p33 = por %p31, %p32
    %p34 = scmp.ne.s32.totalorder %s23, %s26
    %p35 = scmp.eq.s32.totalorder %s18, 1
    %p36 = por %p34, %p35
    %p37 = scmp.ne.s32.totalorder %s26, %s27
    %p38 = scmp.eq.s32.totalorder %s18, 0
    %p39 = por %p37, %p38
    %p40 = scmp.ne.s32.totalorder %s26, %s27
    %p41 = scmp.eq.s32.totalorder %s19, 1
    %p42 = por %p40, %p41
    %p44 = scmp.ne.s32.totalorder %s27, %s43
    %p45 = scmp.eq.s32.totalorder %s19, 0
    %p46 = por %p44, %p45
    %s48 = sadd.s32 %s47, 1
    %p51 = scmp.eq.s32.totalorder %s13, 1
    %p52 = scmp.ne.s32.totalorder %s47, %s49
    %p53 = scmp.eq.s32.totalorder %s13, 0
    %p54 = por %p52, %p53
    %p55 = scmp.ne.s32.totalorder %s47, %s49
    %p56 = scmp.eq.s32.totalorder %s18, 1
    %p57 = por %p55, %p56
    %p58 = scmp.ne.s32.totalorder %s49, %s50
    %p59 = scmp.eq.s32.totalorder %s18, 0
    %p60 = por %p58, %p59
    %p61 = scmp.ne.s32.totalorder %s49, %s50
    %p62 = scmp.eq.s32.totalorder %s19, 1
    %p63 = por %p61, %p62
    %p65 = scmp.ne.s32.totalorder %s50, %s64
    %p66 = scmp.eq.s32.totalorder %s19, 0
    %p67 = por %p65, %p66
    %s69 = sadd.s32 %s68, 1
    %p72 = scmp.eq.s32.totalorder %s13, 1
    %p73 = scmp.ne.s32.totalorder %s68, %s70
    %p74 = scmp.eq.s32.totalorder %s13, 0
    %p75 = por %p73, %p74
    %p76 = scmp.ne.s32.totalorder %s68, %s70
    %p77 = scmp.eq.s32.totalorder %s18, 1
    %p78 = por %p76, %p77
    %p79 = scmp.ne.s32.totalorder %s70, %s71
    %p80 = scmp.eq.s32.totalorder %s18, 0
    %p81 = por %p79, %p80
    %p82 = scmp.ne.s32.totalorder %s70, %s71
    %p83 = scmp.eq.s32.totalorder %s19, 1
    %p84 = por %p82, %p83
    %p86 = scmp.ne.s32.totalorder %s71, %s85
    %p87 = scmp.eq.s32.totalorder %s19, 0
    %p88 = por %p86, %p87
    %s90 = sadd.s32 %s89, 1
    %p93 = scmp.eq.s32.totalorder %s13, 1
    %p94 = scmp.ne.s32.totalorder %s89, %s91
    %p95 = scmp.eq.s32.totalorder %s13, 0
    %p96 = por %p94, %p95
    %p97 = scmp.ne.s32.totalorder %s89, %s91
    %p98 = scmp.eq.s32.totalorder %s18, 1
    %p99 = por %p97, %p98
    %p100 = scmp.ne.s32.totalorder %s91, %s92
    %p101 = scmp.eq.s32.totalorder %s18, 0
    %p102 = por %p100, %p101
    %p103 = scmp.ne.s32.totalorder %s91, %s92
    %p104 = scmp.eq.s32.totalorder %s19, 1
    %p105 = por %p103, %p104
    %p107 = scmp.ne.s32.totalorder %s92, %s106
    %p108 = scmp.eq.s32.totalorder %s19, 0
    %p109 = por %p107, %p108
    %s111 = sadd.s32 %s110, 1
    %p114 = scmp.eq.s32.totalorder %s13, 1
    %p115 = scmp.ne.s32.totalorder %s110, %s112
    %p116 = scmp.eq.s32.totalorder %s13, 0
    %p117 = por %p115, %p116
    %p118 = scmp.ne.s32.totalorder %s110, %s112
    %p119 = scmp.eq.s32.totalorder %s18, 1
    %p120 = por %p118, %p119
    %p121 = scmp.ne.s32.totalorder %s112, %s113
    %p122 = scmp.eq.s32.totalorder %s18, 0
    %p123 = por %p121, %p122
    %p124 = scmp.ne.s32.totalorder %s112, %s113
    %p125 = scmp.eq.s32.totalorder %s19, 1
    %p126 = por %p124, %p125
    %p128 = scmp.ne.s32.totalorder %s113, %s127
    %p129 = scmp.eq.s32.totalorder %s19, 0
    %p130 = por %p128, %p129
    %s132 = sadd.s32 %s131, 1
    %p135 = scmp.eq.s32.totalorder %s13, 1
    %p136 = scmp.ne.s32.totalorder %s131, %s133
    %p137 = scmp.eq.s32.totalorder %s13, 0
    %p138 = por %p136, %p137
    %p139 = scmp.ne.s32.totalorder %s131, %s133
    %p140 = scmp.eq.s32.totalorder %s18, 1
    %p141 = por %p139, %p140
    %p142 = scmp.ne.s32.totalorder %s133, %s134
    %p143 = scmp.eq.s32.totalorder %s18, 0
    %p144 = por %p142, %p143
    %p145 = scmp.ne.s32.totalorder %s133, %s134
    %p146 = scmp.eq.s32.totalorder %s19, 1
    %p147 = por %p145, %p146
    %p149 = scmp.ne.s32.totalorder %s134, %s148
    %p150 = scmp.eq.s32.totalorder %s19, 0
    %p151 = por %p149, %p150
    %s153 = sadd.s32 %s152, 1
    %p156 = scmp.eq.s32.totalorder %s13, 1
    %p157 = scmp.ne.s32.totalorder %s152, %s154
    %p158 = scmp.eq.s32.totalorder %s13, 0
    %p159 = por %p157, %p158
    %p160 = scmp.ne.s32.totalorder %s152, %s154
    %p161 = scmp.eq.s32.totalorder %s18, 1
    %p162 = por %p160, %p161
    %p163 = scmp.ne.s32.totalorder %s154, %s155
    %p164 = scmp.eq.s32.totalorder %s18, 0
    %p165 = por %p163, %p164
    %p166 = scmp.ne.s32.totalorder %s154, %s155
    %p167 = scmp.eq.s32.totalorder %s19, 1
    %p168 = por %p166, %p167
    %p170 = scmp.ne.s32.totalorder %s155, %s169
    %p171 = scmp.eq.s32.totalorder %s19, 0
    %p172 = por %p170, %p171
    %s173 = ssub.s32 %s13, %s20
    %p174 = scmp.eq.s32.totalorder %s173, 0
    %s176 = sadd.s32 %s175, 1
    %s177 = scalar_select %p174, %s175, %s176
    %p180 = pneg %p174
    %p181 = scmp.eq.s32.totalorder %s13, 1
    %p182 = por %p180, %p181
    %p183 = scmp.ne.s32.totalorder %s175, %s178
    %p184 = scmp.eq.s32.totalorder %s13, 0
    %p185 = por %p183, %p184
    %p186 = scmp.ne.s32.totalorder %s175, %s178
    %p187 = scmp.eq.s32.totalorder %s18, 1
    %p188 = por %p186, %p187
    %p189 = scmp.ne.s32.totalorder %s178, %s179
    %p190 = scmp.eq.s32.totalorder %s18, 0
    %p191 = por %p189, %p190
    %p192 = scmp.ne.s32.totalorder %s178, %s179
    %p193 = scmp.eq.s32.totalorder %s19, 1
    %p194 = por %p192, %p193
    %p196 = scmp.ne.s32.totalorder %s179, %s195
    %p197 = scmp.eq.s32.totalorder %s19, 0
    %p198 = por %p196, %p197
    %p199 = scmp.le.s32.totalorder 1, %s13
    %p200 = scmp.lt.s32.totalorder %s13, 3
    %p201 = pnand %p199, %p200
    %p202 = pneg %p201
    // Predicated region
    $region9: #{gpt_actor_forward.8} parent=5 // pred_check
      _
    $region10: #{gpt_actor_forward.8} parent=5 // pred_check_branch
      %204 = sbr.rel (%p201) target = $region12
    $region11: #{gpt_actor_forward.8} parent=5 // pred_region
      %s205 = ssub.s32 %s13, 1
      // Predicated region
      $region13: #{gpt_actor_forward.8} parent=11 // pred_check
        %p206 = pneg %p60
      $region14: #{gpt_actor_forward.8} parent=11 // pred_check_branch
        %208 = sbr.rel (%p206) target = $region16
      $region15: #{gpt_actor_forward.8} parent=11 // pred_region
        _
      $region16: #{gpt_actor_forward.8} parent=11 // pred_fallthru
        _
      // Predicated region
      $region17: #{gpt_actor_forward.8} parent=11 // pred_check
        %p209 = pneg %p81
      $region18: #{gpt_actor_forward.8} parent=11 // pred_check_branch
        %211 = sbr.rel (%p209) target = $region20
      $region19: #{gpt_actor_forward.8} parent=11 // pred_region
        _
      $region20: #{gpt_actor_forward.8} parent=11 // pred_fallthru
        _
      // Predicated region
      $region21: #{gpt_actor_forward.8} parent=11 // pred_check
        %p212 = pneg %p102
      $region22: #{gpt_actor_forward.8} parent=11 // pred_check_branch
        %214 = sbr.rel (%p212) target = $region24
      $region23: #{gpt_actor_forward.8} parent=11 // pred_region
        _
      $region24: #{gpt_actor_forward.8} parent=11 // pred_fallthru
        _
      // Predicated region
      $region25: #{gpt_actor_forward.8} parent=11 // pred_check
        %p215 = pneg %p123
      $region26: #{gpt_actor_forward.8} parent=11 // pred_check_branch
        %217 = sbr.rel (%p215) target = $region28
      $region27: #{gpt_actor_forward.8} parent=11 // pred_region
        _
      $region28: #{gpt_actor_forward.8} parent=11 // pred_fallthru
        _
      // Predicated region
      $region29: #{gpt_actor_forward.8} parent=11 // pred_check
        %p218 = pneg %p144
      $region30: #{gpt_actor_forward.8} parent=11 // pred_check_branch
        %220 = sbr.rel (%p218) target = $region32
      $region31: #{gpt_actor_forward.8} parent=11 // pred_region
        _
      $region32: #{gpt_actor_forward.8} parent=11 // pred_fallthru
        _
      // Predicated region
      $region33: #{gpt_actor_forward.8} parent=11 // pred_check
        %p221 = pneg %p165
      $region34: #{gpt_actor_forward.8} parent=11 // pred_check_branch
        %223 = sbr.rel (%p221) target = $region36
      $region35: #{gpt_actor_forward.8} parent=11 // pred_region
        _
      $region36: #{gpt_actor_forward.8} parent=11 // pred_fallthru
        _
    $region12: #{gpt_actor_forward.8} parent=5 // pred_fallthru
      _
    %p224 = scmp.lt.s32.totalorder %s13, 2
    // Predicated region
    $region37: #{gpt_actor_forward.8} parent=5 // pred_check
      %p225 = pneg %p224
    $region38: #{gpt_actor_forward.8} parent=5 // pred_check_branch
      %227 = sbr.rel (%p225) target = $region40
    $region39: #{gpt_actor_forward.8} parent=5 // pred_region
      // Predicated region
      $region41: #{gpt_actor_forward.8} parent=39 // pred_check
        %p228 = pneg %p33
      $region42: #{gpt_actor_forward.8} parent=39 // pred_check_branch
        %230 = sbr.rel (%p228) target = $region44
      $region43: #{gpt_actor_forward.8} parent=39 // pred_region
        %p231 = scmp.lt.s32.totalorder %s13, 1
        %s232 = scalar_select %p231, %s13, 1
        %s233 = smul.addr %s232, 4
        %s234 = scalar_lea.vmem %s0, %s233
      $region44: #{gpt_actor_forward.8} parent=39 // pred_fallthru
        _
    $region40: #{gpt_actor_forward.8} parent=5 // pred_fallthru
      _
    %p235 = scmp.le.s32.totalorder 1, %s13
    %p236 = scmp.lt.s32.totalorder %s13, 3
    %p237 = pnand %p235, %p236
    %p238 = pneg %p237
    // Predicated region
    $region45: #{gpt_actor_forward.8} parent=5 // pred_check
      _
    $region46: #{gpt_actor_forward.8} parent=5 // pred_check_branch
      %240 = sbr.rel (%p237) target = $region48
    $region47: #{gpt_actor_forward.8} parent=5 // pred_region
      %s241 = ssub.s32 %s13, 1
      %p242 = scmp.lt.s32.totalorder %s18, 1
      %s243 = scalar_select %p242, %s18, 1
      %s244 = smul.addr %s243, 4
      %s245 = scalar_lea.vmem %s0, %s244
      %p246 = pneg %p39
      %p247 = pneg %p36
      %p248 = pneg %p60
      %p249 = pneg %p57
      %p250 = pneg %p81
      %p251 = pneg %p78
      %p252 = pneg %p102
      %p253 = pneg %p99
      %p254 = pneg %p123
      %p255 = pneg %p120
      %p256 = pneg %p144
      %p257 = pneg %p141
      %p258 = pneg %p165
      %p259 = pneg %p162
      %p260 = pneg %p191
      %p261 = pneg %p188
      %p262 = scmp.lt.s32.totalorder %s18, 1
      %s263 = scalar_select %p262, %s18, 1
      %s264 = smul.addr %s263, 4
      %s265 = scalar_lea.vmem %s7, %s264
      %p266 = scmp.lt.s32.totalorder %s18, 1
      %s267 = scalar_select %p266, %s18, 1
      %s268 = smul.addr %s267, 4
      %s269 = scalar_lea.vmem %s0, %s268
      %p270 = scmp.lt.s32.totalorder %s18, 1
      %s271 = scalar_select %p270, %s18, 1
      %s272 = smul.addr %s271, 4
      %s273 = scalar_lea.vmem %s7, %s272
      %v275 = vld [vmem:[%s269] sm:$0xf]
      %v276 = vunpack.c.l.bf16 %v275
      %v277 = vld [vmem:[%s1] sm:$0x1]
      %v278 = vld [vmem:[%s2] sm:$0x1]
      %279 = vadd.xlane.f32.xlu0 %v276
      %v280 = vpop.xlane.xlu0 %279
      %v281 = vrcp.pop 128.0
      %v282 = vmul.f32 %v280, %v281
      %v283 = vsub.f32 %v276, %v282
      %v284 = vmul.f32 %v283, %v283
      %285 = vadd.xlane.f32.xlu0 %v284
      %v286 = vpop.xlane.xlu0 %285
      %v287 = vmul.f32 %v286, %v281
      %v288 = vadd.f32 %v287, 1e-05
      %v289 = vrsqrt.pop %v288
      %v290 = vmul.f32 %v283, %v289
      %v292 = vlaneseq
      %v293 = vshrl.u32 %v292, 7
      %v294 = vsub.s32 0, %v293
      %v295 = vrot.slane %v277, %v294
      %v297 = vmul.f32 %v290, %v295
      %v299 = vlaneseq
      %v300 = vshrl.u32 %v299, 7
      %v301 = vsub.s32 0, %v300
      %v302 = vrot.slane %v278, %v301
      %v304 = vadd.f32 %v297, %v302
      %v305 = vpack.c.bf16 %v304, %v304
      %v306 = vld [vmem:[%s3] sm:$0xff]
      %v307 = vld [vmem:[%s3 + $0x8] sm:$0xff]
      %v308 = vld [vmem:[%s3 + $0x10] sm:$0xff]
      %v309 = vld [vmem:[%s3 + $0x18] sm:$0xff]
      %v310 = vld [vmem:[%s3 + $0x20] sm:$0xff]
      %v311 = vld [vmem:[%s3 + $0x28] sm:$0xff]
      %v312 = vld [vmem:[%s3 + $0x30] sm:$0xff]
      %v313 = vld [vmem:[%s3 + $0x38] sm:$0xff]
      %v314 = vld [vmem:[%s3 + $0x40] sm:$0xff]
      %v315 = vld [vmem:[%s3 + $0x48] sm:$0xff]
      %v316 = vld [vmem:[%s3 + $0x50] sm:$0xff]
      %v317 = vld [vmem:[%s3 + $0x58] sm:$0xff]
      %v318 = vld [vmem:[%s3 + $0x60] sm:$0xff]
      %v319 = vld [vmem:[%s3 + $0x68] sm:$0xff]
      %v320 = vld [vmem:[%s3 + $0x70] sm:$0xff]
      %v321 = vld [vmem:[%s3 + $0x78] sm:$0xff]
      %v322 = vld [vmem:[%s3 + $0x80] sm:$0xff]
      %v323 = vld [vmem:[%s3 + $0x88] sm:$0xff]
      %v324 = vld [vmem:[%s3 + $0x90] sm:$0xff]
      %v325 = vld [vmem:[%s3 + $0x98] sm:$0xff]
      %v326 = vld [vmem:[%s3 + $0xa0] sm:$0xff]
      %v327 = vld [vmem:[%s3 + $0xa8] sm:$0xff]
      %v328 = vld [vmem:[%s3 + $0xb0] sm:$0xff]
      %v329 = vld [vmem:[%s3 + $0xb8] sm:$0xff]
      %v330 = vld [vmem:[%s3 + $0xc0] sm:$0xff]
      %v331 = vld [vmem:[%s3 + $0xc8] sm:$0xff]
      %v332 = vld [vmem:[%s3 + $0xd0] sm:$0xff]
      %v333 = vld [vmem:[%s3 + $0xd8] sm:$0xff]
      %v334 = vld [vmem:[%s3 + $0xe0] sm:$0xff]
      %v335 = vld [vmem:[%s3 + $0xe8] sm:$0xff]
      %v336 = vld [vmem:[%s3 + $0xf0] sm:$0xff]
      %v337 = vld [vmem:[%s3 + $0xf8] sm:$0xff]
      %v338 = vld [vmem:[%s4] sm:$0xf]
      %v340 = vlaneseq
      %v341 = vshrl.u32 %v340, 7
      %v342 = vsub.s32 0, %v341
      %v343 = vrot.slane %v338, %v342
      %v344 = vlaneseq
      %v345 = vshrl.u32 %v344, 7
      %v346 = vsub.s32 1, %v345
      %v347 = vrot.slane %v338, %v346
      %v348 = vlaneseq
      %v349 = vshrl.u32 %v348, 7
      %v350 = vsub.s32 2, %v349
      %v351 = vrot.slane %v338, %v350
      %v352 = vlaneseq
      %v353 = vshrl.u32 %v352, 7
      %v354 = vsub.s32 3, %v353
      %v355 = vrot.slane %v338, %v354
      %v392 = vunpack.c.l.b16 %v306
      %v393 = vunpack.c.h.b16 %v306
      %v394 = vunpack.c.l.b16 %v307
      %v395 = vunpack.c.h.b16 %v307
      %v396 = vunpack.c.l.b16 %v308
      %v397 = vunpack.c.h.b16 %v308
      %v398 = vunpack.c.l.b16 %v309
      %v399 = vunpack.c.h.b16 %v309
      %v400 = vunpack.c.l.b16 %v310
      %v401 = vunpack.c.h.b16 %v310
      %v402 = vunpack.c.l.b16 %v311
      %v403 = vunpack.c.h.b16 %v311
      %v404 = vunpack.c.l.b16 %v312
      %v405 = vunpack.c.h.b16 %v312
      %v406 = vunpack.c.l.b16 %v313
      %v407 = vunpack.c.h.b16 %v313
      %v408 = vunpack.c.l.b16 %v314
      %v409 = vunpack.c.h.b16 %v314
      %v410 = vunpack.c.l.b16 %v315
      %v411 = vunpack.c.h.b16 %v315
      %v412 = vunpack.c.l.b16 %v316
      %v413 = vunpack.c.h.b16 %v316
      %v414 = vunpack.c.l.b16 %v317
      %v415 = vunpack.c.h.b16 %v317
      %v416 = vunpack.c.l.b16 %v318
      %v417 = vunpack.c.h.b16 %v318
      %v418 = vunpack.c.l.b16 %v319
      %v419 = vunpack.c.h.b16 %v319
      %v420 = vunpack.c.l.b16 %v320
      %v421 = vunpack.c.h.b16 %v320
      %v422 = vunpack.c.l.b16 %v321
      %v423 = vunpack.c.h.b16 %v321
      %v424 = vunpack.c.l.b16 %v322
      %v425 = vunpack.c.h.b16 %v322
      %v426 = vunpack.c.l.b16 %v323
      %v427 = vunpack.c.h.b16 %v323
      %v428 = vunpack.c.l.b16 %v324
      %v429 = vunpack.c.h.b16 %v324
      %v430 = vunpack.c.l.b16 %v325
      %v431 = vunpack.c.h.b16 %v325
      %v432 = vunpack.c.l.b16 %v326
      %v433 = vunpack.c.h.b16 %v326
      %v434 = vunpack.c.l.b16 %v327
      %v435 = vunpack.c.h.b16 %v327
      %v436 = vunpack.c.l.b16 %v328
      %v437 = vunpack.c.h.b16 %v328
      %v438 = vunpack.c.l.b16 %v329
      %v439 = vunpack.c.h.b16 %v329
      %v440 = vunpack.c.l.b16 %v330
      %v441 = vunpack.c.h.b16 %v330
      %v442 = vunpack.c.l.b16 %v331
      %v443 = vunpack.c.h.b16 %v331
      %v444 = vunpack.c.l.b16 %v332
      %v445 = vunpack.c.h.b16 %v332
      %v446 = vunpack.c.l.b16 %v333
      %v447 = vunpack.c.h.b16 %v333
      %v448 = vunpack.c.l.b16 %v334
      %v449 = vunpack.c.h.b16 %v334
      %v450 = vunpack.c.l.b16 %v335
      %v451 = vunpack.c.h.b16 %v335
      %v452 = vunpack.c.l.b16 %v336
      %v453 = vunpack.c.h.b16 %v336
      %v454 = vunpack.c.l.b16 %v337
      %v455 = vunpack.c.h.b16 %v337
      %v456 = vpack.c.b16 %v396, %v392
      %v457 = vpack.c.b16 %v397, %v393
      %v458 = vpack.c.b16 %v398, %v394
      %v459 = vpack.c.b16 %v399, %v395
      %v460 = vpack.c.b16 %v404, %v400
      %v461 = vpack.c.b16 %v405, %v401
      %v462 = vpack.c.b16 %v406, %v402
      %v463 = vpack.c.b16 %v407, %v403
      %v464 = vpack.c.b16 %v412, %v408
      %v465 = vpack.c.b16 %v413, %v409
      %v466 = vpack.c.b16 %v414, %v410
      %v467 = vpack.c.b16 %v415, %v411
      %v468 = vpack.c.b16 %v420, %v416
      %v469 = vpack.c.b16 %v421, %v417
      %v470 = vpack.c.b16 %v422, %v418
      %v471 = vpack.c.b16 %v423, %v419
      %v472 = vpack.c.b16 %v428, %v424
      %v473 = vpack.c.b16 %v429, %v425
      %v474 = vpack.c.b16 %v430, %v426
      %v475 = vpack.c.b16 %v431, %v427
      %v476 = vpack.c.b16 %v436, %v432
      %v477 = vpack.c.b16 %v437, %v433
      %v478 = vpack.c.b16 %v438, %v434
      %v479 = vpack.c.b16 %v439, %v435
      %v480 = vpack.c.b16 %v444, %v440
      %v481 = vpack.c.b16 %v445, %v441
      %v482 = vpack.c.b16 %v446, %v442
      %v483 = vpack.c.b16 %v447, %v443
      %v484 = vpack.c.b16 %v452, %v448
      %v485 = vpack.c.b16 %v453, %v449
      %v486 = vpack.c.b16 %v454, %v450
      %v487 = vpack.c.b16 %v455, %v451
      %520 = vmatprep.subr.bf16.mxu0 %v485
      %521 = vmatpush1.bf16.msra.mxu0 %v484
      %522 = vmatprep.subr.bf16.mxu0 %v481
      %523 = vmatpush1.bf16.msra.mxu0 %v480
      %524 = vmatprep.subr.bf16.mxu0 %v477
      %525 = vmatpush1.bf16.msra.mxu0 %v476
      %526 = vmatprep.subr.bf16.mxu0 %v473
      %527 = vmatpush1.bf16.msra.mxu0 %v472
      %528 = vmatprep.subr.bf16.mxu0 %v469
      %529 = vmatpush1.bf16.msra.mxu0 %v468
      %530 = vmatprep.subr.bf16.mxu0 %v465
      %531 = vmatpush1.bf16.msra.mxu0 %v464
      %532 = vmatprep.subr.bf16.mxu0 %v461
      %533 = vmatpush1.bf16.msra.mxu0 %v460
      %534 = vmatprep.subr.bf16.mxu0 %v457
      %535 = vmatpush1.bf16.msra.mxu0 %v456
      %536 = vmatprep.subr.bf16.mxu0 0
      %537 = vmatpush2.bf16.msra.mxu0 0
      %538 = vmatprep.subr.bf16.mxu0 0
      %539 = vmatpush2.bf16.msra.mxu0 0
      %540 = vmatprep.subr.bf16.mxu0 0
      %541 = vmatpush2.bf16.msra.mxu0 0
      %542 = vmatprep.subr.bf16.mxu0 0
      %543 = vmatpush2.bf16.msra.mxu0 0
      %544 = vmatprep.subr.bf16.mxu0 0
      %545 = vmatpush2.bf16.msra.mxu0 0
      %546 = vmatprep.subr.bf16.mxu0 0
      %547 = vmatpush2.bf16.msra.mxu0 0
      %548 = vmatprep.subr.bf16.mxu0 0
      %549 = vmatpush2.bf16.msra.mxu0 0
      %550 = vmatprep.subr.bf16.mxu0 0
      %551 = vmatpush2.bf16.msra.mxu0 0
      %552 = vmatprep.mubr.bf16.mxu0 0
      %553 = vmatmul.mubr.bf16.gmra.mxu0 %v305
      %v554 = vpop.f32.mrf.mxu0
      %v555 = vadd.f32 %v343, %v554
      %v556 = vpop.f32.mrf.mxu0
      %v557 = vadd.f32 %v347, %v556
      %v558 = vpop.f32.mrf.mxu0
      %v559 = vpop.f32.mrf.mxu0
      %560 = vdwg.mxu0
      %561 = vmatprep.subr.bf16.mxu0 %v487
      %562 = vmatpush1.bf16.msra.mxu0 %v486
      %563 = vmatprep.subr.bf16.mxu0 %v483
      %564 = vmatpush1.bf16.msra.mxu0 %v482
      %565 = vmatprep.subr.bf16.mxu0 %v479
      %566 = vmatpush1.bf16.msra.mxu0 %v478
      %567 = vmatprep.subr.bf16.mxu0 %v475
      %568 = vmatpush1.bf16.msra.mxu0 %v474
      %569 = vmatprep.subr.bf16.mxu0 %v471
      %570 = vmatpush1.bf16.msra.mxu0 %v470
      %571 = vmatprep.subr.bf16.mxu0 %v467
      %572 = vmatpush1.bf16.msra.mxu0 %v466
      %573 = vmatprep.subr.bf16.mxu0 %v463
      %574 = vmatpush1.bf16.msra.mxu0 %v462
      %575 = vmatprep.subr.bf16.mxu0 %v459
      %576 = vmatpush1.bf16.msra.mxu0 %v458
      %577 = vmatprep.subr.bf16.mxu0 0
      %578 = vmatpush2.bf16.msra.mxu0 0
      %579 = vmatprep.subr.bf16.mxu0 0
      %580 = vmatpush2.bf16.msra.mxu0 0
      %581 = vmatprep.subr.bf16.mxu0 0
      %582 = vmatpush2.bf16.msra.mxu0 0
      %583 = vmatprep.subr.bf16.mxu0 0
      %584 = vmatpush2.bf16.msra.mxu0 0
      %585 = vmatprep.subr.bf16.mxu0 0
      %586 = vmatpush2.bf16.msra.mxu0 0
      %587 = vmatprep.subr.bf16.mxu0 0
      %588 = vmatpush2.bf16.msra.mxu0 0
      %589 = vmatprep.subr.bf16.mxu0 0
      %590 = vmatpush2.bf16.msra.mxu0 0
      %591 = vmatprep.subr.bf16.mxu0 0
      %592 = vmatpush2.bf16.msra.mxu0 0
      %593 = vmatprep.mubr.bf16.mxu0 0
      %594 = vmatmul.mubr.bf16.gmra.mxu0 %v305
      %v595 = vpop.f32.mrf.mxu0
      %v596 = vadd.f32 %v351, %v595
      %v597 = vpop.f32.mrf.mxu0
      %v598 = vadd.f32 %v355, %v597
      %v599 = vpop.f32.mrf.mxu0
      %v600 = vpop.f32.mrf.mxu0
      %601 = vdwg.mxu0
      %v602 = vmul.f32 %v555, %v555
      %v603 = vmul.f32 %v557, %v557
      %v604 = vmul.f32 %v596, %v596
      %v605 = vmul.f32 %v598, %v598
      %v606 = vmul.f32 %v555, %v602
      %v607 = vmul.f32 %v557, %v603
      %v608 = vmul.f32 %v596, %v604
      %v609 = vmul.f32 %v598, %v605
      %v610 = vmul.f32 %v606, 0.044715
      %v611 = vmul.f32 %v607, 0.044715
      %v612 = vmul.f32 %v608, 0.044715
      %v613 = vmul.f32 %v609, 0.044715
      %v614 = vadd.f32 %v555, %v610
      %v615 = vadd.f32 %v557, %v611
      %v616 = vadd.f32 %v596, %v612
      %v617 = vadd.f32 %v598, %v613
      %v618 = vmul.f32 %v614, 0.7978846
      %v619 = vmul.f32 %v615, 0.7978846
      %v620 = vmul.f32 %v616, 0.7978846
      %v621 = vmul.f32 %v617, 0.7978846
      %v622 = vtanh.pop %v618
      %v623 = vtanh.pop %v619
      %v624 = vtanh.pop %v620
      %v625 = vtanh.pop %v621
      %v626 = vadd.f32 %v622, 1.0
      %v627 = vadd.f32 %v623, 1.0
      %v628 = vadd.f32 %v624, 1.0
      %v629 = vadd.f32 %v625, 1.0
      %v630 = vmul.f32 %v626, 0.5
      %v631 = vmul.f32 %v627, 0.5
      %v632 = vmul.f32 %v628, 0.5
      %v633 = vmul.f32 %v629, 0.5
      %v634 = vmul.f32 %v555, %v630
      %v635 = vmul.f32 %v557, %v631
      %v636 = vmul.f32 %v596, %v632
      %v637 = vmul.f32 %v598, %v633
      %v638 = vpack.c.bf16 %v634, %v634
      %v639 = vpack.c.bf16 %v635, %v635
      %v640 = vpack.c.bf16 %v636, %v636
      %v641 = vpack.c.bf16 %v637, %v637
      %v642 = vld [vmem:[%s5] sm:$0xf]
      %v643 = vld [vmem:[%s5 + $0x4] sm:$0xf]
      %v644 = vld [vmem:[%s5 + $0x8] sm:$0xf]
      %v645 = vld [vmem:[%s5 + $0xc] sm:$0xf]
      %v646 = vld [vmem:[%s5 + $0x10] sm:$0xf]
      %v647 = vld [vmem:[%s5 + $0x14] sm:$0xf]
      %v648 = vld [vmem:[%s5 + $0x18] sm:$0xf]
      %v649 = vld [vmem:[%s5 + $0x1c] sm:$0xf]
      %v650 = vld [vmem:[%s5 + $0x20] sm:$0xf]
      %v651 = vld [vmem:[%s5 + $0x24] sm:$0xf]
      %v652 = vld [vmem:[%s5 + $0x28] sm:$0xf]
      %v653 = vld [vmem:[%s5 + $0x2c] sm:$0xf]
      %v654 = vld [vmem:[%s5 + $0x30] sm:$0xf]
      %v655 = vld [vmem:[%s5 + $0x34] sm:$0xf]
      %v656 = vld [vmem:[%s5 + $0x38] sm:$0xf]
      %v657 = vld [vmem:[%s5 + $0x3c] sm:$0xf]
      %v658 = vld [vmem:[%s5 + $0x40] sm:$0xf]
      %v659 = vld [vmem:[%s5 + $0x44] sm:$0xf]
      %v660 = vld [vmem:[%s5 + $0x48] sm:$0xf]
      %v661 = vld [vmem:[%s5 + $0x4c] sm:$0xf]
      %v662 = vld [vmem:[%s5 + $0x50] sm:$0xf]
      %v663 = vld [vmem:[%s5 + $0x54] sm:$0xf]
      %v664 = vld [vmem:[%s5 + $0x58] sm:$0xf]
      %v665 = vld [vmem:[%s5 + $0x5c] sm:$0xf]
      %v666 = vld [vmem:[%s5 + $0x60] sm:$0xf]
      %v667 = vld [vmem:[%s5 + $0x64] sm:$0xf]
      %v668 = vld [vmem:[%s5 + $0x68] sm:$0xf]
      %v669 = vld [vmem:[%s5 + $0x6c] sm:$0xf]
      %v670 = vld [vmem:[%s5 + $0x70] sm:$0xf]
      %v671 = vld [vmem:[%s5 + $0x74] sm:$0xf]
      %v672 = vld [vmem:[%s5 + $0x78] sm:$0xf]
      %v673 = vld [vmem:[%s5 + $0x7c] sm:$0xf]
      %v674 = vld [vmem:[%s5 + $0x80] sm:$0xf]
      %v675 = vld [vmem:[%s5 + $0x84] sm:$0xf]
      %v676 = vld [vmem:[%s5 + $0x88] sm:$0xf]
      %v677 = vld [vmem:[%s5 + $0x8c] sm:$0xf]
      %v678 = vld [vmem:[%s5 + $0x90] sm:$0xf]
      %v679 = vld [vmem:[%s5 + $0x94] sm:$0xf]
      %v680 = vld [vmem:[%s5 + $0x98] sm:$0xf]
      %v681 = vld [vmem:[%s5 + $0x9c] sm:$0xf]
      %v682 = vld [vmem:[%s5 + $0xa0] sm:$0xf]
      %v683 = vld [vmem:[%s5 + $0xa4] sm:$0xf]
      %v684 = vld [vmem:[%s5 + $0xa8] sm:$0xf]
      %v685 = vld [vmem:[%s5 + $0xac] sm:$0xf]
      %v686 = vld [vmem:[%s5 + $0xb0] sm:$0xf]
      %v687 = vld [vmem:[%s5 + $0xb4] sm:$0xf]
      %v688 = vld [vmem:[%s5 + $0xb8] sm:$0xf]
      %v689 = vld [vmem:[%s5 + $0xbc] sm:$0xf]
      %v690 = vld [vmem:[%s5 + $0xc0] sm:$0xf]
      %v691 = vld [vmem:[%s5 + $0xc4] sm:$0xf]
      %v692 = vld [vmem:[%s5 + $0xc8] sm:$0xf]
      %v693 = vld [vmem:[%s5 + $0xcc] sm:$0xf]
      %v694 = vld [vmem:[%s5 + $0xd0] sm:$0xf]
      %v695 = vld [vmem:[%s5 + $0xd4] sm:$0xf]
      %v696 = vld [vmem:[%s5 + $0xd8] sm:$0xf]
      %v697 = vld [vmem:[%s5 + $0xdc] sm:$0xf]
      %v698 = vld [vmem:[%s5 + $0xe0] sm:$0xf]
      %v699 = vld [vmem:[%s5 + $0xe4] sm:$0xf]
      %v700 = vld [vmem:[%s5 + $0xe8] sm:$0xf]
      %v701 = vld [vmem:[%s5 + $0xec] sm:$0xf]
      %v702 = vld [vmem:[%s5 + $0xf0] sm:$0xf]
      %v703 = vld [vmem:[%s5 + $0xf4] sm:$0xf]
      %v704 = vld [vmem:[%s5 + $0xf8] sm:$0xf]
      %v705 = vld [vmem:[%s5 + $0xfc] sm:$0xf]
      %v706 = vld [vmem:[%s6] sm:$0x1]
      %v708 = vlaneseq
      %v709 = vshrl.u32 %v708, 7
      %v710 = vsub.s32 0, %v709
      %v711 = vrot.slane %v706, %v710
      %v777 = vunpack.c.l.b16 %v642
      %v778 = vunpack.c.l.b16 %v643
      %v779 = vunpack.c.l.b16 %v644
      %v780 = vunpack.c.l.b16 %v645
      %v781 = vunpack.c.l.b16 %v646
      %v782 = vunpack.c.l.b16 %v647
      %v783 = vunpack.c.l.b16 %v648
      %v784 = vunpack.c.l.b16 %v649
      %v785 = vunpack.c.l.b16 %v650
      %v786 = vunpack.c.l.b16 %v651
      %v787 = vunpack.c.l.b16 %v652
      %v788 = vunpack.c.l.b16 %v653
      %v789 = vunpack.c.l.b16 %v654
      %v790 = vunpack.c.l.b16 %v655
      %v791 = vunpack.c.l.b16 %v656
      %v792 = vunpack.c.l.b16 %v657
      %v793 = vunpack.c.l.b16 %v658
      %v794 = vunpack.c.l.b16 %v659
      %v795 = vunpack.c.l.b16 %v660
      %v796 = vunpack.c.l.b16 %v661
      %v797 = vunpack.c.l.b16 %v662
      %v798 = vunpack.c.l.b16 %v663
      %v799 = vunpack.c.l.b16 %v664
      %v800 = vunpack.c.l.b16 %v665
      %v801 = vunpack.c.l.b16 %v666
      %v802 = vunpack.c.l.b16 %v667
      %v803 = vunpack.c.l.b16 %v668
      %v804 = vunpack.c.l.b16 %v669
      %v805 = vunpack.c.l.b16 %v670
      %v806 = vunpack.c.l.b16 %v671
      %v807 = vunpack.c.l.b16 %v672
      %v808 = vunpack.c.l.b16 %v673
      %v809 = vunpack.c.l.b16 %v674
      %v810 = vunpack.c.l.b16 %v675
      %v811 = vunpack.c.l.b16 %v676
      %v812 = vunpack.c.l.b16 %v677
      %v813 = vunpack.c.l.b16 %v678
      %v814 = vunpack.c.l.b16 %v679
      %v815 = vunpack.c.l.b16 %v680
      %v816 = vunpack.c.l.b16 %v681
      %v817 = vunpack.c.l.b16 %v682
      %v818 = vunpack.c.l.b16 %v683
      %v819 = vunpack.c.l.b16 %v684
      %v820 = vunpack.c.l.b16 %v685
      %v821 = vunpack.c.l.b16 %v686
      %v822 = vunpack.c.l.b16 %v687
      %v823 = vunpack.c.l.b16 %v688
      %v824 = vunpack.c.l.b16 %v689
      %v825 = vunpack.c.l.b16 %v690
      %v826 = vunpack.c.l.b16 %v691
      %v827 = vunpack.c.l.b16 %v692
      %v828 = vunpack.c.l.b16 %v693
      %v829 = vunpack.c.l.b16 %v694
      %v830 = vunpack.c.l.b16 %v695
      %v831 = vunpack.c.l.b16 %v696
      %v832 = vunpack.c.l.b16 %v697
      %v833 = vunpack.c.l.b16 %v698
      %v834 = vunpack.c.l.b16 %v699
      %v835 = vunpack.c.l.b16 %v700
      %v836 = vunpack.c.l.b16 %v701
      %v837 = vunpack.c.l.b16 %v702
      %v838 = vunpack.c.l.b16 %v703
      %v839 = vunpack.c.l.b16 %v704
      %v840 = vunpack.c.l.b16 %v705
      %v841 = vpack.c.b16 %v778, %v777
      %v842 = vpack.c.b16 %v780, %v779
      %v843 = vpack.c.b16 %v782, %v781
      %v844 = vpack.c.b16 %v784, %v783
      %v845 = vpack.c.b16 %v786, %v785
      %v846 = vpack.c.b16 %v788, %v787
      %v847 = vpack.c.b16 %v790, %v789
      %v848 = vpack.c.b16 %v792, %v791
      %v849 = vpack.c.b16 %v794, %v793
      %v850 = vpack.c.b16 %v796, %v795
      %v851 = vpack.c.b16 %v798, %v797
      %v852 = vpack.c.b16 %v800, %v799
      %v853 = vpack.c.b16 %v802, %v801
      %v854 = vpack.c.b16 %v804, %v803
      %v855 = vpack.c.b16 %v806, %v805
      %v856 = vpack.c.b16 %v808, %v807
      %v857 = vpack.c.b16 %v810, %v809
      %v858 = vpack.c.b16 %v812, %v811
      %v859 = vpack.c.b16 %v814, %v813
      %v860 = vpack.c.b16 %v816, %v815
      %v861 = vpack.c.b16 %v818, %v817
      %v862 = vpack.c.b16 %v820, %v819
      %v863 = vpack.c.b16 %v822, %v821
      %v864 = vpack.c.b16 %v824, %v823
      %v865 = vpack.c.b16 %v826, %v825
      %v866 = vpack.c.b16 %v828, %v827
      %v867 = vpack.c.b16 %v830, %v829
      %v868 = vpack.c.b16 %v832, %v831
      %v869 = vpack.c.b16 %v834, %v833
      %v870 = vpack.c.b16 %v836, %v835
      %v871 = vpack.c.b16 %v838, %v837
      %v872 = vpack.c.b16 %v840, %v839
      %905 = vmatprep.subr.bf16.mxu0 0
      %906 = vmatpush1.bf16.msra.mxu0 %v848
      %907 = vmatprep.subr.bf16.mxu0 0
      %908 = vmatpush1.bf16.msra.mxu0 %v847
      %909 = vmatprep.subr.bf16.mxu0 0
      %910 = vmatpush1.bf16.msra.mxu0 %v846
      %911 = vmatprep.subr.bf16.mxu0 0
      %912 = vmatpush1.bf16.msra.mxu0 %v845
      %913 = vmatprep.subr.bf16.mxu0 0
      %914 = vmatpush1.bf16.msra.mxu0 %v844
      %915 = vmatprep.subr.bf16.mxu0 0
      %916 = vmatpush1.bf16.msra.mxu0 %v843
      %917 = vmatprep.subr.bf16.mxu0 0
      %918 = vmatpush1.bf16.msra.mxu0 %v842
      %919 = vmatprep.subr.bf16.mxu0 0
      %920 = vmatpush1.bf16.msra.mxu0 %v841
      %921 = vmatprep.subr.bf16.mxu0 0
      %922 = vmatpush2.bf16.msra.mxu0 %v856
      %923 = vmatprep.subr.bf16.mxu0 0
      %924 = vmatpush2.bf16.msra.mxu0 %v855
      %925 = vmatprep.subr.bf16.mxu0 0
      %926 = vmatpush2.bf16.msra.mxu0 %v854
      %927 = vmatprep.subr.bf16.mxu0 0
      %928 = vmatpush2.bf16.msra.mxu0 %v853
      %929 = vmatprep.subr.bf16.mxu0 0
      %930 = vmatpush2.bf16.msra.mxu0 %v852
      %931 = vmatprep.subr.bf16.mxu0 0
      %932 = vmatpush2.bf16.msra.mxu0 %v851
      %933 = vmatprep.subr.bf16.mxu0 0
      %934 = vmatpush2.bf16.msra.mxu0 %v850
      %935 = vmatprep.subr.bf16.mxu0 0
      %936 = vmatpush2.bf16.msra.mxu0 %v849
      %937 = vmatprep.mubr.bf16.mxu0 %v639
      %938 = vmatmul.mubr.bf16.gmra.mxu0 %v638
      %v939 = vpop.f32.mrf.mxu0
      %v940 = vadd.f32 %v711, %v939
      %v941 = vpop.f32.mrf.mxu0
      %v942 = vpop.f32.mrf.mxu0
      %v943 = vpop.f32.mrf.mxu0
      %944 = vdwg.mxu0
      %945 = vmatprep.subr.bf16.mxu0 0
      %946 = vmatpush1.bf16.msra.mxu0 %v864
      %947 = vmatprep.subr.bf16.mxu0 0
      %948 = vmatpush1.bf16.msra.mxu0 %v863
      %949 = vmatprep.subr.bf16.mxu0 0
      %950 = vmatpush1.bf16.msra.mxu0 %v862
      %951 = vmatprep.subr.bf16.mxu0 0
      %952 = vmatpush1.bf16.msra.mxu0 %v861
      %953 = vmatprep.subr.bf16.mxu0 0
      %954 = vmatpush1.bf16.msra.mxu0 %v860
      %955 = vmatprep.subr.bf16.mxu0 0
      %956 = vmatpush1.bf16.msra.mxu0 %v859
      %957 = vmatprep.subr.bf16.mxu0 0
      %958 = vmatpush1.bf16.msra.mxu0 %v858
      %959 = vmatprep.subr.bf16.mxu0 0
      %960 = vmatpush1.bf16.msra.mxu0 %v857
      %961 = vmatprep.subr.bf16.mxu0 0
      %962 = vmatpush2.bf16.msra.mxu0 %v872
      %963 = vmatprep.subr.bf16.mxu0 0
      %964 = vmatpush2.bf16.msra.mxu0 %v871
      %965 = vmatprep.subr.bf16.mxu0 0
      %966 = vmatpush2.bf16.msra.mxu0 %v870
      %967 = vmatprep.subr.bf16.mxu0 0
      %968 = vmatpush2.bf16.msra.mxu0 %v869
      %969 = vmatprep.subr.bf16.mxu0 0
      %970 = vmatpush2.bf16.msra.mxu0 %v868
      %971 = vmatprep.subr.bf16.mxu0 0
      %972 = vmatpush2.bf16.msra.mxu0 %v867
      %973 = vmatprep.subr.bf16.mxu0 0
      %974 = vmatpush2.bf16.msra.mxu0 %v866
      %975 = vmatprep.subr.bf16.mxu0 0
      %976 = vmatpush2.bf16.msra.mxu0 %v865
      %977 = vmatprep.mubr.bf16.mxu0 %v641
      %978 = vmatmul.mubr.bf16.gmra.mxu0 %v640
      %v979 = vpop.f32.mrf.mxu0
      %v980 = vadd.f32 %v940, %v979
      %v981 = vpop.f32.mrf.mxu0
      %v982 = vpop.f32.mrf.mxu0
      %v983 = vpop.f32.mrf.mxu0
      %984 = vdwg.mxu0
      %v985 = vadd.f32 %v276, %v980
      %v986 = vpack.c.bf16 %v985, %v985
      %987 = vst [vmem:[%s273] sm:$0xf] %v986
      %p988 = scmp.lt.s32.totalorder %s18, 1
      %s989 = scalar_select %p988, %s18, 1
      %s990 = smul.addr %s989, 4
      %s991 = scalar_lea.vmem %s7, %s990
      // Predicated region
      $region49: #{gpt_actor_forward.8} parent=47 // pred_check
        %p992 = pneg %p188
      $region50: #{gpt_actor_forward.8} parent=47 // pred_check_branch
        %994 = sbr.rel (%p992) target = $region52
      $region51: #{gpt_actor_forward.8} parent=47 // pred_region
        _
      $region52: #{gpt_actor_forward.8} parent=47 // pred_fallthru
        _
    $region48: #{gpt_actor_forward.8} parent=5 // pred_fallthru
      _
    %p995 = scmp.le.s32.totalorder 2, %s13
    // Predicated region
    $region53: #{gpt_actor_forward.8} parent=5 // pred_check
      %p996 = pneg %p995
    $region54: #{gpt_actor_forward.8} parent=5 // pred_check_branch
      %998 = sbr.rel (%p996) target = $region56
    $region55: #{gpt_actor_forward.8} parent=5 // pred_region
      %s999 = ssub.s32 %s13, 2
      // Predicated region
      $region57: #{gpt_actor_forward.8} parent=55 // pred_check
        %p1000 = pneg %p194
      $region58: #{gpt_actor_forward.8} parent=55 // pred_check_branch
        %1002 = sbr.rel (%p1000) target = $region60
      $region59: #{gpt_actor_forward.8} parent=55 // pred_region
        %p1003 = scmp.lt.s32.totalorder %s19, 1
        %s1004 = scalar_select %p1003, %s19, 1
        %s1005 = smul.addr %s1004, 4
        %s1006 = scalar_lea.vmem %s7, %s1005
      $region60: #{gpt_actor_forward.8} parent=55 // pred_fallthru
        _
    $region56: #{gpt_actor_forward.8} parent=5 // pred_fallthru
      _
  $region6: #{gpt_actor_forward.8} parent=0 // loop_footer
    %s17 = sadd.s32 1, %s13
  $region7: #{gpt_actor_forward.8} parent=0 // loop_footer_branch
    %12 = sbr.rel target = $region3
  $region8: #{gpt_actor_forward.8} parent=0 // loop_exit
    _

// kernel: gpt_actor_forward.7
$region0: #{gpt_actor_forward.7}
  #allocation0 [shape = 'u32[]', space=smem, size = 0x4, offset = 0x4, fixed_abs, tag = 'smem constant byte address 0x4 - core index']
  #allocation1 [shape = 'u32[144,128]{1,0:T(1,128)}', space=vmem, size = 0x12000, scoped, tag = 'internal scratch']
  %s0 = inlined_call_operand.vmem [shape: bf16[2,8,128], index: 0, kind: input, shape index: {}]
  %s1 = inlined_call_operand.vmem [shape: f32[2,8,8], index: 1, kind: input, shape index: {}]
  %s2 = inlined_call_operand.vmem [shape: f32[1,128], index: 2, kind: input, shape index: {}]
  %s3 = inlined_call_operand.vmem [shape: f32[1,128], index: 3, kind: input, shape index: {}]
  %s4 = inlined_call_operand.vmem [shape: bf16[128,384], index: 4, kind: input, shape index: {}]
  %s5 = inlined_call_operand.vmem [shape: f32[1,384], index: 5, kind: input, shape index: {}]
  %s6 = inlined_call_operand.vmem [shape: bf16[128,128], index: 6, kind: input, shape index: {}]
  %s7 = inlined_call_operand.vmem [shape: f32[1,128], index: 7, kind: input, shape index: {}]
  %s8 = inlined_call_operand.vmem [shape: bf16[2,8,128], index: 8, kind: output, shape index: {}]
  %s9 = sld [smem:[#allocation0]]
  $region65: #{gpt_actor_forward.7} parent=0
    _
  %s11 = ssub.s32 1, %s9
  %s12 = scalar_select 0, %s11, %s9
  loop: start=0, step=1, limit=4
  $region2: #{gpt_actor_forward.7} parent=0 // loop_pre_header
    _
  $region3: #{gpt_actor_forward.7} parent=0 // loop_header
    %s14 = sphi 0, %s18
    %p15 = scmp.ge.s32.totalorder %s14, 4
    %s24 = sphi 0, %s26
    %s27 = sphi 0, %s24
    %s28 = sphi 0, %s27
    %s44 = sphi 0, %s28
    %s50 = sphi 0, %s52
    %s53 = sphi 0, %s50
    %s54 = sphi 0, %s53
    %s70 = sphi 0, %s54
    %s74 = sphi 0, %s74
    %s76 = sphi 0, %s74
    %s77 = sphi 0, %s76
    %s91 = sphi 0, %s77
    %s95 = sphi 0, %s95
    %s97 = sphi 0, %s95
    %s98 = sphi 0, %s97
    %s112 = sphi 0, %s98
    %s116 = sphi 0, %s116
    %s118 = sphi 0, %s116
    %s119 = sphi 0, %s118
    %s133 = sphi 0, %s119
    %s137 = sphi 0, %s137
    %s139 = sphi 0, %s137
    %s140 = sphi 0, %s139
    %s154 = sphi 0, %s140
    %s158 = sphi 0, %s158
    %s160 = sphi 0, %s158
    %s161 = sphi 0, %s160
    %s175 = sphi 0, %s161
    %s179 = sphi 0, %s179
    %s181 = sphi 0, %s179
    %s182 = sphi 0, %s181
    %s196 = sphi 0, %s182
    %s202 = sphi 0, %s204
    %s205 = sphi 0, %s202
    %s206 = sphi 0, %s205
    %s222 = sphi 0, %s206
  $region4: #{gpt_actor_forward.7} parent=0 // loop_header_branch
    %17 = sbr.rel (%p15) target = $region8
  $region5: #{gpt_actor_forward.7} parent=0 // loop_body
    %s19 = ssub.s32 %s14, 1
    %s20 = ssub.s32 %s14, 2
    %s21 = sadd.s32 %s14, 1
    %s22 = ssub.s32 %s14, %s21
    %p23 = scmp.eq.s32.totalorder %s22, 0
    %s25 = sadd.s32 %s24, 1
    %s26 = scalar_select %p23, %s24, %s25
    %p29 = pneg %p23
    %p30 = scmp.eq.s32.totalorder %s14, 1
    %p31 = por %p29, %p30
    %p32 = scmp.ne.s32.totalorder %s24, %s27
    %p33 = scmp.eq.s32.totalorder %s14, 0
    %p34 = por %p32, %p33
    %p35 = scmp.ne.s32.totalorder %s24, %s27
    %p36 = scmp.eq.s32.totalorder %s19, 1
    %p37 = por %p35, %p36
    %p38 = scmp.ne.s32.totalorder %s27, %s28
    %p39 = scmp.eq.s32.totalorder %s19, 0
    %p40 = por %p38, %p39
    %p41 = scmp.ne.s32.totalorder %s27, %s28
    %p42 = scmp.eq.s32.totalorder %s20, 1
    %p43 = por %p41, %p42
    %p45 = scmp.ne.s32.totalorder %s28, %s44
    %p46 = scmp.eq.s32.totalorder %s20, 0
    %p47 = por %p45, %p46
    %s48 = ssub.s32 %s14, %s21
    %p49 = scmp.eq.s32.totalorder %s48, 0
    %s51 = sadd.s32 %s50, 1
    %s52 = scalar_select %p49, %s50, %s51
    %p55 = pneg %p49
    %p56 = scmp.eq.s32.totalorder %s14, 1
    %p57 = por %p55, %p56
    %p58 = scmp.ne.s32.totalorder %s50, %s53
    %p59 = scmp.eq.s32.totalorder %s14, 0
    %p60 = por %p58, %p59
    %p61 = scmp.ne.s32.totalorder %s50, %s53
    %p62 = scmp.eq.s32.totalorder %s19, 1
    %p63 = por %p61, %p62
    %p64 = scmp.ne.s32.totalorder %s53, %s54
    %p65 = scmp.eq.s32.totalorder %s19, 0
    %p66 = por %p64, %p65
    %p67 = scmp.ne.s32.totalorder %s53, %s54
    %p68 = scmp.eq.s32.totalorder %s20, 1
    %p69 = por %p67, %p68
    %p71 = scmp.ne.s32.totalorder %s54, %s70
    %p72 = scmp.eq.s32.totalorder %s20, 0
    %p73 = por %p71, %p72
    %s75 = sadd.s32 %s74, 1
    %p78 = scmp.eq.s32.totalorder %s14, 1
    %p79 = scmp.ne.s32.totalorder %s74, %s76
    %p80 = scmp.eq.s32.totalorder %s14, 0
    %p81 = por %p79, %p80
    %p82 = scmp.ne.s32.totalorder %s74, %s76
    %p83 = scmp.eq.s32.totalorder %s19, 1
    %p84 = por %p82, %p83
    %p85 = scmp.ne.s32.totalorder %s76, %s77
    %p86 = scmp.eq.s32.totalorder %s19, 0
    %p87 = por %p85, %p86
    %p88 = scmp.ne.s32.totalorder %s76, %s77
    %p89 = scmp.eq.s32.totalorder %s20, 1
    %p90 = por %p88, %p89
    %p92 = scmp.ne.s32.totalorder %s77, %s91
    %p93 = scmp.eq.s32.totalorder %s20, 0
    %p94 = por %p92, %p93
    %s96 = sadd.s32 %s95, 1
    %p99 = scmp.eq.s32.totalorder %s14, 1
    %p100 = scmp.ne.s32.totalorder %s95, %s97
    %p101 = scmp.eq.s32.totalorder %s14, 0
    %p102 = por %p100, %p101
    %p103 = scmp.ne.s32.totalorder %s95, %s97
    %p104 = scmp.eq.s32.totalorder %s19, 1
    %p105 = por %p103, %p104
    %p106 = scmp.ne.s32.totalorder %s97, %s98
    %p107 = scmp.eq.s32.totalorder %s19, 0
    %p108 = por %p106, %p107
    %p109 = scmp.ne.s32.totalorder %s97, %s98
    %p110 = scmp.eq.s32.totalorder %s20, 1
    %p111 = por %p109, %p110
    %p113 = scmp.ne.s32.totalorder %s98, %s112
    %p114 = scmp.eq.s32.totalorder %s20, 0
    %p115 = por %p113, %p114
    %s117 = sadd.s32 %s116, 1
    %p120 = scmp.eq.s32.totalorder %s14, 1
    %p121 = scmp.ne.s32.totalorder %s116, %s118
    %p122 = scmp.eq.s32.totalorder %s14, 0
    %p123 = por %p121, %p122
    %p124 = scmp.ne.s32.totalorder %s116, %s118
    %p125 = scmp.eq.s32.totalorder %s19, 1
    %p126 = por %p124, %p125
    %p127 = scmp.ne.s32.totalorder %s118, %s119
    %p128 = scmp.eq.s32.totalorder %s19, 0
    %p129 = por %p127, %p128
    %p130 = scmp.ne.s32.totalorder %s118, %s119
    %p131 = scmp.eq.s32.totalorder %s20, 1
    %p132 = por %p130, %p131
    %p134 = scmp.ne.s32.totalorder %s119, %s133
    %p135 = scmp.eq.s32.totalorder %s20, 0
    %p136 = por %p134, %p135
    %s138 = sadd.s32 %s137, 1
    %p141 = scmp.eq.s32.totalorder %s14, 1
    %p142 = scmp.ne.s32.totalorder %s137, %s139
    %p143 = scmp.eq.s32.totalorder %s14, 0
    %p144 = por %p142, %p143
    %p145 = scmp.ne.s32.totalorder %s137, %s139
    %p146 = scmp.eq.s32.totalorder %s19, 1
    %p147 = por %p145, %p146
    %p148 = scmp.ne.s32.totalorder %s139, %s140
    %p149 = scmp.eq.s32.totalorder %s19, 0
    %p150 = por %p148, %p149
    %p151 = scmp.ne.s32.totalorder %s139, %s140
    %p152 = scmp.eq.s32.totalorder %s20, 1
    %p153 = por %p151, %p152
    %p155 = scmp.ne.s32.totalorder %s140, %s154
    %p156 = scmp.eq.s32.totalorder %s20, 0
    %p157 = por %p155, %p156
    %s159 = sadd.s32 %s158, 1
    %p162 = scmp.eq.s32.totalorder %s14, 1
    %p163 = scmp.ne.s32.totalorder %s158, %s160
    %p164 = scmp.eq.s32.totalorder %s14, 0
    %p165 = por %p163, %p164
    %p166 = scmp.ne.s32.totalorder %s158, %s160
    %p167 = scmp.eq.s32.totalorder %s19, 1
    %p168 = por %p166, %p167
    %p169 = scmp.ne.s32.totalorder %s160, %s161
    %p170 = scmp.eq.s32.totalorder %s19, 0
    %p171 = por %p169, %p170
    %p172 = scmp.ne.s32.totalorder %s160, %s161
    %p173 = scmp.eq.s32.totalorder %s20, 1
    %p174 = por %p172, %p173
    %p176 = scmp.ne.s32.totalorder %s161, %s175
    %p177 = scmp.eq.s32.totalorder %s20, 0
    %p178 = por %p176, %p177
    %s180 = sadd.s32 %s179, 1
    %p183 = scmp.eq.s32.totalorder %s14, 1
    %p184 = scmp.ne.s32.totalorder %s179, %s181
    %p185 = scmp.eq.s32.totalorder %s14, 0
    %p186 = por %p184, %p185
    %p187 = scmp.ne.s32.totalorder %s179, %s181
    %p188 = scmp.eq.s32.totalorder %s19, 1
    %p189 = por %p187, %p188
    %p190 = scmp.ne.s32.totalorder %s181, %s182
    %p191 = scmp.eq.s32.totalorder %s19, 0
    %p192 = por %p190, %p191
    %p193 = scmp.ne.s32.totalorder %s181, %s182
    %p194 = scmp.eq.s32.totalorder %s20, 1
    %p195 = por %p193, %p194
    %p197 = scmp.ne.s32.totalorder %s182, %s196
    %p198 = scmp.eq.s32.totalorder %s20, 0
    %p199 = por %p197, %p198
    %s200 = ssub.s32 %s14, %s21
    %p201 = scmp.eq.s32.totalorder %s200, 0
    %s203 = sadd.s32 %s202, 1
    %s204 = scalar_select %p201, %s202, %s203
    %p207 = pneg %p201
    %p208 = scmp.eq.s32.totalorder %s14, 1
    %p209 = por %p207, %p208
    %p210 = scmp.ne.s32.totalorder %s202, %s205
    %p211 = scmp.eq.s32.totalorder %s14, 0
    %p212 = por %p210, %p211
    %p213 = scmp.ne.s32.totalorder %s202, %s205
    %p214 = scmp.eq.s32.totalorder %s19, 1
    %p215 = por %p213, %p214
    %p216 = scmp.ne.s32.totalorder %s205, %s206
    %p217 = scmp.eq.s32.totalorder %s19, 0
    %p218 = por %p216, %p217
    %p219 = scmp.ne.s32.totalorder %s205, %s206
    %p220 = scmp.eq.s32.totalorder %s20, 1
    %p221 = por %p219, %p220
    %p223 = scmp.ne.s32.totalorder %s206, %s222
    %p224 = scmp.eq.s32.totalorder %s20, 0
    %p225 = por %p223, %p224
    %p226 = scmp.le.s32.totalorder 1, %s14
    %p227 = scmp.lt.s32.totalorder %s14, 3
    %p228 = pnand %p226, %p227
    %p229 = pneg %p228
    // Predicated region
    $region9: #{gpt_actor_forward.7} parent=5 // pred_check
      _
    $region10: #{gpt_actor_forward.7} parent=5 // pred_check_branch
      %231 = sbr.rel (%p228) target = $region12
    $region11: #{gpt_actor_forward.7} parent=5 // pred_region
      %s232 = ssub.s32 %s14, 1
      // Predicated region
      $region13: #{gpt_actor_forward.7} parent=11 // pred_check
        %p233 = pneg %p87
      $region14: #{gpt_actor_forward.7} parent=11 // pred_check_branch
        %235 = sbr.rel (%p233) target = $region16
      $region15: #{gpt_actor_forward.7} parent=11 // pred_region
        _
      $region16: #{gpt_actor_forward.7} parent=11 // pred_fallthru
        _
      // Predicated region
      $region17: #{gpt_actor_forward.7} parent=11 // pred_check
        %p236 = pneg %p108
      $region18: #{gpt_actor_forward.7} parent=11 // pred_check_branch
        %238 = sbr.rel (%p236) target = $region20
      $region19: #{gpt_actor_forward.7} parent=11 // pred_region
        _
      $region20: #{gpt_actor_forward.7} parent=11 // pred_fallthru
        _
      // Predicated region
      $region21: #{gpt_actor_forward.7} parent=11 // pred_check
        %p239 = pneg %p129
      $region22: #{gpt_actor_forward.7} parent=11 // pred_check_branch
        %241 = sbr.rel (%p239) target = $region24
      $region23: #{gpt_actor_forward.7} parent=11 // pred_region
        _
      $region24: #{gpt_actor_forward.7} parent=11 // pred_fallthru
        _
      // Predicated region
      $region25: #{gpt_actor_forward.7} parent=11 // pred_check
        %p242 = pneg %p150
      $region26: #{gpt_actor_forward.7} parent=11 // pred_check_branch
        %244 = sbr.rel (%p242) target = $region28
      $region27: #{gpt_actor_forward.7} parent=11 // pred_region
        _
      $region28: #{gpt_actor_forward.7} parent=11 // pred_fallthru
        _
      // Predicated region
      $region29: #{gpt_actor_forward.7} parent=11 // pred_check
        %p245 = pneg %p171
      $region30: #{gpt_actor_forward.7} parent=11 // pred_check_branch
        %247 = sbr.rel (%p245) target = $region32
      $region31: #{gpt_actor_forward.7} parent=11 // pred_region
        _
      $region32: #{gpt_actor_forward.7} parent=11 // pred_fallthru
        _
      // Predicated region
      $region33: #{gpt_actor_forward.7} parent=11 // pred_check
        %p248 = pneg %p192
      $region34: #{gpt_actor_forward.7} parent=11 // pred_check_branch
        %250 = sbr.rel (%p248) target = $region36
      $region35: #{gpt_actor_forward.7} parent=11 // pred_region
        _
      $region36: #{gpt_actor_forward.7} parent=11 // pred_fallthru
        _
    $region12: #{gpt_actor_forward.7} parent=5 // pred_fallthru
      _
    %p251 = scmp.lt.s32.totalorder %s14, 2
    // Predicated region
    $region37: #{gpt_actor_forward.7} parent=5 // pred_check
      %p252 = pneg %p251
    $region38: #{gpt_actor_forward.7} parent=5 // pred_check_branch
      %254 = sbr.rel (%p252) target = $region40
    $region39: #{gpt_actor_forward.7} parent=5 // pred_region
      // Predicated region
      $region41: #{gpt_actor_forward.7} parent=39 // pred_check
        %p255 = pneg %p34
      $region42: #{gpt_actor_forward.7} parent=39 // pred_check_branch
        %257 = sbr.rel (%p255) target = $region44
      $region43: #{gpt_actor_forward.7} parent=39 // pred_region
        %p258 = scmp.lt.s32.totalorder %s14, 1
        %s259 = scalar_select %p258, %s14, 1
        %s260 = smul.addr %s259, 4
        %s261 = scalar_lea.vmem %s0, %s260
      $region44: #{gpt_actor_forward.7} parent=39 // pred_fallthru
        _
      // Predicated region
      $region45: #{gpt_actor_forward.7} parent=39 // pred_check
        %p262 = pneg %p60
      $region46: #{gpt_actor_forward.7} parent=39 // pred_check_branch
        %264 = sbr.rel (%p262) target = $region48
      $region47: #{gpt_actor_forward.7} parent=39 // pred_region
        %p265 = scmp.lt.s32.totalorder %s14, 1
        %s266 = scalar_select %p265, %s14, 1
        %s267 = smul.addr %s266, 8
        %s268 = scalar_lea.vmem %s1, %s267
      $region48: #{gpt_actor_forward.7} parent=39 // pred_fallthru
        _
    $region40: #{gpt_actor_forward.7} parent=5 // pred_fallthru
      _
    %p269 = scmp.le.s32.totalorder 1, %s14
    %p270 = scmp.lt.s32.totalorder %s14, 3
    %p271 = pnand %p269, %p270
    %p272 = pneg %p271
    // Predicated region
    $region49: #{gpt_actor_forward.7} parent=5 // pred_check
      _
    $region50: #{gpt_actor_forward.7} parent=5 // pred_check_branch
      %274 = sbr.rel (%p271) target = $region52
    $region51: #{gpt_actor_forward.7} parent=5 // pred_region
      %s275 = ssub.s32 %s14, 1
      %p276 = scmp.lt.s32.totalorder %s19, 1
      %s277 = scalar_select %p276, %s19, 1
      %s278 = smul.addr %s277, 4
      %s279 = scalar_lea.vmem %s0, %s278
      %p280 = pneg %p40
      %p281 = pneg %p37
      %p282 = scmp.lt.s32.totalorder %s19, 1
      %s283 = scalar_select %p282, %s19, 1
      %s284 = smul.addr %s283, 8
      %s285 = scalar_lea.vmem %s1, %s284
      %p286 = pneg %p66
      %p287 = pneg %p63
      %p288 = pneg %p87
      %p289 = pneg %p84
      %p290 = pneg %p108
      %p291 = pneg %p105
      %p292 = pneg %p129
      %p293 = pneg %p126
      %p294 = pneg %p150
      %p295 = pneg %p147
      %p296 = pneg %p171
      %p297 = pneg %p168
      %p298 = pneg %p192
      %p299 = pneg %p189
      %p300 = pneg %p218
      %p301 = pneg %p215
      %p302 = scmp.lt.s32.totalorder %s19, 1
      %s303 = scalar_select %p302, %s19, 1
      %s304 = smul.addr %s303, 4
      %s305 = scalar_lea.vmem %s8, %s304
      %p306 = scmp.lt.s32.totalorder %s19, 1
      %s307 = scalar_select %p306, %s19, 1
      %s308 = smul.addr %s307, 4
      %s309 = scalar_lea.vmem %s0, %s308
      %p310 = scmp.lt.s32.totalorder %s19, 1
      %s311 = scalar_select %p310, %s19, 1
      %s312 = smul.addr %s311, 8
      %s313 = scalar_lea.vmem %s1, %s312
      %p314 = scmp.lt.s32.totalorder %s19, 1
      %s315 = scalar_select %p314, %s19, 1
      %s316 = smul.addr %s315, 4
      %s317 = scalar_lea.vmem %s8, %s316
      %v319 = vld [vmem:[%s309] sm:$0xf]
      %v320 = vunpack.c.l.bf16 %v319
      %v321 = vld [vmem:[%s2] sm:$0x1]
      %v322 = vld [vmem:[%s3] sm:$0x1]
      %323 = vadd.xlane.f32.xlu0 %v320
      %v324 = vpop.xlane.xlu0 %323
      %v325 = vrcp.pop 128.0
      %v326 = vmul.f32 %v324, %v325
      %v327 = vsub.f32 %v320, %v326
      %v328 = vmul.f32 %v327, %v327
      %329 = vadd.xlane.f32.xlu0 %v328
      %v330 = vpop.xlane.xlu0 %329
      %v331 = vmul.f32 %v330, %v325
      %v332 = vadd.f32 %v331, 1e-05
      %v333 = vrsqrt.pop %v332
      %v334 = vmul.f32 %v327, %v333
      %v336 = vlaneseq
      %v337 = vshrl.u32 %v336, 7
      %v338 = vsub.s32 0, %v337
      %v339 = vrot.slane %v321, %v338
      %v341 = vmul.f32 %v334, %v339
      %v343 = vlaneseq
      %v344 = vshrl.u32 %v343, 7
      %v345 = vsub.s32 0, %v344
      %v346 = vrot.slane %v322, %v345
      %v348 = vadd.f32 %v341, %v346
      %v349 = vpack.c.bf16 %v348, %v348
      %v350 = vld [vmem:[%s4] sm:$0xff]
      %v351 = vld [vmem:[%s4 + $0x8] sm:$0xf]
      %v352 = vld [vmem:[%s4 + $0xc] sm:$0xff]
      %v353 = vld [vmem:[%s4 + $0x14] sm:$0xf]
      %v354 = vld [vmem:[%s4 + $0x18] sm:$0xff]
      %v355 = vld [vmem:[%s4 + $0x20] sm:$0xf]
      %v356 = vld [vmem:[%s4 + $0x24] sm:$0xff]
      %v357 = vld [vmem:[%s4 + $0x2c] sm:$0xf]
      %v358 = vld [vmem:[%s4 + $0x30] sm:$0xff]
      %v359 = vld [vmem:[%s4 + $0x38] sm:$0xf]
      %v360 = vld [vmem:[%s4 + $0x3c] sm:$0xff]
      %v361 = vld [vmem:[%s4 + $0x44] sm:$0xf]
      %v362 = vld [vmem:[%s4 + $0x48] sm:$0xff]
      %v363 = vld [vmem:[%s4 + $0x50] sm:$0xf]
      %v364 = vld [vmem:[%s4 + $0x54] sm:$0xff]
      %v365 = vld [vmem:[%s4 + $0x5c] sm:$0xf]
      %v366 = vld [vmem:[%s4 + $0x60] sm:$0xff]
      %v367 = vld [vmem:[%s4 + $0x68] sm:$0xf]
      %v368 = vld [vmem:[%s4 + $0x6c] sm:$0xff]
      %v369 = vld [vmem:[%s4 + $0x74] sm:$0xf]
      %v370 = vld [vmem:[%s4 + $0x78] sm:$0xff]
      %v371 = vld [vmem:[%s4 + $0x80] sm:$0xf]
      %v372 = vld [vmem:[%s4 + $0x84] sm:$0xff]
      %v373 = vld [vmem:[%s4 + $0x8c] sm:$0xf]
      %v374 = vld [vmem:[%s4 + $0x90] sm:$0xff]
      %v375 = vld [vmem:[%s4 + $0x98] sm:$0xf]
      %v376 = vld [vmem:[%s4 + $0x9c] sm:$0xff]
      %v377 = vld [vmem:[%s4 + $0xa4] sm:$0xf]
      %v378 = vld [vmem:[%s4 + $0xa8] sm:$0xff]
      %v379 = vld [vmem:[%s4 + $0xb0] sm:$0xf]
      %v380 = vld [vmem:[%s4 + $0xb4] sm:$0xff]
      %v381 = vld [vmem:[%s4 + $0xbc] sm:$0xf]
      %v382 = vld [vmem:[%s5] sm:$0x7]
      %v384 = vlaneseq
      %v385 = vshrl.u32 %v384, 7
      %v386 = vsub.s32 0, %v385
      %v387 = vrot.slane %v382, %v386
      %v388 = vlaneseq
      %v389 = vshrl.u32 %v388, 7
      %v390 = vsub.s32 1, %v389
      %v391 = vrot.slane %v382, %v390
      %v392 = vlaneseq
      %v393 = vshrl.u32 %v392, 7
      %v394 = vsub.s32 2, %v393
      %v395 = vrot.slane %v382, %v394
      %v431 = vunpack.c.l.b16 %v350
      %v432 = vunpack.c.h.b16 %v350
      %v433 = vunpack.c.l.b16 %v351
      %v434 = vunpack.c.l.b16 %v352
      %v435 = vunpack.c.h.b16 %v352
      %v436 = vunpack.c.l.b16 %v353
      %v437 = vunpack.c.l.b16 %v354
      %v438 = vunpack.c.h.b16 %v354
      %v439 = vunpack.c.l.b16 %v355
      %v440 = vunpack.c.l.b16 %v356
      %v441 = vunpack.c.h.b16 %v356
      %v442 = vunpack.c.l.b16 %v357
      %v443 = vunpack.c.l.b16 %v358
      %v444 = vunpack.c.h.b16 %v358
      %v445 = vunpack.c.l.b16 %v359
      %v446 = vunpack.c.l.b16 %v360
      %v447 = vunpack.c.h.b16 %v360
      %v448 = vunpack.c.l.b16 %v361
      %v449 = vunpack.c.l.b16 %v362
      %v450 = vunpack.c.h.b16 %v362
      %v451 = vunpack.c.l.b16 %v363
      %v452 = vunpack.c.l.b16 %v364
      %v453 = vunpack.c.h.b16 %v364
      %v454 = vunpack.c.l.b16 %v365
      %v455 = vunpack.c.l.b16 %v366
      %v456 = vunpack.c.h.b16 %v366
      %v457 = vunpack.c.l.b16 %v367
      %v458 = vunpack.c.l.b16 %v368
      %v459 = vunpack.c.h.b16 %v368
      %v460 = vunpack.c.l.b16 %v369
      %v461 = vunpack.c.l.b16 %v370
      %v462 = vunpack.c.h.b16 %v370
      %v463 = vunpack.c.l.b16 %v371
      %v464 = vunpack.c.l.b16 %v372
      %v465 = vunpack.c.h.b16 %v372
      %v466 = vunpack.c.l.b16 %v373
      %v467 = vunpack.c.l.b16 %v374
      %v468 = vunpack.c.h.b16 %v374
      %v469 = vunpack.c.l.b16 %v375
      %v470 = vunpack.c.l.b16 %v376
      %v471 = vunpack.c.h.b16 %v376
      %v472 = vunpack.c.l.b16 %v377
      %v473 = vunpack.c.l.b16 %v378
      %v474 = vunpack.c.h.b16 %v378
      %v475 = vunpack.c.l.b16 %v379
      %v476 = vunpack.c.l.b16 %v380
      %v477 = vunpack.c.h.b16 %v380
      %v478 = vunpack.c.l.b16 %v381
      %v479 = vpack.c.b16 %v434, %v431
      %v480 = vpack.c.b16 %v435, %v432
      %v481 = vpack.c.b16 %v436, %v433
      %v482 = vpack.c.b16 %v440, %v437
      %v483 = vpack.c.b16 %v441, %v438
      %v484 = vpack.c.b16 %v442, %v439
      %v485 = vpack.c.b16 %v446, %v443
      %v486 = vpack.c.b16 %v447, %v444
      %v487 = vpack.c.b16 %v448, %v445
      %v488 = vpack.c.b16 %v452, %v449
      %v489 = vpack.c.b16 %v453, %v450
      %v490 = vpack.c.b16 %v454, %v451
      %v491 = vpack.c.b16 %v458, %v455
      %v492 = vpack.c.b16 %v459, %v456
      %v493 = vpack.c.b16 %v460, %v457
      %v494 = vpack.c.b16 %v464, %v461
      %v495 = vpack.c.b16 %v465, %v462
      %v496 = vpack.c.b16 %v466, %v463
      %v497 = vpack.c.b16 %v470, %v467
      %v498 = vpack.c.b16 %v471, %v468
      %v499 = vpack.c.b16 %v472, %v469
      %v500 = vpack.c.b16 %v476, %v473
      %v501 = vpack.c.b16 %v477, %v474
      %v502 = vpack.c.b16 %v478, %v475
      %527 = vmatprep.subr.bf16.mxu0 %v501
      %528 = vmatpush1.bf16.msra.mxu0 %v500
      %529 = vmatprep.subr.bf16.mxu0 %v498
      %530 = vmatpush1.bf16.msra.mxu0 %v497
      %531 = vmatprep.subr.bf16.mxu0 %v495
      %532 = vmatpush1.bf16.msra.mxu0 %v494
      %533 = vmatprep.subr.bf16.mxu0 %v492
      %534 = vmatpush1.bf16.msra.mxu0 %v491
      %535 = vmatprep.subr.bf16.mxu0 %v489
      %536 = vmatpush1.bf16.msra.mxu0 %v488
      %537 = vmatprep.subr.bf16.mxu0 %v486
      %538 = vmatpush1.bf16.msra.mxu0 %v485
      %539 = vmatprep.subr.bf16.mxu0 %v483
      %540 = vmatpush1.bf16.msra.mxu0 %v482
      %541 = vmatprep.subr.bf16.mxu0 %v480
      %542 = vmatpush1.bf16.msra.mxu0 %v479
      %543 = vmatprep.subr.bf16.mxu0 0
      %544 = vmatpush2.bf16.msra.mxu0 0
      %545 = vmatprep.subr.bf16.mxu0 0
      %546 = vmatpush2.bf16.msra.mxu0 0
      %547 = vmatprep.subr.bf16.mxu0 0
      %548 = vmatpush2.bf16.msra.mxu0 0
      %549 = vmatprep.subr.bf16.mxu0 0
      %550 = vmatpush2.bf16.msra.mxu0 0
      %551 = vmatprep.subr.bf16.mxu0 0
      %552 = vmatpush2.bf16.msra.mxu0 0
      %553 = vmatprep.subr.bf16.mxu0 0
      %554 = vmatpush2.bf16.msra.mxu0 0
      %555 = vmatprep.subr.bf16.mxu0 0
      %556 = vmatpush2.bf16.msra.mxu0 0
      %557 = vmatprep.subr.bf16.mxu0 0
      %558 = vmatpush2.bf16.msra.mxu0 0
      %559 = vmatprep.mubr.bf16.mxu0 0
      %560 = vmatmul.mubr.bf16.gmra.mxu0 %v349
      %v561 = vpop.f32.mrf.mxu0
      %v562 = vadd.f32 %v387, %v561
      %v563 = vpop.f32.mrf.mxu0
      %v564 = vadd.f32 %v391, %v563
      %v565 = vpop.f32.mrf.mxu0
      %v566 = vpop.f32.mrf.mxu0
      %567 = vdwg.mxu0
      %568 = vmatprep.subr.bf16.mxu0 0
      %569 = vmatpush1.bf16.msra.mxu0 %v502
      %570 = vmatprep.subr.bf16.mxu0 0
      %571 = vmatpush1.bf16.msra.mxu0 %v499
      %572 = vmatprep.subr.bf16.mxu0 0
      %573 = vmatpush1.bf16.msra.mxu0 %v496
      %574 = vmatprep.subr.bf16.mxu0 0
      %575 = vmatpush1.bf16.msra.mxu0 %v493
      %576 = vmatprep.subr.bf16.mxu0 0
      %577 = vmatpush1.bf16.msra.mxu0 %v490
      %578 = vmatprep.subr.bf16.mxu0 0
      %579 = vmatpush1.bf16.msra.mxu0 %v487
      %580 = vmatprep.subr.bf16.mxu0 0
      %581 = vmatpush1.bf16.msra.mxu0 %v484
      %582 = vmatprep.subr.bf16.mxu0 0
      %583 = vmatpush1.bf16.msra.mxu0 %v481
      %584 = vmatprep.subr.bf16.mxu0 0
      %585 = vmatpush2.bf16.msra.mxu0 0
      %586 = vmatprep.subr.bf16.mxu0 0
      %587 = vmatpush2.bf16.msra.mxu0 0
      %588 = vmatprep.subr.bf16.mxu0 0
      %589 = vmatpush2.bf16.msra.mxu0 0
      %590 = vmatprep.subr.bf16.mxu0 0
      %591 = vmatpush2.bf16.msra.mxu0 0
      %592 = vmatprep.subr.bf16.mxu0 0
      %593 = vmatpush2.bf16.msra.mxu0 0
      %594 = vmatprep.subr.bf16.mxu0 0
      %595 = vmatpush2.bf16.msra.mxu0 0
      %596 = vmatprep.subr.bf16.mxu0 0
      %597 = vmatpush2.bf16.msra.mxu0 0
      %598 = vmatprep.subr.bf16.mxu0 0
      %599 = vmatpush2.bf16.msra.mxu0 0
      %600 = vmatprep.mubr.bf16.mxu0 0
      %601 = vmatmul.mubr.bf16.gmra.mxu0 %v349
      %v602 = vpop.f32.mrf.mxu0
      %v603 = vadd.f32 %v395, %v602
      %v604 = vpop.f32.mrf.mxu0
      %v605 = vpop.f32.mrf.mxu0
      %v606 = vpop.f32.mrf.mxu0
      %607 = vdwg.mxu0
      %v608 = vld [vmem:[%s313] sm:$0xff]
      %vm609 = vcmask 261120
      %v611 = vsel %vm609, %v562, 0
      %v614 = vsel %vm609, %v564, 0
      %616 = vmatprep.subr.mxu0 0.0
      %617 = vmatpush1.xpose.msra.mxu0 0.0
      %618 = vmatprep.subr.mxu0 0.0
      %619 = vmatpush1.xpose.msra.mxu0 0.0
      %620 = vmatprep.subr.mxu0 0.0
      %621 = vmatpush1.xpose.msra.mxu0 0.0
      %622 = vmatprep.subr.mxu0 0.0
      %623 = vmatpush1.xpose.msra.mxu0 0.0
      %624 = vmatprep.subr.mxu0 0.0
      %625 = vmatpush1.xpose.msra.mxu0 0.0
      %626 = vmatprep.subr.mxu0 0.0
      %627 = vmatpush1.xpose.msra.mxu0 0.0
      %628 = vmatprep.subr.mxu0 0.0
      %629 = vmatpush1.xpose.msra.mxu0 0.0
      %630 = vmatprep.subr.mxu0 0.0
      %631 = vmatpush1.xpose.msra.mxu0 0.0
      %632 = vmatprep.subr.mxu0 0.0
      %633 = vmatpush1.xpose.msra.mxu0 0.0
      %634 = vmatprep.subr.mxu0 0.0
      %635 = vmatpush1.xpose.msra.mxu0 0.0
      %636 = vmatprep.subr.mxu0 0.0
      %637 = vmatpush1.xpose.msra.mxu0 0.0
      %638 = vmatprep.subr.mxu0 0.0
      %639 = vmatpush1.xpose.msra.mxu0 0.0
      %640 = vmatprep.subr.mxu0 0.0
      %641 = vmatpush1.xpose.msra.mxu0 0.0
      %642 = vmatprep.subr.mxu0 0.0
      %643 = vmatpush1.xpose.msra.mxu0 0.0
      %644 = vmatprep.subr.mxu0 0.0
      %645 = vmatpush1.xpose.msra.mxu0 0.0
      %646 = vmatprep.subr.mxu0 0.0
      %647 = vmatpush1.xpose.msra.mxu0 %v614
      %648 = vmatprep.subr.mxu0 0.0
      %649 = vmatpush2.xpose.msra.mxu0 0.0
      %650 = vmatprep.subr.mxu0 0.0
      %651 = vmatpush2.xpose.msra.mxu0 0.0
      %652 = vmatprep.subr.mxu0 0.0
      %653 = vmatpush2.xpose.msra.mxu0 0.0
      %654 = vmatprep.subr.mxu0 0.0
      %655 = vmatpush2.xpose.msra.mxu0 0.0
      %656 = vmatprep.subr.mxu0 0.0
      %657 = vmatpush2.xpose.msra.mxu0 0.0
      %658 = vmatprep.subr.mxu0 0.0
      %659 = vmatpush2.xpose.msra.mxu0 0.0
      %660 = vmatprep.subr.mxu0 0.0
      %661 = vmatpush2.xpose.msra.mxu0 0.0
      %662 = vmatprep.subr.mxu0 0.0
      %663 = vmatpush2.xpose.msra.mxu0 0.0
      %664 = vmatprep.subr.mxu0 0.0
      %665 = vmatpush2.xpose.msra.mxu0 0.0
      %666 = vmatprep.subr.mxu0 0.0
      %667 = vmatpush2.xpose.msra.mxu0 0.0
      %668 = vmatprep.subr.mxu0 0.0
      %669 = vmatpush2.xpose.msra.mxu0 0.0
      %670 = vmatprep.subr.mxu0 0.0
      %671 = vmatpush2.xpose.msra.mxu0 0.0
      %672 = vmatprep.subr.mxu0 0.0
      %673 = vmatpush2.xpose.msra.mxu0 0.0
      %674 = vmatprep.subr.mxu0 0.0
      %675 = vmatpush2.xpose.msra.mxu0 0.0
      %676 = vmatprep.subr.mxu0 0.0
      %677 = vmatpush2.xpose.msra.mxu0 0.0
      %678 = vmatprep.subr.mxu0 0.0
      %679 = vmatpush2.xpose.msra.mxu0 0.0
      %680 = vmatprep.mubr.f32.mxu0 0.0
      %681 = vmatmul.mubr.f32.gmra.mxu0 %v611
      %v682 = vpop.f32.mrf.mxu0
      %v683 = vadd.f32 0.0, %v682
      %v684 = vpop.f32.mrf.mxu0
      %685 = vdwg.mxu0
      %v686 = vmul.f32 %v683, 0.17677669
      %v687 = vadd.f32 %v686, %v608
      %vm688 = vcmask 64512
      %v689 = vsel %vm688, %v687, -inf
      %690 = vmax.xlane.f32.xlu0 %v689
      %v691 = vpop.xlane.xlu0 %690
      %v692 = vsub.f32 %v687, %v691
      %v693 = vmul.f32 %v692, 1.442695
      %v694 = vpow.pop %v693
      %v695 = vsel %vm688, %v694, 0.0
      %696 = vadd.xlane.f32.xlu0 %v695
      %v697 = vpop.xlane.xlu0 %696
      %v698 = vrcp.pop %v697
      %v699 = vmul.f32 %v694, %v698
      %v700 = vpack.c.bf16 %v699, %v699
      %v701 = vpack.c.bf16 %v603, %v603
      %v703 = vsel %vm688, %v700, 0
      %vm705 = vcmask 1043456
      %v707 = vsel %vm705, %v701, 0
      %709 = vmatprep.subr.bf16.mxu0 0
      %710 = vmatpush1.bf16.msra.mxu0 0
      %711 = vmatprep.subr.bf16.mxu0 0
      %712 = vmatpush1.bf16.msra.mxu0 0
      %713 = vmatprep.subr.bf16.mxu0 0
      %714 = vmatpush1.bf16.msra.mxu0 0
      %715 = vmatprep.subr.bf16.mxu0 0
      %716 = vmatpush1.bf16.msra.mxu0 0
      %717 = vmatprep.subr.bf16.mxu0 0
      %718 = vmatpush1.bf16.msra.mxu0 0
      %719 = vmatprep.subr.bf16.mxu0 0
      %720 = vmatpush1.bf16.msra.mxu0 0
      %721 = vmatprep.subr.bf16.mxu0 0
      %722 = vmatpush1.bf16.msra.mxu0 0
      %723 = vmatprep.subr.bf16.mxu0 0
      %724 = vmatpush1.bf16.msra.mxu0 %v707
      %725 = vmatprep.subr.bf16.mxu0 0
      %726 = vmatpush2.bf16.msra.mxu0 0
      %727 = vmatprep.subr.bf16.mxu0 0
      %728 = vmatpush2.bf16.msra.mxu0 0
      %729 = vmatprep.subr.bf16.mxu0 0
      %730 = vmatpush2.bf16.msra.mxu0 0
      %731 = vmatprep.subr.bf16.mxu0 0
      %732 = vmatpush2.bf16.msra.mxu0 0
      %733 = vmatprep.subr.bf16.mxu0 0
      %734 = vmatpush2.bf16.msra.mxu0 0
      %735 = vmatprep.subr.bf16.mxu0 0
      %736 = vmatpush2.bf16.msra.mxu0 0
      %737 = vmatprep.subr.bf16.mxu0 0
      %738 = vmatpush2.bf16.msra.mxu0 0
      %739 = vmatprep.subr.bf16.mxu0 0
      %740 = vmatpush2.bf16.msra.mxu0 0
      %741 = vmatprep.mubr.bf16.mxu0 0
      %742 = vmatmul.mubr.bf16.gmra.mxu0 %v703
      %v743 = vpop.f32.mrf.mxu0
      %v744 = vadd.f32 0.0, %v743
      %v745 = vpop.f32.mrf.mxu0
      %v746 = vpop.f32.mrf.mxu0
      %v747 = vpop.f32.mrf.mxu0
      %748 = vdwg.mxu0
      %v749 = vpack.c.bf16 %v744, %v744
      %v750 = vld [vmem:[%s6] sm:$0xf]
      %v751 = vld [vmem:[%s6 + $0x4] sm:$0xf]
      %v752 = vld [vmem:[%s6 + $0x8] sm:$0xf]
      %v753 = vld [vmem:[%s6 + $0xc] sm:$0xf]
      %754 = vrot.lane.b32.xlu0 %v562, 96
      %v755 = vpop.permute.xlu0 %754
      %756 = vrot.lane.b32.xlu0 %v564, 96
      %v757 = vpop.permute.xlu0 %756
      %v758 = vsel %vm609, %v755, 0
      %v760 = vsel %vm609, %v757, 0
      %762 = vmatprep.subr.mxu0 0.0
      %763 = vmatpush1.xpose.msra.mxu0 0.0
      %764 = vmatprep.subr.mxu0 0.0
      %765 = vmatpush1.xpose.msra.mxu0 0.0
      %766 = vmatprep.subr.mxu0 0.0
      %767 = vmatpush1.xpose.msra.mxu0 0.0
      %768 = vmatprep.subr.mxu0 0.0
      %769 = vmatpush1.xpose.msra.mxu0 0.0
      %770 = vmatprep.subr.mxu0 0.0
      %771 = vmatpush1.xpose.msra.mxu0 0.0
      %772 = vmatprep.subr.mxu0 0.0
      %773 = vmatpush1.xpose.msra.mxu0 0.0
      %774 = vmatprep.subr.mxu0 0.0
      %775 = vmatpush1.xpose.msra.mxu0 0.0
      %776 = vmatprep.subr.mxu0 0.0
      %777 = vmatpush1.xpose.msra.mxu0 0.0
      %778 = vmatprep.subr.mxu0 0.0
      %779 = vmatpush1.xpose.msra.mxu0 0.0
      %780 = vmatprep.subr.mxu0 0.0
      %781 = vmatpush1.xpose.msra.mxu0 0.0
      %782 = vmatprep.subr.mxu0 0.0
      %783 = vmatpush1.xpose.msra.mxu0 0.0
      %784 = vmatprep.subr.mxu0 0.0
      %785 = vmatpush1.xpose.msra.mxu0 0.0
      %786 = vmatprep.subr.mxu0 0.0
      %787 = vmatpush1.xpose.msra.mxu0 0.0
      %788 = vmatprep.subr.mxu0 0.0
      %789 = vmatpush1.xpose.msra.mxu0 0.0
      %790 = vmatprep.subr.mxu0 0.0
      %791 = vmatpush1.xpose.msra.mxu0 0.0
      %792 = vmatprep.subr.mxu0 0.0
      %793 = vmatpush1.xpose.msra.mxu0 %v760
      %794 = vmatprep.subr.mxu0 0.0
      %795 = vmatpush2.xpose.msra.mxu0 0.0
      %796 = vmatprep.subr.mxu0 0.0
      %797 = vmatpush2.xpose.msra.mxu0 0.0
      %798 = vmatprep.subr.mxu0 0.0
      %799 = vmatpush2.xpose.msra.mxu0 0.0
      %800 = vmatprep.subr.mxu0 0.0
      %801 = vmatpush2.xpose.msra.mxu0 0.0
      %802 = vmatprep.subr.mxu0 0.0
      %803 = vmatpush2.xpose.msra.mxu0 0.0
      %804 = vmatprep.subr.mxu0 0.0
      %805 = vmatpush2.xpose.msra.mxu0 0.0
      %806 = vmatprep.subr.mxu0 0.0
      %807 = vmatpush2.xpose.msra.mxu0 0.0
      %808 = vmatprep.subr.mxu0 0.0
      %809 = vmatpush2.xpose.msra.mxu0 0.0
      %810 = vmatprep.subr.mxu0 0.0
      %811 = vmatpush2.xpose.msra.mxu0 0.0
      %812 = vmatprep.subr.mxu0 0.0
      %813 = vmatpush2.xpose.msra.mxu0 0.0
      %814 = vmatprep.subr.mxu0 0.0
      %815 = vmatpush2.xpose.msra.mxu0 0.0
      %816 = vmatprep.subr.mxu0 0.0
      %817 = vmatpush2.xpose.msra.mxu0 0.0
      %818 = vmatprep.subr.mxu0 0.0
      %819 = vmatpush2.xpose.msra.mxu0 0.0
      %820 = vmatprep.subr.mxu0 0.0
      %821 = vmatpush2.xpose.msra.mxu0 0.0
      %822 = vmatprep.subr.mxu0 0.0
      %823 = vmatpush2.xpose.msra.mxu0 0.0
      %824 = vmatprep.subr.mxu0 0.0
      %825 = vmatpush2.xpose.msra.mxu0 0.0
      %826 = vmatprep.mubr.f32.mxu0 0.0
      %827 = vmatmul.mubr.f32.gmra.mxu0 %v758
      %v828 = vpop.f32.mrf.mxu0
      %v829 = vadd.f32 0.0, %v828
      %v830 = vpop.f32.mrf.mxu0
      %831 = vdwg.mxu0
      %v832 = vmul.f32 %v829, 0.17677669
      %v833 = vadd.f32 %v832, %v608
      %v834 = vsel %vm688, %v833, -inf
      %835 = vmax.xlane.f32.xlu0 %v834
      %v836 = vpop.xlane.xlu0 %835
      %v837 = vsub.f32 %v833, %v836
      %v838 = vmul.f32 %v837, 1.442695
      %v839 = vpow.pop %v838
      %v840 = vsel %vm688, %v839, 0.0
      %841 = vadd.xlane.f32.xlu0 %v840
      %v842 = vpop.xlane.xlu0 %841
      %v843 = vrcp.pop %v842
      %v844 = vmul.f32 %v839, %v843
      %v845 = vpack.c.bf16 %v844, %v844
      %847 = vrot.lane.b32.xlu0 %v701, 96
      %v848 = vpop.permute.xlu0 %847
      %v850 = vsel %vm688, %v845, 0
      %v853 = vsel %vm705, %v848, 0
      %855 = vmatprep.subr.bf16.mxu0 0
      %856 = vmatpush1.bf16.msra.mxu0 0
      %857 = vmatprep.subr.bf16.mxu0 0
      %858 = vmatpush1.bf16.msra.mxu0 0
      %859 = vmatprep.subr.bf16.mxu0 0
      %860 = vmatpush1.bf16.msra.mxu0 0
      %861 = vmatprep.subr.bf16.mxu0 0
      %862 = vmatpush1.bf16.msra.mxu0 0
      %863 = vmatprep.subr.bf16.mxu0 0
      %864 = vmatpush1.bf16.msra.mxu0 0
      %865 = vmatprep.subr.bf16.mxu0 0
      %866 = vmatpush1.bf16.msra.mxu0 0
      %867 = vmatprep.subr.bf16.mxu0 0
      %868 = vmatpush1.bf16.msra.mxu0 0
      %869 = vmatprep.subr.bf16.mxu0 0
      %870 = vmatpush1.bf16.msra.mxu0 %v853
      %871 = vmatprep.subr.bf16.mxu0 0
      %872 = vmatpush2.bf16.msra.mxu0 0
      %873 = vmatprep.subr.bf16.mxu0 0
      %874 = vmatpush2.bf16.msra.mxu0 0
      %875 = vmatprep.subr.bf16.mxu0 0
      %876 = vmatpush2.bf16.msra.mxu0 0
      %877 = vmatprep.subr.bf16.mxu0 0
      %878 = vmatpush2.bf16.msra.mxu0 0
      %879 = vmatprep.subr.bf16.mxu0 0
      %880 = vmatpush2.bf16.msra.mxu0 0
      %881 = vmatprep.subr.bf16.mxu0 0
      %882 = vmatpush2.bf16.msra.mxu0 0
      %883 = vmatprep.subr.bf16.mxu0 0
      %884 = vmatpush2.bf16.msra.mxu0 0
      %885 = vmatprep.subr.bf16.mxu0 0
      %886 = vmatpush2.bf16.msra.mxu0 0
      %887 = vmatprep.mubr.bf16.mxu0 0
      %888 = vmatmul.mubr.bf16.gmra.mxu0 %v850
      %v889 = vpop.f32.mrf.mxu0
      %v890 = vadd.f32 0.0, %v889
      %v891 = vpop.f32.mrf.mxu0
      %v892 = vpop.f32.mrf.mxu0
      %v893 = vpop.f32.mrf.mxu0
      %894 = vdwg.mxu0
      %v895 = vpack.c.bf16 %v890, %v890
      %v896 = vld [vmem:[%s6 + $0x10] sm:$0xf]
      %v897 = vld [vmem:[%s6 + $0x14] sm:$0xf]
      %v898 = vld [vmem:[%s6 + $0x18] sm:$0xf]
      %v899 = vld [vmem:[%s6 + $0x1c] sm:$0xf]
      %v904 = vunpack.c.l.b16 %v896
      %v905 = vunpack.c.l.b16 %v897
      %v906 = vunpack.c.l.b16 %v898
      %v907 = vunpack.c.l.b16 %v899
      %v908 = vpack.c.b16 %v905, %v904
      %v909 = vpack.c.b16 %v907, %v906
      %v913 = vsel %vm609, %v895, 0
      %915 = vmatprep.subr.bf16.mxu0 0
      %916 = vmatpush1.bf16.msra.mxu0 0
      %917 = vmatprep.subr.bf16.mxu0 0
      %918 = vmatpush1.bf16.msra.mxu0 0
      %919 = vmatprep.subr.bf16.mxu0 0
      %920 = vmatpush1.bf16.msra.mxu0 0
      %921 = vmatprep.subr.bf16.mxu0 0
      %922 = vmatpush1.bf16.msra.mxu0 0
      %923 = vmatprep.subr.bf16.mxu0 0
      %924 = vmatpush1.bf16.msra.mxu0 0
      %925 = vmatprep.subr.bf16.mxu0 0
      %926 = vmatpush1.bf16.msra.mxu0 0
      %927 = vmatprep.subr.bf16.mxu0 0
      %928 = vmatpush1.bf16.msra.mxu0 %v909
      %929 = vmatprep.subr.bf16.mxu0 0
      %930 = vmatpush1.bf16.msra.mxu0 %v908
      %931 = vmatprep.subr.bf16.mxu0 0
      %932 = vmatpush2.bf16.msra.mxu0 0
      %933 = vmatprep.subr.bf16.mxu0 0
      %934 = vmatpush2.bf16.msra.mxu0 0
      %935 = vmatprep.subr.bf16.mxu0 0
      %936 = vmatpush2.bf16.msra.mxu0 0
      %937 = vmatprep.subr.bf16.mxu0 0
      %938 = vmatpush2.bf16.msra.mxu0 0
      %939 = vmatprep.subr.bf16.mxu0 0
      %940 = vmatpush2.bf16.msra.mxu0 0
      %941 = vmatprep.subr.bf16.mxu0 0
      %942 = vmatpush2.bf16.msra.mxu0 0
      %943 = vmatprep.subr.bf16.mxu0 0
      %944 = vmatpush2.bf16.msra.mxu0 0
      %945 = vmatprep.subr.bf16.mxu0 0
      %946 = vmatpush2.bf16.msra.mxu0 0
      %947 = vmatprep.mubr.bf16.mxu0 0
      %948 = vmatmul.mubr.bf16.gmra.mxu0 %v913
      %v949 = vpop.f32.mrf.mxu0
      %v950 = vadd.f32 0.0, %v949
      %v951 = vpop.f32.mrf.mxu0
      %v952 = vpop.f32.mrf.mxu0
      %v953 = vpop.f32.mrf.mxu0
      %954 = vdwg.mxu0
      %v959 = vunpack.c.l.b16 %v750
      %v960 = vunpack.c.l.b16 %v751
      %v961 = vunpack.c.l.b16 %v752
      %v962 = vunpack.c.l.b16 %v753
      %v963 = vpack.c.b16 %v960, %v959
      %v964 = vpack.c.b16 %v962, %v961
      %v968 = vsel %vm609, %v749, 0
      %970 = vmatprep.subr.bf16.mxu0 0
      %971 = vmatpush1.bf16.msra.mxu0 0
      %972 = vmatprep.subr.bf16.mxu0 0
      %973 = vmatpush1.bf16.msra.mxu0 0
      %974 = vmatprep.subr.bf16.mxu0 0
      %975 = vmatpush1.bf16.msra.mxu0 0
      %976 = vmatprep.subr.bf16.mxu0 0
      %977 = vmatpush1.bf16.msra.mxu0 0
      %978 = vmatprep.subr.bf16.mxu0 0
      %979 = vmatpush1.bf16.msra.mxu0 0
      %980 = vmatprep.subr.bf16.mxu0 0
      %981 = vmatpush1.bf16.msra.mxu0 0
      %982 = vmatprep.subr.bf16.mxu0 0
      %983 = vmatpush1.bf16.msra.mxu0 %v964
      %984 = vmatprep.subr.bf16.mxu0 0
      %985 = vmatpush1.bf16.msra.mxu0 %v963
      %986 = vmatprep.subr.bf16.mxu0 0
      %987 = vmatpush2.bf16.msra.mxu0 0
      %988 = vmatprep.subr.bf16.mxu0 0
      %989 = vmatpush2.bf16.msra.mxu0 0
      %990 = vmatprep.subr.bf16.mxu0 0
      %991 = vmatpush2.bf16.msra.mxu0 0
      %992 = vmatprep.subr.bf16.mxu0 0
      %993 = vmatpush2.bf16.msra.mxu0 0
      %994 = vmatprep.subr.bf16.mxu0 0
      %995 = vmatpush2.bf16.msra.mxu0 0
      %996 = vmatprep.subr.bf16.mxu0 0
      %997 = vmatpush2.bf16.msra.mxu0 0
      %998 = vmatprep.subr.bf16.mxu0 0
      %999 = vmatpush2.bf16.msra.mxu0 0
      %1000 = vmatprep.subr.bf16.mxu0 0
      %1001 = vmatpush2.bf16.msra.mxu0 0
      %1002 = vmatprep.mubr.bf16.mxu0 0
      %1003 = vmatmul.mubr.bf16.gmra.mxu0 %v968
      %v1004 = vpop.f32.mrf.mxu0
      %v1005 = vadd.f32 %v950, %v1004
      %v1006 = vpop.f32.mrf.mxu0
      %v1007 = vpop.f32.mrf.mxu0
      %v1008 = vpop.f32.mrf.mxu0
      %1009 = vdwg.mxu0
      %1010 = vrot.lane.b32.xlu0 %v562, 64
      %v1011 = vpop.permute.xlu0 %1010
      %1012 = vrot.lane.b32.xlu0 %v564, 64
      %v1013 = vpop.permute.xlu0 %1012
      %v1014 = vsel %vm609, %v1011, 0
      %v1016 = vsel %vm609, %v1013, 0
      %1018 = vmatprep.subr.mxu0 0.0
      %1019 = vmatpush1.xpose.msra.mxu0 0.0
      %1020 = vmatprep.subr.mxu0 0.0
      %1021 = vmatpush1.xpose.msra.mxu0 0.0
      %1022 = vmatprep.subr.mxu0 0.0
      %1023 = vmatpush1.xpose.msra.mxu0 0.0
      %1024 = vmatprep.subr.mxu0 0.0
      %1025 = vmatpush1.xpose.msra.mxu0 0.0
      %1026 = vmatprep.subr.mxu0 0.0
      %1027 = vmatpush1.xpose.msra.mxu0 0.0
      %1028 = vmatprep.subr.mxu0 0.0
      %1029 = vmatpush1.xpose.msra.mxu0 0.0
      %1030 = vmatprep.subr.mxu0 0.0
      %1031 = vmatpush1.xpose.msra.mxu0 0.0
      %1032 = vmatprep.subr.mxu0 0.0
      %1033 = vmatpush1.xpose.msra.mxu0 0.0
      %1034 = vmatprep.subr.mxu0 0.0
      %1035 = vmatpush1.xpose.msra.mxu0 0.0
      %1036 = vmatprep.subr.mxu0 0.0
      %1037 = vmatpush1.xpose.msra.mxu0 0.0
      %1038 = vmatprep.subr.mxu0 0.0
      %1039 = vmatpush1.xpose.msra.mxu0 0.0
      %1040 = vmatprep.subr.mxu0 0.0
      %1041 = vmatpush1.xpose.msra.mxu0 0.0
      %1042 = vmatprep.subr.mxu0 0.0
      %1043 = vmatpush1.xpose.msra.mxu0 0.0
      %1044 = vmatprep.subr.mxu0 0.0
      %1045 = vmatpush1.xpose.msra.mxu0 0.0
      %1046 = vmatprep.subr.mxu0 0.0
      %1047 = vmatpush1.xpose.msra.mxu0 0.0
      %1048 = vmatprep.subr.mxu0 0.0
      %1049 = vmatpush1.xpose.msra.mxu0 %v1016
      %1050 = vmatprep.subr.mxu0 0.0
      %1051 = vmatpush2.xpose.msra.mxu0 0.0
      %1052 = vmatprep.subr.mxu0 0.0
      %1053 = vmatpush2.xpose.msra.mxu0 0.0
      %1054 = vmatprep.subr.mxu0 0.0
      %1055 = vmatpush2.xpose.msra.mxu0 0.0
      %1056 = vmatprep.subr.mxu0 0.0
      %1057 = vmatpush2.xpose.msra.mxu0 0.0
      %1058 = vmatprep.subr.mxu0 0.0
      %1059 = vmatpush2.xpose.msra.mxu0 0.0
      %1060 = vmatprep.subr.mxu0 0.0
      %1061 = vmatpush2.xpose.msra.mxu0 0.0
      %1062 = vmatprep.subr.mxu0 0.0
      %1063 = vmatpush2.xpose.msra.mxu0 0.0
      %1064 = vmatprep.subr.mxu0 0.0
      %1065 = vmatpush2.xpose.msra.mxu0 0.0
      %1066 = vmatprep.subr.mxu0 0.0
      %1067 = vmatpush2.xpose.msra.mxu0 0.0
      %1068 = vmatprep.subr.mxu0 0.0
      %1069 = vmatpush2.xpose.msra.mxu0 0.0
      %1070 = vmatprep.subr.mxu0 0.0
      %1071 = vmatpush2.xpose.msra.mxu0 0.0
      %1072 = vmatprep.subr.mxu0 0.0
      %1073 = vmatpush2.xpose.msra.mxu0 0.0
      %1074 = vmatprep.subr.mxu0 0.0
      %1075 = vmatpush2.xpose.msra.mxu0 0.0
      %1076 = vmatprep.subr.mxu0 0.0
      %1077 = vmatpush2.xpose.msra.mxu0 0.0
      %1078 = vmatprep.subr.mxu0 0.0
      %1079 = vmatpush2.xpose.msra.mxu0 0.0
      %1080 = vmatprep.subr.mxu0 0.0
      %1081 = vmatpush2.xpose.msra.mxu0 0.0
      %1082 = vmatprep.mubr.f32.mxu0 0.0
      %1083 = vmatmul.mubr.f32.gmra.mxu0 %v1014
      %v1084 = vpop.f32.mrf.mxu0
      %v1085 = vadd.f32 0.0, %v1084
      %v1086 = vpop.f32.mrf.mxu0
      %1087 = vdwg.mxu0
      %v1088 = vmul.f32 %v1085, 0.17677669
      %v1089 = vadd.f32 %v1088, %v608
      %v1090 = vsel %vm688, %v1089, -inf
      %1091 = vmax.xlane.f32.xlu0 %v1090
      %v1092 = vpop.xlane.xlu0 %1091
      %v1093 = vsub.f32 %v1089, %v1092
      %v1094 = vmul.f32 %v1093, 1.442695
      %v1095 = vpow.pop %v1094
      %v1096 = vsel %vm688, %v1095, 0.0
      %1097 = vadd.xlane.f32.xlu0 %v1096
      %v1098 = vpop.xlane.xlu0 %1097
      %v1099 = vrcp.pop %v1098
      %v1100 = vmul.f32 %v1095, %v1099
      %v1101 = vpack.c.bf16 %v1100, %v1100
      %1102 = vrot.lane.b32.xlu0 %v701, 64
      %v1103 = vpop.permute.xlu0 %1102
      %v1105 = vsel %vm688, %v1101, 0
      %v1108 = vsel %vm705, %v1103, 0
      %1110 = vmatprep.subr.bf16.mxu0 0
      %1111 = vmatpush1.bf16.msra.mxu0 0
      %1112 = vmatprep.subr.bf16.mxu0 0
      %1113 = vmatpush1.bf16.msra.mxu0 0
      %1114 = vmatprep.subr.bf16.mxu0 0
      %1115 = vmatpush1.bf16.msra.mxu0 0
      %1116 = vmatprep.subr.bf16.mxu0 0
      %1117 = vmatpush1.bf16.msra.mxu0 0
      %1118 = vmatprep.subr.bf16.mxu0 0
      %1119 = vmatpush1.bf16.msra.mxu0 0
      %1120 = vmatprep.subr.bf16.mxu0 0
      %1121 = vmatpush1.bf16.msra.mxu0 0
      %1122 = vmatprep.subr.bf16.mxu0 0
      %1123 = vmatpush1.bf16.msra.mxu0 0
      %1124 = vmatprep.subr.bf16.mxu0 0
      %1125 = vmatpush1.bf16.msra.mxu0 %v1108
      %1126 = vmatprep.subr.bf16.mxu0 0
      %1127 = vmatpush2.bf16.msra.mxu0 0
      %1128 = vmatprep.subr.bf16.mxu0 0
      %1129 = vmatpush2.bf16.msra.mxu0 0
      %1130 = vmatprep.subr.bf16.mxu0 0
      %1131 = vmatpush2.bf16.msra.mxu0 0
      %1132 = vmatprep.subr.bf16.mxu0 0
      %1133 = vmatpush2.bf16.msra.mxu0 0
      %1134 = vmatprep.subr.bf16.mxu0 0
      %1135 = vmatpush2.bf16.msra.mxu0 0
      %1136 = vmatprep.subr.bf16.mxu0 0
      %1137 = vmatpush2.bf16.msra.mxu0 0
      %1138 = vmatprep.subr.bf16.mxu0 0
      %1139 = vmatpush2.bf16.msra.mxu0 0
      %1140 = vmatprep.subr.bf16.mxu0 0
      %1141 = vmatpush2.bf16.msra.mxu0 0
      %1142 = vmatprep.mubr.bf16.mxu0 0
      %1143 = vmatmul.mubr.bf16.gmra.mxu0 %v1105
      %v1144 = vpop.f32.mrf.mxu0
      %v1145 = vadd.f32 0.0, %v1144
      %v1146 = vpop.f32.mrf.mxu0
      %v1147 = vpop.f32.mrf.mxu0
      %v1148 = vpop.f32.mrf.mxu0
      %1149 = vdwg.mxu0
      %v1150 = vpack.c.bf16 %v1145, %v1145
      %v1151 = vld [vmem:[%s6 + $0x20] sm:$0xf]
      %v1152 = vld [vmem:[%s6 + $0x24] sm:$0xf]
      %v1153 = vld [vmem:[%s6 + $0x28] sm:$0xf]
      %v1154 = vld [vmem:[%s6 + $0x2c] sm:$0xf]
      %v1159 = vunpack.c.l.b16 %v1151
      %v1160 = vunpack.c.l.b16 %v1152
      %v1161 = vunpack.c.l.b16 %v1153
      %v1162 = vunpack.c.l.b16 %v1154
      %v1163 = vpack.c.b16 %v1160, %v1159
      %v1164 = vpack.c.b16 %v1162, %v1161
      %v1168 = vsel %vm609, %v1150, 0
      %1170 = vmatprep.subr.bf16.mxu0 0
      %1171 = vmatpush1.bf16.msra.mxu0 0
      %1172 = vmatprep.subr.bf16.mxu0 0
      %1173 = vmatpush1.bf16.msra.mxu0 0
      %1174 = vmatprep.subr.bf16.mxu0 0
      %1175 = vmatpush1.bf16.msra.mxu0 0
      %1176 = vmatprep.subr.bf16.mxu0 0
      %1177 = vmatpush1.bf16.msra.mxu0 0
      %1178 = vmatprep.subr.bf16.mxu0 0
      %1179 = vmatpush1.bf16.msra.mxu0 0
      %1180 = vmatprep.subr.bf16.mxu0 0
      %1181 = vmatpush1.bf16.msra.mxu0 0
      %1182 = vmatprep.subr.bf16.mxu0 0
      %1183 = vmatpush1.bf16.msra.mxu0 %v1164
      %1184 = vmatprep.subr.bf16.mxu0 0
      %1185 = vmatpush1.bf16.msra.mxu0 %v1163
      %1186 = vmatprep.subr.bf16.mxu0 0
      %1187 = vmatpush2.bf16.msra.mxu0 0
      %1188 = vmatprep.subr.bf16.mxu0 0
      %1189 = vmatpush2.bf16.msra.mxu0 0
      %1190 = vmatprep.subr.bf16.mxu0 0
      %1191 = vmatpush2.bf16.msra.mxu0 0
      %1192 = vmatprep.subr.bf16.mxu0 0
      %1193 = vmatpush2.bf16.msra.mxu0 0
      %1194 = vmatprep.subr.bf16.mxu0 0
      %1195 = vmatpush2.bf16.msra.mxu0 0
      %1196 = vmatprep.subr.bf16.mxu0 0
      %1197 = vmatpush2.bf16.msra.mxu0 0
      %1198 = vmatprep.subr.bf16.mxu0 0
      %1199 = vmatpush2.bf16.msra.mxu0 0
      %1200 = vmatprep.subr.bf16.mxu0 0
      %1201 = vmatpush2.bf16.msra.mxu0 0
      %1202 = vmatprep.mubr.bf16.mxu0 0
      %1203 = vmatmul.mubr.bf16.gmra.mxu0 %v1168
      %v1204 = vpop.f32.mrf.mxu0
      %v1205 = vadd.f32 0.0, %v1204
      %v1206 = vpop.f32.mrf.mxu0
      %v1207 = vpop.f32.mrf.mxu0
      %v1208 = vpop.f32.mrf.mxu0
      %1209 = vdwg.mxu0
      %v1210 = vadd.f32 %v1005, %v1205
      %1211 = vrot.lane.b32.xlu0 %v562, 32
      %v1212 = vpop.permute.xlu0 %1211
      %1213 = vrot.lane.b32.xlu0 %v564, 32
      %v1214 = vpop.permute.xlu0 %1213
      %v1215 = vsel %vm609, %v1212, 0
      %v1217 = vsel %vm609, %v1214, 0
      %1219 = vmatprep.subr.mxu0 0.0
      %1220 = vmatpush1.xpose.msra.mxu0 0.0
      %1221 = vmatprep.subr.mxu0 0.0
      %1222 = vmatpush1.xpose.msra.mxu0 0.0
      %1223 = vmatprep.subr.mxu0 0.0
      %1224 = vmatpush1.xpose.msra.mxu0 0.0
      %1225 = vmatprep.subr.mxu0 0.0
      %1226 = vmatpush1.xpose.msra.mxu0 0.0
      %1227 = vmatprep.subr.mxu0 0.0
      %1228 = vmatpush1.xpose.msra.mxu0 0.0
      %1229 = vmatprep.subr.mxu0 0.0
      %1230 = vmatpush1.xpose.msra.mxu0 0.0
      %1231 = vmatprep.subr.mxu0 0.0
      %1232 = vmatpush1.xpose.msra.mxu0 0.0
      %1233 = vmatprep.subr.mxu0 0.0
      %1234 = vmatpush1.xpose.msra.mxu0 0.0
      %1235 = vmatprep.subr.mxu0 0.0
      %1236 = vmatpush1.xpose.msra.mxu0 0.0
      %1237 = vmatprep.subr.mxu0 0.0
      %1238 = vmatpush1.xpose.msra.mxu0 0.0
      %1239 = vmatprep.subr.mxu0 0.0
      %1240 = vmatpush1.xpose.msra.mxu0 0.0
      %1241 = vmatprep.subr.mxu0 0.0
      %1242 = vmatpush1.xpose.msra.mxu0 0.0
      %1243 = vmatprep.subr.mxu0 0.0
      %1244 = vmatpush1.xpose.msra.mxu0 0.0
      %1245 = vmatprep.subr.mxu0 0.0
      %1246 = vmatpush1.xpose.msra.mxu0 0.0
      %1247 = vmatprep.subr.mxu0 0.0
      %1248 = vmatpush1.xpose.msra.mxu0 0.0
      %1249 = vmatprep.subr.mxu0 0.0
      %1250 = vmatpush1.xpose.msra.mxu0 %v1217
      %1251 = vmatprep.subr.mxu0 0.0
      %1252 = vmatpush2.xpose.msra.mxu0 0.0
      %1253 = vmatprep.subr.mxu0 0.0
      %1254 = vmatpush2.xpose.msra.mxu0 0.0
      %1255 = vmatprep.subr.mxu0 0.0
      %1256 = vmatpush2.xpose.msra.mxu0 0.0
      %1257 = vmatprep.subr.mxu0 0.0
      %1258 = vmatpush2.xpose.msra.mxu0 0.0
      %1259 = vmatprep.subr.mxu0 0.0
      %1260 = vmatpush2.xpose.msra.mxu0 0.0
      %1261 = vmatprep.subr.mxu0 0.0
      %1262 = vmatpush2.xpose.msra.mxu0 0.0
      %1263 = vmatprep.subr.mxu0 0.0
      %1264 = vmatpush2.xpose.msra.mxu0 0.0
      %1265 = vmatprep.subr.mxu0 0.0
      %1266 = vmatpush2.xpose.msra.mxu0 0.0
      %1267 = vmatprep.subr.mxu0 0.0
      %1268 = vmatpush2.xpose.msra.mxu0 0.0
      %1269 = vmatprep.subr.mxu0 0.0
      %1270 = vmatpush2.xpose.msra.mxu0 0.0
      %1271 = vmatprep.subr.mxu0 0.0
      %1272 = vmatpush2.xpose.msra.mxu0 0.0
      %1273 = vmatprep.subr.mxu0 0.0
      %1274 = vmatpush2.xpose.msra.mxu0 0.0
      %1275 = vmatprep.subr.mxu0 0.0
      %1276 = vmatpush2.xpose.msra.mxu0 0.0
      %1277 = vmatprep.subr.mxu0 0.0
      %1278 = vmatpush2.xpose.msra.mxu0 0.0
      %1279 = vmatprep.subr.mxu0 0.0
      %1280 = vmatpush2.xpose.msra.mxu0 0.0
      %1281 = vmatprep.subr.mxu0 0.0
      %1282 = vmatpush2.xpose.msra.mxu0 0.0
      %1283 = vmatprep.mubr.f32.mxu0 0.0
      %1284 = vmatmul.mubr.f32.gmra.mxu0 %v1215
      %v1285 = vpop.f32.mrf.mxu0
      %v1286 = vadd.f32 0.0, %v1285
      %v1287 = vpop.f32.mrf.mxu0
      %1288 = vdwg.mxu0
      %v1289 = vmul.f32 %v1286, 0.17677669
      %v1290 = vadd.f32 %v1289, %v608
      %v1291 = vsel %vm688, %v1290, -inf
      %1292 = vmax.xlane.f32.xlu0 %v1291
      %v1293 = vpop.xlane.xlu0 %1292
      %v1294 = vsub.f32 %v1290, %v1293
      %v1295 = vmul.f32 %v1294, 1.442695
      %v1296 = vpow.pop %v1295
      %v1297 = vsel %vm688, %v1296, 0.0
      %1298 = vadd.xlane.f32.xlu0 %v1297
      %v1299 = vpop.xlane.xlu0 %1298
      %v1300 = vrcp.pop %v1299
      %v1301 = vmul.f32 %v1296, %v1300
      %v1302 = vpack.c.bf16 %v1301, %v1301
      %1303 = vrot.lane.b32.xlu0 %v701, 32
      %v1304 = vpop.permute.xlu0 %1303
      %v1306 = vsel %vm688, %v1302, 0
      %v1309 = vsel %vm705, %v1304, 0
      %1311 = vmatprep.subr.bf16.mxu0 0
      %1312 = vmatpush1.bf16.msra.mxu0 0
      %1313 = vmatprep.subr.bf16.mxu0 0
      %1314 = vmatpush1.bf16.msra.mxu0 0
      %1315 = vmatprep.subr.bf16.mxu0 0
      %1316 = vmatpush1.bf16.msra.mxu0 0
      %1317 = vmatprep.subr.bf16.mxu0 0
      %1318 = vmatpush1.bf16.msra.mxu0 0
      %1319 = vmatprep.subr.bf16.mxu0 0
      %1320 = vmatpush1.bf16.msra.mxu0 0
      %1321 = vmatprep.subr.bf16.mxu0 0
      %1322 = vmatpush1.bf16.msra.mxu0 0
      %1323 = vmatprep.subr.bf16.mxu0 0
      %1324 = vmatpush1.bf16.msra.mxu0 0
      %1325 = vmatprep.subr.bf16.mxu0 0
      %1326 = vmatpush1.bf16.msra.mxu0 %v1309
      %1327 = vmatprep.subr.bf16.mxu0 0
      %1328 = vmatpush2.bf16.msra.mxu0 0
      %1329 = vmatprep.subr.bf16.mxu0 0
      %1330 = vmatpush2.bf16.msra.mxu0 0
      %1331 = vmatprep.subr.bf16.mxu0 0
      %1332 = vmatpush2.bf16.msra.mxu0 0
      %1333 = vmatprep.subr.bf16.mxu0 0
      %1334 = vmatpush2.bf16.msra.mxu0 0
      %1335 = vmatprep.subr.bf16.mxu0 0
      %1336 = vmatpush2.bf16.msra.mxu0 0
      %1337 = vmatprep.subr.bf16.mxu0 0
      %1338 = vmatpush2.bf16.msra.mxu0 0
      %1339 = vmatprep.subr.bf16.mxu0 0
      %1340 = vmatpush2.bf16.msra.mxu0 0
      %1341 = vmatprep.subr.bf16.mxu0 0
      %1342 = vmatpush2.bf16.msra.mxu0 0
      %1343 = vmatprep.mubr.bf16.mxu0 0
      %1344 = vmatmul.mubr.bf16.gmra.mxu0 %v1306
      %v1345 = vpop.f32.mrf.mxu0
      %v1346 = vadd.f32 0.0, %v1345
      %v1347 = vpop.f32.mrf.mxu0
      %v1348 = vpop.f32.mrf.mxu0
      %v1349 = vpop.f32.mrf.mxu0
      %1350 = vdwg.mxu0
      %v1351 = vpack.c.bf16 %v1346, %v1346
      %v1352 = vld [vmem:[%s6 + $0x30] sm:$0xf]
      %v1353 = vld [vmem:[%s6 + $0x34] sm:$0xf]
      %v1354 = vld [vmem:[%s6 + $0x38] sm:$0xf]
      %v1355 = vld [vmem:[%s6 + $0x3c] sm:$0xf]
      %v1360 = vunpack.c.l.b16 %v1352
      %v1361 = vunpack.c.l.b16 %v1353
      %v1362 = vunpack.c.l.b16 %v1354
      %v1363 = vunpack.c.l.b16 %v1355
      %v1364 = vpack.c.b16 %v1361, %v1360
      %v1365 = vpack.c.b16 %v1363, %v1362
      %v1369 = vsel %vm609, %v1351, 0
      %1371 = vmatprep.subr.bf16.mxu0 0
      %1372 = vmatpush1.bf16.msra.mxu0 0
      %1373 = vmatprep.subr.bf16.mxu0 0
      %1374 = vmatpush1.bf16.msra.mxu0 0
      %1375 = vmatprep.subr.bf16.mxu0 0
      %1376 = vmatpush1.bf16.msra.mxu0 0
      %1377 = vmatprep.subr.bf16.mxu0 0
      %1378 = vmatpush1.bf16.msra.mxu0 0
      %1379 = vmatprep.subr.bf16.mxu0 0
      %1380 = vmatpush1.bf16.msra.mxu0 0
      %1381 = vmatprep.subr.bf16.mxu0 0
      %1382 = vmatpush1.bf16.msra.mxu0 0
      %1383 = vmatprep.subr.bf16.mxu0 0
      %1384 = vmatpush1.bf16.msra.mxu0 %v1365
      %1385 = vmatprep.subr.bf16.mxu0 0
      %1386 = vmatpush1.bf16.msra.mxu0 %v1364
      %1387 = vmatprep.subr.bf16.mxu0 0
      %1388 = vmatpush2.bf16.msra.mxu0 0
      %1389 = vmatprep.subr.bf16.mxu0 0
      %1390 = vmatpush2.bf16.msra.mxu0 0
      %1391 = vmatprep.subr.bf16.mxu0 0
      %1392 = vmatpush2.bf16.msra.mxu0 0
      %1393 = vmatprep.subr.bf16.mxu0 0
      %1394 = vmatpush2.bf16.msra.mxu0 0
      %1395 = vmatprep.subr.bf16.mxu0 0
      %1396 = vmatpush2.bf16.msra.mxu0 0
      %1397 = vmatprep.subr.bf16.mxu0 0
      %1398 = vmatpush2.bf16.msra.mxu0 0
      %1399 = vmatprep.subr.bf16.mxu0 0
      %1400 = vmatpush2.bf16.msra.mxu0 0
      %1401 = vmatprep.subr.bf16.mxu0 0
      %1402 = vmatpush2.bf16.msra.mxu0 0
      %1403 = vmatprep.mubr.bf16.mxu0 0
      %1404 = vmatmul.mubr.bf16.gmra.mxu0 %v1369
      %v1405 = vpop.f32.mrf.mxu0
      %v1406 = vadd.f32 0.0, %v1405
      %v1407 = vpop.f32.mrf.mxu0
      %v1408 = vpop.f32.mrf.mxu0
      %v1409 = vpop.f32.mrf.mxu0
      %1410 = vdwg.mxu0
      %v1411 = vadd.f32 %v1210, %v1406
      %v1412 = vadd.f32 %v320, %v1411
      %v1413 = vld [vmem:[%s7] sm:$0x1]
      %v1415 = vlaneseq
      %v1416 = vshrl.u32 %v1415, 7
      %v1417 = vsub.s32 0, %v1416
      %v1418 = vrot.slane %v1413, %v1417
      %v1420 = vadd.f32 %v1412, %v1418
      %v1421 = vpack.c.bf16 %v1420, %v1420
      %1422 = vst [vmem:[%s317] sm:$0xf] %v1421
      %p1423 = scmp.lt.s32.totalorder %s19, 1
      %s1424 = scalar_select %p1423, %s19, 1
      %s1425 = smul.addr %s1424, 4
      %s1426 = scalar_lea.vmem %s8, %s1425
      // Predicated region
      $region53: #{gpt_actor_forward.7} parent=51 // pred_check
        %p1427 = pneg %p215
      $region54: #{gpt_actor_forward.7} parent=51 // pred_check_branch
        %1429 = sbr.rel (%p1427) target = $region56
      $region55: #{gpt_actor_forward.7} parent=51 // pred_region
        _
      $region56: #{gpt_actor_forward.7} parent=51 // pred_fallthru
        _
    $region52: #{gpt_actor_forward.7} parent=5 // pred_fallthru
      _
    %p1430 = scmp.le.s32.totalorder 2, %s14
    // Predicated region
    $region57: #{gpt_actor_forward.7} parent=5 // pred_check
      %p1431 = pneg %p1430
    $region58: #{gpt_actor_forward.7} parent=5 // pred_check_branch
      %1433 = sbr.rel (%p1431) target = $region60
    $region59: #{gpt_actor_forward.7} parent=5 // pred_region
      %s1434 = ssub.s32 %s14, 2
      // Predicated region
      $region61: #{gpt_actor_forward.7} parent=59 // pred_check
        %p1435 = pneg %p221
      $region62: #{gpt_actor_forward.7} parent=59 // pred_check_branch
        %1437 = sbr.rel (%p1435) target = $region64
      $region63: #{gpt_actor_forward.7} parent=59 // pred_region
        %p1438 = scmp.lt.s32.totalorder %s20, 1
        %s1439 = scalar_select %p1438, %s20, 1
        %s1440 = smul.addr %s1439, 4
        %s1441 = scalar_lea.vmem %s8, %s1440
      $region64: #{gpt_actor_forward.7} parent=59 // pred_fallthru
        _
    $region60: #{gpt_actor_forward.7} parent=5 // pred_fallthru
      _
  $region6: #{gpt_actor_forward.7} parent=0 // loop_footer
    %s18 = sadd.s32 1, %s14
  $region7: #{gpt_actor_forward.7} parent=0 // loop_footer_branch
    %13 = sbr.rel target = $region3
  $region8: #{gpt_actor_forward.7} parent=0 // loop_exit
    _

// kernel: gpt_actor_forward.5
$region0: #{gpt_actor_forward.5}
  #allocation0 [shape = 'u32[]', space=smem, size = 0x4, offset = 0x4, fixed_abs, tag = 'smem constant byte address 0x4 - core index']
  #allocation1 [shape = 'u32[144,128]{1,0:T(1,128)}', space=vmem, size = 0x12000, scoped, tag = 'internal scratch']
  %s0 = inlined_call_operand.vmem [shape: bf16[2,8,128], index: 0, kind: input, shape index: {}]
  %s1 = inlined_call_operand.vmem [shape: f32[2,8,8], index: 1, kind: input, shape index: {}]
  %s2 = inlined_call_operand.vmem [shape: f32[1,128], index: 2, kind: input, shape index: {}]
  %s3 = inlined_call_operand.vmem [shape: f32[1,128], index: 3, kind: input, shape index: {}]
  %s4 = inlined_call_operand.hbm [shape: bf16[128,384], index: 4, kind: input, shape index: {}]
  %s5 = inlined_call_operand.vmem [shape: f32[1,384], index: 5, kind: input, shape index: {}]
  %s6 = inlined_call_operand.hbm [shape: bf16[128,128], index: 6, kind: input, shape index: {}]
  %s7 = inlined_call_operand.vmem [shape: f32[1,128], index: 7, kind: input, shape index: {}]
  %s8 = inlined_call_operand.vmem [shape: bf16[2,8,128], index: 8, kind: output, shape index: {}]
  %s9 = sld [smem:[#allocation0]]
  $region73: #{gpt_actor_forward.5} parent=0
    _
  %s11 = ssub.s32 1, %s9
  %s12 = scalar_select 0, %s11, %s9
  $region1: #{gpt_actor_forward.5} parent=0
    #allocation2 [shape = 'u8[98304]{0}', space=vmem, size = 0x18000, scoped, tag = 'input window, operand 4, single buffered']
    #allocation3 [shape = 's32[2]{0}', space=sflag, size = 0x8, scoped, tag = 'scoped memory for gpt_actor_forward.5']
    #allocation4 [shape = 'u8[32768]{0}', space=vmem, size = 0x8000, scoped, tag = 'input window, operand 6, single buffered']
    #allocation5 [shape = 's32[1]{0}', space=sflag, size = 0x4, scoped, tag = 'scoped memory for gpt_actor_forward.5']
    %13 = vsyncpa [#allocation3], 0
    %14 = vsyncpa [#allocation5], 0
    loop: start=0, step=1, limit=4
    $region2: #{gpt_actor_forward.5} parent=1 // loop_pre_header
      _
    $region3: #{gpt_actor_forward.5} parent=1 // loop_header
      %s16 = sphi 0, %s20
      %p17 = scmp.ge.s32.totalorder %s16, 4
      %s26 = sphi 0, %s28
      %s29 = sphi 0, %s26
      %s30 = sphi 0, %s29
      %s46 = sphi 0, %s30
      %s52 = sphi 0, %s54
      %s55 = sphi 0, %s52
      %s56 = sphi 0, %s55
      %s72 = sphi 0, %s56
      %s76 = sphi 0, %s76
      %s78 = sphi 0, %s76
      %s79 = sphi 0, %s78
      %s93 = sphi 0, %s79
      %s97 = sphi 0, %s97
      %s99 = sphi 0, %s97
      %s100 = sphi 0, %s99
      %s114 = sphi 0, %s100
      %s118 = sphi 0, %s118
      %s120 = sphi 0, %s118
      %s121 = sphi 0, %s120
      %s135 = sphi 0, %s121
      %s139 = sphi 0, %s139
      %s141 = sphi 0, %s139
      %s142 = sphi 0, %s141
      %s156 = sphi 0, %s142
      %s160 = sphi 0, %s160
      %s162 = sphi 0, %s160
      %s163 = sphi 0, %s162
      %s177 = sphi 0, %s163
      %s181 = sphi 0, %s181
      %s183 = sphi 0, %s181
      %s184 = sphi 0, %s183
      %s198 = sphi 0, %s184
      %s204 = sphi 0, %s206
      %s207 = sphi 0, %s204
      %s208 = sphi 0, %s207
      %s224 = sphi 0, %s208
    $region4: #{gpt_actor_forward.5} parent=1 // loop_header_branch
      %19 = sbr.rel (%p17) target = $region8
    $region5: #{gpt_actor_forward.5} parent=1 // loop_body
      %s21 = ssub.s32 %s16, 1
      %s22 = ssub.s32 %s16, 2
      %s23 = sadd.s32 %s16, 1
      %s24 = ssub.s32 %s16, %s23
      %p25 = scmp.eq.s32.totalorder %s24, 0
      %s27 = sadd.s32 %s26, 1
      %s28 = scalar_select %p25, %s26, %s27
      %p31 = pneg %p25
      %p32 = scmp.eq.s32.totalorder %s16, 1
      %p33 = por %p31, %p32
      %p34 = scmp.ne.s32.totalorder %s26, %s29
      %p35 = scmp.eq.s32.totalorder %s16, 0
      %p36 = por %p34, %p35
      %p37 = scmp.ne.s32.totalorder %s26, %s29
      %p38 = scmp.eq.s32.totalorder %s21, 1
      %p39 = por %p37, %p38
      %p40 = scmp.ne.s32.totalorder %s29, %s30
      %p41 = scmp.eq.s32.totalorder %s21, 0
      %p42 = por %p40, %p41
      %p43 = scmp.ne.s32.totalorder %s29, %s30
      %p44 = scmp.eq.s32.totalorder %s22, 1
      %p45 = por %p43, %p44
      %p47 = scmp.ne.s32.totalorder %s30, %s46
      %p48 = scmp.eq.s32.totalorder %s22, 0
      %p49 = por %p47, %p48
      %s50 = ssub.s32 %s16, %s23
      %p51 = scmp.eq.s32.totalorder %s50, 0
      %s53 = sadd.s32 %s52, 1
      %s54 = scalar_select %p51, %s52, %s53
      %p57 = pneg %p51
      %p58 = scmp.eq.s32.totalorder %s16, 1
      %p59 = por %p57, %p58
      %p60 = scmp.ne.s32.totalorder %s52, %s55
      %p61 = scmp.eq.s32.totalorder %s16, 0
      %p62 = por %p60, %p61
      %p63 = scmp.ne.s32.totalorder %s52, %s55
      %p64 = scmp.eq.s32.totalorder %s21, 1
      %p65 = por %p63, %p64
      %p66 = scmp.ne.s32.totalorder %s55, %s56
      %p67 = scmp.eq.s32.totalorder %s21, 0
      %p68 = por %p66, %p67
      %p69 = scmp.ne.s32.totalorder %s55, %s56
      %p70 = scmp.eq.s32.totalorder %s22, 1
      %p71 = por %p69, %p70
      %p73 = scmp.ne.s32.totalorder %s56, %s72
      %p74 = scmp.eq.s32.totalorder %s22, 0
      %p75 = por %p73, %p74
      %s77 = sadd.s32 %s76, 1
      %p80 = scmp.eq.s32.totalorder %s16, 1
      %p81 = scmp.ne.s32.totalorder %s76, %s78
      %p82 = scmp.eq.s32.totalorder %s16, 0
      %p83 = por %p81, %p82
      %p84 = scmp.ne.s32.totalorder %s76, %s78
      %p85 = scmp.eq.s32.totalorder %s21, 1
      %p86 = por %p84, %p85
      %p87 = scmp.ne.s32.totalorder %s78, %s79
      %p88 = scmp.eq.s32.totalorder %s21, 0
      %p89 = por %p87, %p88
      %p90 = scmp.ne.s32.totalorder %s78, %s79
      %p91 = scmp.eq.s32.totalorder %s22, 1
      %p92 = por %p90, %p91
      %p94 = scmp.ne.s32.totalorder %s79, %s93
      %p95 = scmp.eq.s32.totalorder %s22, 0
      %p96 = por %p94, %p95
      %s98 = sadd.s32 %s97, 1
      %p101 = scmp.eq.s32.totalorder %s16, 1
      %p102 = scmp.ne.s32.totalorder %s97, %s99
      %p103 = scmp.eq.s32.totalorder %s16, 0
      %p104 = por %p102, %p103
      %p105 = scmp.ne.s32.totalorder %s97, %s99
      %p106 = scmp.eq.s32.totalorder %s21, 1
      %p107 = por %p105, %p106
      %p108 = scmp.ne.s32.totalorder %s99, %s100
      %p109 = scmp.eq.s32.totalorder %s21, 0
      %p110 = por %p108, %p109
      %p111 = scmp.ne.s32.totalorder %s99, %s100
      %p112 = scmp.eq.s32.totalorder %s22, 1
      %p113 = por %p111, %p112
      %p115 = scmp.ne.s32.totalorder %s100, %s114
      %p116 = scmp.eq.s32.totalorder %s22, 0
      %p117 = por %p115, %p116
      %s119 = sadd.s32 %s118, 1
      %p122 = scmp.eq.s32.totalorder %s16, 1
      %p123 = scmp.ne.s32.totalorder %s118, %s120
      %p124 = scmp.eq.s32.totalorder %s16, 0
      %p125 = por %p123, %p124
      %p126 = scmp.ne.s32.totalorder %s118, %s120
      %p127 = scmp.eq.s32.totalorder %s21, 1
      %p128 = por %p126, %p127
      %p129 = scmp.ne.s32.totalorder %s120, %s121
      %p130 = scmp.eq.s32.totalorder %s21, 0
      %p131 = por %p129, %p130
      %p132 = scmp.ne.s32.totalorder %s120, %s121
      %p133 = scmp.eq.s32.totalorder %s22, 1
      %p134 = por %p132, %p133
      %p136 = scmp.ne.s32.totalorder %s121, %s135
      %p137 = scmp.eq.s32.totalorder %s22, 0
      %p138 = por %p136, %p137
      %s140 = sadd.s32 %s139, 1
      %p143 = scmp.eq.s32.totalorder %s16, 1
      %p144 = scmp.ne.s32.totalorder %s139, %s141
      %p145 = scmp.eq.s32.totalorder %s16, 0
      %p146 = por %p144, %p145
      %p147 = scmp.ne.s32.totalorder %s139, %s141
      %p148 = scmp.eq.s32.totalorder %s21, 1
      %p149 = por %p147, %p148
      %p150 = scmp.ne.s32.totalorder %s141, %s142
      %p151 = scmp.eq.s32.totalorder %s21, 0
      %p152 = por %p150, %p151
      %p153 = scmp.ne.s32.totalorder %s141, %s142
      %p154 = scmp.eq.s32.totalorder %s22, 1
      %p155 = por %p153, %p154
      %p157 = scmp.ne.s32.totalorder %s142, %s156
      %p158 = scmp.eq.s32.totalorder %s22, 0
      %p159 = por %p157, %p158
      %s161 = sadd.s32 %s160, 1
      %p164 = scmp.eq.s32.totalorder %s16, 1
      %p165 = scmp.ne.s32.totalorder %s160, %s162
      %p166 = scmp.eq.s32.totalorder %s16, 0
      %p167 = por %p165, %p166
      %p168 = scmp.ne.s32.totalorder %s160, %s162
      %p169 = scmp.eq.s32.totalorder %s21, 1
      %p170 = por %p168, %p169
      %p171 = scmp.ne.s32.totalorder %s162, %s163
      %p172 = scmp.eq.s32.totalorder %s21, 0
      %p173 = por %p171, %p172
      %p174 = scmp.ne.s32.totalorder %s162, %s163
      %p175 = scmp.eq.s32.totalorder %s22, 1
      %p176 = por %p174, %p175
      %p178 = scmp.ne.s32.totalorder %s163, %s177
      %p179 = scmp.eq.s32.totalorder %s22, 0
      %p180 = por %p178, %p179
      %s182 = sadd.s32 %s181, 1
      %p185 = scmp.eq.s32.totalorder %s16, 1
      %p186 = scmp.ne.s32.totalorder %s181, %s183
      %p187 = scmp.eq.s32.totalorder %s16, 0
      %p188 = por %p186, %p187
      %p189 = scmp.ne.s32.totalorder %s181, %s183
      %p190 = scmp.eq.s32.totalorder %s21, 1
      %p191 = por %p189, %p190
      %p192 = scmp.ne.s32.totalorder %s183, %s184
      %p193 = scmp.eq.s32.totalorder %s21, 0
      %p194 = por %p192, %p193
      %p195 = scmp.ne.s32.totalorder %s183, %s184
      %p196 = scmp.eq.s32.totalorder %s22, 1
      %p197 = por %p195, %p196
      %p199 = scmp.ne.s32.totalorder %s184, %s198
      %p200 = scmp.eq.s32.totalorder %s22, 0
      %p201 = por %p199, %p200
      %s202 = ssub.s32 %s16, %s23
      %p203 = scmp.eq.s32.totalorder %s202, 0
      %s205 = sadd.s32 %s204, 1
      %s206 = scalar_select %p203, %s204, %s205
      %p209 = pneg %p203
      %p210 = scmp.eq.s32.totalorder %s16, 1
      %p211 = por %p209, %p210
      %p212 = scmp.ne.s32.totalorder %s204, %s207
      %p213 = scmp.eq.s32.totalorder %s16, 0
      %p214 = por %p212, %p213
      %p215 = scmp.ne.s32.totalorder %s204, %s207
      %p216 = scmp.eq.s32.totalorder %s21, 1
      %p217 = por %p215, %p216
      %p218 = scmp.ne.s32.totalorder %s207, %s208
      %p219 = scmp.eq.s32.totalorder %s21, 0
      %p220 = por %p218, %p219
      %p221 = scmp.ne.s32.totalorder %s207, %s208
      %p222 = scmp.eq.s32.totalorder %s22, 1
      %p223 = por %p221, %p222
      %p225 = scmp.ne.s32.totalorder %s208, %s224
      %p226 = scmp.eq.s32.totalorder %s22, 0
      %p227 = por %p225, %p226
      %p228 = scmp.le.s32.totalorder 1, %s16
      %p229 = scmp.lt.s32.totalorder %s16, 3
      %p230 = pnand %p228, %p229
      %p231 = pneg %p230
      // Predicated region
      $region9: #{gpt_actor_forward.5} parent=5 // pred_check
        _
      $region10: #{gpt_actor_forward.5} parent=5 // pred_check_branch
        %233 = sbr.rel (%p230) target = $region12
      $region11: #{gpt_actor_forward.5} parent=5 // pred_region
        %s234 = ssub.s32 %s16, 1
        // Predicated region
        $region13: #{gpt_actor_forward.5} parent=11 // pred_check
          %p235 = pneg %p89
        $region14: #{gpt_actor_forward.5} parent=11 // pred_check_branch
          %237 = sbr.rel (%p235) target = $region16
        $region15: #{gpt_actor_forward.5} parent=11 // pred_region
          _
        $region16: #{gpt_actor_forward.5} parent=11 // pred_fallthru
          _
        // Predicated region
        $region17: #{gpt_actor_forward.5} parent=11 // pred_check
          %p238 = pneg %p110
        $region18: #{gpt_actor_forward.5} parent=11 // pred_check_branch
          %240 = sbr.rel (%p238) target = $region20
        $region19: #{gpt_actor_forward.5} parent=11 // pred_region
          _
        $region20: #{gpt_actor_forward.5} parent=11 // pred_fallthru
          _
        // Predicated region
        $region21: #{gpt_actor_forward.5} parent=11 // pred_check
          %p241 = pneg %p131
        $region22: #{gpt_actor_forward.5} parent=11 // pred_check_branch
          %243 = sbr.rel (%p241) target = $region24
        $region23: #{gpt_actor_forward.5} parent=11 // pred_region
          %s245 = ssub.s32 3072, 3072
          %246 = vsyncadd [#allocation3], %s245
          %s247 = sshll.u32 [#allocation2], 4
          %s248 = int_to_ptr.vmem [resolvable:$true] %s247
          %253 = dma.hbm_to_vmem [thread:$0]  %s4, 3072, %s248, [#allocation3], 192, 192, 12
        $region24: #{gpt_actor_forward.5} parent=11 // pred_fallthru
          _
        // Predicated region
        $region25: #{gpt_actor_forward.5} parent=11 // pred_check
          %p254 = pneg %p152
        $region26: #{gpt_actor_forward.5} parent=11 // pred_check_branch
          %256 = sbr.rel (%p254) target = $region28
        $region27: #{gpt_actor_forward.5} parent=11 // pred_region
          _
        $region28: #{gpt_actor_forward.5} parent=11 // pred_fallthru
          _
        // Predicated region
        $region29: #{gpt_actor_forward.5} parent=11 // pred_check
          %p257 = pneg %p173
        $region30: #{gpt_actor_forward.5} parent=11 // pred_check_branch
          %259 = sbr.rel (%p257) target = $region32
        $region31: #{gpt_actor_forward.5} parent=11 // pred_region
          %s261 = ssub.s32 1024, 1024
          %262 = vsyncadd [#allocation5], %s261
          %s263 = sshll.u32 [#allocation4], 4
          %s264 = int_to_ptr.vmem [resolvable:$true] %s263
          %269 = dma.hbm_to_vmem [thread:$0]  %s6, 1024, %s264, [#allocation5], 64, 64, 4
        $region32: #{gpt_actor_forward.5} parent=11 // pred_fallthru
          _
        // Predicated region
        $region33: #{gpt_actor_forward.5} parent=11 // pred_check
          %p270 = pneg %p194
        $region34: #{gpt_actor_forward.5} parent=11 // pred_check_branch
          %272 = sbr.rel (%p270) target = $region36
        $region35: #{gpt_actor_forward.5} parent=11 // pred_region
          _
        $region36: #{gpt_actor_forward.5} parent=11 // pred_fallthru
          _
      $region12: #{gpt_actor_forward.5} parent=5 // pred_fallthru
        _
      %p273 = scmp.lt.s32.totalorder %s16, 2
      // Predicated region
      $region37: #{gpt_actor_forward.5} parent=5 // pred_check
        %p274 = pneg %p273
      $region38: #{gpt_actor_forward.5} parent=5 // pred_check_branch
        %276 = sbr.rel (%p274) target = $region40
      $region39: #{gpt_actor_forward.5} parent=5 // pred_region
        // Predicated region
        $region41: #{gpt_actor_forward.5} parent=39 // pred_check
          %p277 = pneg %p36
        $region42: #{gpt_actor_forward.5} parent=39 // pred_check_branch
          %279 = sbr.rel (%p277) target = $region44
        $region43: #{gpt_actor_forward.5} parent=39 // pred_region
          %p280 = scmp.lt.s32.totalorder %s16, 1
          %s281 = scalar_select %p280, %s16, 1
          %s282 = smul.addr %s281, 4
          %s283 = scalar_lea.vmem %s0, %s282
        $region44: #{gpt_actor_forward.5} parent=39 // pred_fallthru
          _
        // Predicated region
        $region45: #{gpt_actor_forward.5} parent=39 // pred_check
          %p284 = pneg %p62
        $region46: #{gpt_actor_forward.5} parent=39 // pred_check_branch
          %286 = sbr.rel (%p284) target = $region48
        $region47: #{gpt_actor_forward.5} parent=39 // pred_region
          %p287 = scmp.lt.s32.totalorder %s16, 1
          %s288 = scalar_select %p287, %s16, 1
          %s289 = smul.addr %s288, 8
          %s290 = scalar_lea.vmem %s1, %s289
        $region48: #{gpt_actor_forward.5} parent=39 // pred_fallthru
          _
      $region40: #{gpt_actor_forward.5} parent=5 // pred_fallthru
        _
      %p291 = scmp.le.s32.totalorder 1, %s16
      %p292 = scmp.lt.s32.totalorder %s16, 3
      %p293 = pnand %p291, %p292
      %p294 = pneg %p293
      // Predicated region
      $region49: #{gpt_actor_forward.5} parent=5 // pred_check
        _
      $region50: #{gpt_actor_forward.5} parent=5 // pred_check_branch
        %296 = sbr.rel (%p293) target = $region52
      $region51: #{gpt_actor_forward.5} parent=5 // pred_region
        %s297 = ssub.s32 %s16, 1
        // Predicated region
        $region53: #{gpt_actor_forward.5} parent=51 // pred_check
          %p298 = pneg %p131
        $region54: #{gpt_actor_forward.5} parent=51 // pred_check_branch
          %300 = sbr.rel (%p298) target = $region56
        $region55: #{gpt_actor_forward.5} parent=51 // pred_region
          %301 = dma.done [#allocation3], 3072
        $region56: #{gpt_actor_forward.5} parent=51 // pred_fallthru
          _
        // Predicated region
        $region57: #{gpt_actor_forward.5} parent=51 // pred_check
          %p302 = pneg %p173
        $region58: #{gpt_actor_forward.5} parent=51 // pred_check_branch
          %304 = sbr.rel (%p302) target = $region60
        $region59: #{gpt_actor_forward.5} parent=51 // pred_region
          %305 = dma.done [#allocation5], 1024
        $region60: #{gpt_actor_forward.5} parent=51 // pred_fallthru
          _
        %p306 = scmp.lt.s32.totalorder %s21, 1
        %s307 = scalar_select %p306, %s21, 1
        %s308 = smul.addr %s307, 4
        %s309 = scalar_lea.vmem %s0, %s308
        %p310 = pneg %p42
        %p311 = pneg %p39
        %p312 = scmp.lt.s32.totalorder %s21, 1
        %s313 = scalar_select %p312, %s21, 1
        %s314 = smul.addr %s313, 8
        %s315 = scalar_lea.vmem %s1, %s314
        %p316 = pneg %p68
        %p317 = pneg %p65
        %p318 = pneg %p89
        %p319 = pneg %p86
        %p320 = pneg %p110
        %p321 = pneg %p107
        %p322 = pneg %p131
        %p323 = pneg %p128
        %p324 = pneg %p152
        %p325 = pneg %p149
        %p326 = pneg %p173
        %p327 = pneg %p170
        %p328 = pneg %p194
        %p329 = pneg %p191
        %p330 = pneg %p220
        %p331 = pneg %p217
        %p332 = scmp.lt.s32.totalorder %s21, 1
        %s333 = scalar_select %p332, %s21, 1
        %s334 = smul.addr %s333, 4
        %s335 = scalar_lea.vmem %s8, %s334
        %p336 = scmp.lt.s32.totalorder %s21, 1
        %s337 = scalar_select %p336, %s21, 1
        %s338 = smul.addr %s337, 4
        %s339 = scalar_lea.vmem %s0, %s338
        %p340 = scmp.lt.s32.totalorder %s21, 1
        %s341 = scalar_select %p340, %s21, 1
        %s342 = smul.addr %s341, 8
        %s343 = scalar_lea.vmem %s1, %s342
        %p344 = scmp.lt.s32.totalorder %s21, 1
        %s345 = scalar_select %p344, %s21, 1
        %s346 = smul.addr %s345, 4
        %s347 = scalar_lea.vmem %s8, %s346
        %v349 = vld [vmem:[%s339] sm:$0xf]
        %v350 = vunpack.c.l.bf16 %v349
        %v351 = vld [vmem:[%s2] sm:$0x1]
        %v352 = vld [vmem:[%s3] sm:$0x1]
        %353 = vadd.xlane.f32.xlu0 %v350
        %v354 = vpop.xlane.xlu0 %353
        %v355 = vrcp.pop 128.0
        %v356 = vmul.f32 %v354, %v355
        %v357 = vsub.f32 %v350, %v356
        %v358 = vmul.f32 %v357, %v357
        %359 = vadd.xlane.f32.xlu0 %v358
        %v360 = vpop.xlane.xlu0 %359
        %v361 = vmul.f32 %v360, %v355
        %v362 = vadd.f32 %v361, 1e-05
        %v363 = vrsqrt.pop %v362
        %v364 = vmul.f32 %v357, %v363
        %v366 = vlaneseq
        %v367 = vshrl.u32 %v366, 7
        %v368 = vsub.s32 0, %v367
        %v369 = vrot.slane %v351, %v368
        %v371 = vmul.f32 %v364, %v369
        %v373 = vlaneseq
        %v374 = vshrl.u32 %v373, 7
        %v375 = vsub.s32 0, %v374
        %v376 = vrot.slane %v352, %v375
        %v378 = vadd.f32 %v371, %v376
        %v379 = vpack.c.bf16 %v378, %v378
        %v380 = vld [vmem:[#allocation2] sm:$0xff]
        %v381 = vld [vmem:[#allocation2 + $0x8] sm:$0xf]
        %v382 = vld [vmem:[#allocation2 + $0xc] sm:$0xff]
        %v383 = vld [vmem:[#allocation2 + $0x14] sm:$0xf]
        %v384 = vld [vmem:[#allocation2 + $0x18] sm:$0xff]
        %v385 = vld [vmem:[#allocation2 + $0x20] sm:$0xf]
        %v386 = vld [vmem:[#allocation2 + $0x24] sm:$0xff]
        %v387 = vld [vmem:[#allocation2 + $0x2c] sm:$0xf]
        %v388 = vld [vmem:[#allocation2 + $0x30] sm:$0xff]
        %v389 = vld [vmem:[#allocation2 + $0x38] sm:$0xf]
        %v390 = vld [vmem:[#allocation2 + $0x3c] sm:$0xff]
        %v391 = vld [vmem:[#allocation2 + $0x44] sm:$0xf]
        %v392 = vld [vmem:[#allocation2 + $0x48] sm:$0xff]
        %v393 = vld [vmem:[#allocation2 + $0x50] sm:$0xf]
        %v394 = vld [vmem:[#allocation2 + $0x54] sm:$0xff]
        %v395 = vld [vmem:[#allocation2 + $0x5c] sm:$0xf]
        %v396 = vld [vmem:[#allocation2 + $0x60] sm:$0xff]
        %v397 = vld [vmem:[#allocation2 + $0x68] sm:$0xf]
        %v398 = vld [vmem:[#allocation2 + $0x6c] sm:$0xff]
        %v399 = vld [vmem:[#allocation2 + $0x74] sm:$0xf]
        %v400 = vld [vmem:[#allocation2 + $0x78] sm:$0xff]
        %v401 = vld [vmem:[#allocation2 + $0x80] sm:$0xf]
        %v402 = vld [vmem:[#allocation2 + $0x84] sm:$0xff]
        %v403 = vld [vmem:[#allocation2 + $0x8c] sm:$0xf]
        %v404 = vld [vmem:[#allocation2 + $0x90] sm:$0xff]
        %v405 = vld [vmem:[#allocation2 + $0x98] sm:$0xf]
        %v406 = vld [vmem:[#allocation2 + $0x9c] sm:$0xff]
        %v407 = vld [vmem:[#allocation2 + $0xa4] sm:$0xf]
        %v408 = vld [vmem:[#allocation2 + $0xa8] sm:$0xff]
        %v409 = vld [vmem:[#allocation2 + $0xb0] sm:$0xf]
        %v410 = vld [vmem:[#allocation2 + $0xb4] sm:$0xff]
        %v411 = vld [vmem:[#allocation2 + $0xbc] sm:$0xf]
        %v412 = vld [vmem:[%s5] sm:$0x7]
        %v414 = vlaneseq
        %v415 = vshrl.u32 %v414, 7
        %v416 = vsub.s32 0, %v415
        %v417 = vrot.slane %v412, %v416
        %v418 = vlaneseq
        %v419 = vshrl.u32 %v418, 7
        %v420 = vsub.s32 1, %v419
        %v421 = vrot.slane %v412, %v420
        %v422 = vlaneseq
        %v423 = vshrl.u32 %v422, 7
        %v424 = vsub.s32 2, %v423
        %v425 = vrot.slane %v412, %v424
        %v461 = vunpack.c.l.b16 %v380
        %v462 = vunpack.c.h.b16 %v380
        %v463 = vunpack.c.l.b16 %v381
        %v464 = vunpack.c.l.b16 %v382
        %v465 = vunpack.c.h.b16 %v382
        %v466 = vunpack.c.l.b16 %v383
        %v467 = vunpack.c.l.b16 %v384
        %v468 = vunpack.c.h.b16 %v384
        %v469 = vunpack.c.l.b16 %v385
        %v470 = vunpack.c.l.b16 %v386
        %v471 = vunpack.c.h.b16 %v386
        %v472 = vunpack.c.l.b16 %v387
        %v473 = vunpack.c.l.b16 %v388
        %v474 = vunpack.c.h.b16 %v388
        %v475 = vunpack.c.l.b16 %v389
        %v476 = vunpack.c.l.b16 %v390
        %v477 = vunpack.c.h.b16 %v390
        %v478 = vunpack.c.l.b16 %v391
        %v479 = vunpack.c.l.b16 %v392
        %v480 = vunpack.c.h.b16 %v392
        %v481 = vunpack.c.l.b16 %v393
        %v482 = vunpack.c.l.b16 %v394
        %v483 = vunpack.c.h.b16 %v394
        %v484 = vunpack.c.l.b16 %v395
        %v485 = vunpack.c.l.b16 %v396
        %v486 = vunpack.c.h.b16 %v396
        %v487 = vunpack.c.l.b16 %v397
        %v488 = vunpack.c.l.b16 %v398
        %v489 = vunpack.c.h.b16 %v398
        %v490 = vunpack.c.l.b16 %v399
        %v491 = vunpack.c.l.b16 %v400
        %v492 = vunpack.c.h.b16 %v400
        %v493 = vunpack.c.l.b16 %v401
        %v494 = vunpack.c.l.b16 %v402
        %v495 = vunpack.c.h.b16 %v402
        %v496 = vunpack.c.l.b16 %v403
        %v497 = vunpack.c.l.b16 %v404
        %v498 = vunpack.c.h.b16 %v404
        %v499 = vunpack.c.l.b16 %v405
        %v500 = vunpack.c.l.b16 %v406
        %v501 = vunpack.c.h.b16 %v406
        %v502 = vunpack.c.l.b16 %v407
        %v503 = vunpack.c.l.b16 %v408
        %v504 = vunpack.c.h.b16 %v408
        %v505 = vunpack.c.l.b16 %v409
        %v506 = vunpack.c.l.b16 %v410
        %v507 = vunpack.c.h.b16 %v410
        %v508 = vunpack.c.l.b16 %v411
        %v509 = vpack.c.b16 %v464, %v461
        %v510 = vpack.c.b16 %v465, %v462
        %v511 = vpack.c.b16 %v466, %v463
        %v512 = vpack.c.b16 %v470, %v467
        %v513 = vpack.c.b16 %v471, %v468
        %v514 = vpack.c.b16 %v472, %v469
        %v515 = vpack.c.b16 %v476, %v473
        %v516 = vpack.c.b16 %v477, %v474
        %v517 = vpack.c.b16 %v478, %v475
        %v518 = vpack.c.b16 %v482, %v479
        %v519 = vpack.c.b16 %v483, %v480
        %v520 = vpack.c.b16 %v484, %v481
        %v521 = vpack.c.b16 %v488, %v485
        %v522 = vpack.c.b16 %v489, %v486
        %v523 = vpack.c.b16 %v490, %v487
        %v524 = vpack.c.b16 %v494, %v491
        %v525 = vpack.c.b16 %v495, %v492
        %v526 = vpack.c.b16 %v496, %v493
        %v527 = vpack.c.b16 %v500, %v497
        %v528 = vpack.c.b16 %v501, %v498
        %v529 = vpack.c.b16 %v502, %v499
        %v530 = vpack.c.b16 %v506, %v503
        %v531 = vpack.c.b16 %v507, %v504
        %v532 = vpack.c.b16 %v508, %v505
        %557 = vmatprep.subr.bf16.mxu0 %v531
        %558 = vmatpush1.bf16.msra.mxu0 %v530
        %559 = vmatprep.subr.bf16.mxu0 %v528
        %560 = vmatpush1.bf16.msra.mxu0 %v527
        %561 = vmatprep.subr.bf16.mxu0 %v525
        %562 = vmatpush1.bf16.msra.mxu0 %v524
        %563 = vmatprep.subr.bf16.mxu0 %v522
        %564 = vmatpush1.bf16.msra.mxu0 %v521
        %565 = vmatprep.subr.bf16.mxu0 %v519
        %566 = vmatpush1.bf16.msra.mxu0 %v518
        %567 = vmatprep.subr.bf16.mxu0 %v516
        %568 = vmatpush1.bf16.msra.mxu0 %v515
        %569 = vmatprep.subr.bf16.mxu0 %v513
        %570 = vmatpush1.bf16.msra.mxu0 %v512
        %571 = vmatprep.subr.bf16.mxu0 %v510
        %572 = vmatpush1.bf16.msra.mxu0 %v509
        %573 = vmatprep.subr.bf16.mxu0 0
        %574 = vmatpush2.bf16.msra.mxu0 0
        %575 = vmatprep.subr.bf16.mxu0 0
        %576 = vmatpush2.bf16.msra.mxu0 0
        %577 = vmatprep.subr.bf16.mxu0 0
        %578 = vmatpush2.bf16.msra.mxu0 0
        %579 = vmatprep.subr.bf16.mxu0 0
        %580 = vmatpush2.bf16.msra.mxu0 0
        %581 = vmatprep.subr.bf16.mxu0 0
        %582 = vmatpush2.bf16.msra.mxu0 0
        %583 = vmatprep.subr.bf16.mxu0 0
        %584 = vmatpush2.bf16.msra.mxu0 0
        %585 = vmatprep.subr.bf16.mxu0 0
        %586 = vmatpush2.bf16.msra.mxu0 0
        %587 = vmatprep.subr.bf16.mxu0 0
        %588 = vmatpush2.bf16.msra.mxu0 0
        %589 = vmatprep.mubr.bf16.mxu0 0
        %590 = vmatmul.mubr.bf16.gmra.mxu0 %v379
        %v591 = vpop.f32.mrf.mxu0
        %v592 = vadd.f32 %v417, %v591
        %v593 = vpop.f32.mrf.mxu0
        %v594 = vadd.f32 %v421, %v593
        %v595 = vpop.f32.mrf.mxu0
        %v596 = vpop.f32.mrf.mxu0
        %597 = vdwg.mxu0
        %598 = vmatprep.subr.bf16.mxu0 0
        %599 = vmatpush1.bf16.msra.mxu0 %v532
        %600 = vmatprep.subr.bf16.mxu0 0
        %601 = vmatpush1.bf16.msra.mxu0 %v529
        %602 = vmatprep.subr.bf16.mxu0 0
        %603 = vmatpush1.bf16.msra.mxu0 %v526
        %604 = vmatprep.subr.bf16.mxu0 0
        %605 = vmatpush1.bf16.msra.mxu0 %v523
        %606 = vmatprep.subr.bf16.mxu0 0
        %607 = vmatpush1.bf16.msra.mxu0 %v520
        %608 = vmatprep.subr.bf16.mxu0 0
        %609 = vmatpush1.bf16.msra.mxu0 %v517
        %610 = vmatprep.subr.bf16.mxu0 0
        %611 = vmatpush1.bf16.msra.mxu0 %v514
        %612 = vmatprep.subr.bf16.mxu0 0
        %613 = vmatpush1.bf16.msra.mxu0 %v511
        %614 = vmatprep.subr.bf16.mxu0 0
        %615 = vmatpush2.bf16.msra.mxu0 0
        %616 = vmatprep.subr.bf16.mxu0 0
        %617 = vmatpush2.bf16.msra.mxu0 0
        %618 = vmatprep.subr.bf16.mxu0 0
        %619 = vmatpush2.bf16.msra.mxu0 0
        %620 = vmatprep.subr.bf16.mxu0 0
        %621 = vmatpush2.bf16.msra.mxu0 0
        %622 = vmatprep.subr.bf16.mxu0 0
        %623 = vmatpush2.bf16.msra.mxu0 0
        %624 = vmatprep.subr.bf16.mxu0 0
        %625 = vmatpush2.bf16.msra.mxu0 0
        %626 = vmatprep.subr.bf16.mxu0 0
        %627 = vmatpush2.bf16.msra.mxu0 0
        %628 = vmatprep.subr.bf16.mxu0 0
        %629 = vmatpush2.bf16.msra.mxu0 0
        %630 = vmatprep.mubr.bf16.mxu0 0
        %631 = vmatmul.mubr.bf16.gmra.mxu0 %v379
        %v632 = vpop.f32.mrf.mxu0
        %v633 = vadd.f32 %v425, %v632
        %v634 = vpop.f32.mrf.mxu0
        %v635 = vpop.f32.mrf.mxu0
        %v636 = vpop.f32.mrf.mxu0
        %637 = vdwg.mxu0
        %v638 = vld [vmem:[%s343] sm:$0xff]
        %vm639 = vcmask 261120
        %v641 = vsel %vm639, %v592, 0
        %v644 = vsel %vm639, %v594, 0
        %646 = vmatprep.subr.mxu0 0.0
        %647 = vmatpush1.xpose.msra.mxu0 0.0
        %648 = vmatprep.subr.mxu0 0.0
        %649 = vmatpush1.xpose.msra.mxu0 0.0
        %650 = vmatprep.subr.mxu0 0.0
        %651 = vmatpush1.xpose.msra.mxu0 0.0
        %652 = vmatprep.subr.mxu0 0.0
        %653 = vmatpush1.xpose.msra.mxu0 0.0
        %654 = vmatprep.subr.mxu0 0.0
        %655 = vmatpush1.xpose.msra.mxu0 0.0
        %656 = vmatprep.subr.mxu0 0.0
        %657 = vmatpush1.xpose.msra.mxu0 0.0
        %658 = vmatprep.subr.mxu0 0.0
        %659 = vmatpush1.xpose.msra.mxu0 0.0
        %660 = vmatprep.subr.mxu0 0.0
        %661 = vmatpush1.xpose.msra.mxu0 0.0
        %662 = vmatprep.subr.mxu0 0.0
        %663 = vmatpush1.xpose.msra.mxu0 0.0
        %664 = vmatprep.subr.mxu0 0.0
        %665 = vmatpush1.xpose.msra.mxu0 0.0
        %666 = vmatprep.subr.mxu0 0.0
        %667 = vmatpush1.xpose.msra.mxu0 0.0
        %668 = vmatprep.subr.mxu0 0.0
        %669 = vmatpush1.xpose.msra.mxu0 0.0
        %670 = vmatprep.subr.mxu0 0.0
        %671 = vmatpush1.xpose.msra.mxu0 0.0
        %672 = vmatprep.subr.mxu0 0.0
        %673 = vmatpush1.xpose.msra.mxu0 0.0
        %674 = vmatprep.subr.mxu0 0.0
        %675 = vmatpush1.xpose.msra.mxu0 0.0
        %676 = vmatprep.subr.mxu0 0.0
        %677 = vmatpush1.xpose.msra.mxu0 %v644
        %678 = vmatprep.subr.mxu0 0.0
        %679 = vmatpush2.xpose.msra.mxu0 0.0
        %680 = vmatprep.subr.mxu0 0.0
        %681 = vmatpush2.xpose.msra.mxu0 0.0
        %682 = vmatprep.subr.mxu0 0.0
        %683 = vmatpush2.xpose.msra.mxu0 0.0
        %684 = vmatprep.subr.mxu0 0.0
        %685 = vmatpush2.xpose.msra.mxu0 0.0
        %686 = vmatprep.subr.mxu0 0.0
        %687 = vmatpush2.xpose.msra.mxu0 0.0
        %688 = vmatprep.subr.mxu0 0.0
        %689 = vmatpush2.xpose.msra.mxu0 0.0
        %690 = vmatprep.subr.mxu0 0.0
        %691 = vmatpush2.xpose.msra.mxu0 0.0
        %692 = vmatprep.subr.mxu0 0.0
        %693 = vmatpush2.xpose.msra.mxu0 0.0
        %694 = vmatprep.subr.mxu0 0.0
        %695 = vmatpush2.xpose.msra.mxu0 0.0
        %696 = vmatprep.subr.mxu0 0.0
        %697 = vmatpush2.xpose.msra.mxu0 0.0
        %698 = vmatprep.subr.mxu0 0.0
        %699 = vmatpush2.xpose.msra.mxu0 0.0
        %700 = vmatprep.subr.mxu0 0.0
        %701 = vmatpush2.xpose.msra.mxu0 0.0
        %702 = vmatprep.subr.mxu0 0.0
        %703 = vmatpush2.xpose.msra.mxu0 0.0
        %704 = vmatprep.subr.mxu0 0.0
        %705 = vmatpush2.xpose.msra.mxu0 0.0
        %706 = vmatprep.subr.mxu0 0.0
        %707 = vmatpush2.xpose.msra.mxu0 0.0
        %708 = vmatprep.subr.mxu0 0.0
        %709 = vmatpush2.xpose.msra.mxu0 0.0
        %710 = vmatprep.mubr.f32.mxu0 0.0
        %711 = vmatmul.mubr.f32.gmra.mxu0 %v641
        %v712 = vpop.f32.mrf.mxu0
        %v713 = vadd.f32 0.0, %v712
        %v714 = vpop.f32.mrf.mxu0
        %715 = vdwg.mxu0
        %v716 = vmul.f32 %v713, 0.17677669
        %v717 = vadd.f32 %v716, %v638
        %vm718 = vcmask 64512
        %v719 = vsel %vm718, %v717, -inf
        %720 = vmax.xlane.f32.xlu0 %v719
        %v721 = vpop.xlane.xlu0 %720
        %v722 = vsub.f32 %v717, %v721
        %v723 = vmul.f32 %v722, 1.442695
        %v724 = vpow.pop %v723
        %v725 = vsel %vm718, %v724, 0.0
        %726 = vadd.xlane.f32.xlu0 %v725
        %v727 = vpop.xlane.xlu0 %726
        %v728 = vrcp.pop %v727
        %v729 = vmul.f32 %v724, %v728
        %v730 = vpack.c.bf16 %v729, %v729
        %v731 = vpack.c.bf16 %v633, %v633
        %v733 = vsel %vm718, %v730, 0
        %vm735 = vcmask 1043456
        %v737 = vsel %vm735, %v731, 0
        %739 = vmatprep.subr.bf16.mxu0 0
        %740 = vmatpush1.bf16.msra.mxu0 0
        %741 = vmatprep.subr.bf16.mxu0 0
        %742 = vmatpush1.bf16.msra.mxu0 0
        %743 = vmatprep.subr.bf16.mxu0 0
        %744 = vmatpush1.bf16.msra.mxu0 0
        %745 = vmatprep.subr.bf16.mxu0 0
        %746 = vmatpush1.bf16.msra.mxu0 0
        %747 = vmatprep.subr.bf16.mxu0 0
        %748 = vmatpush1.bf16.msra.mxu0 0
        %749 = vmatprep.subr.bf16.mxu0 0
        %750 = vmatpush1.bf16.msra.mxu0 0
        %751 = vmatprep.subr.bf16.mxu0 0
        %752 = vmatpush1.bf16.msra.mxu0 0
        %753 = vmatprep.subr.bf16.mxu0 0
        %754 = vmatpush1.bf16.msra.mxu0 %v737
        %755 = vmatprep.subr.bf16.mxu0 0
        %756 = vmatpush2.bf16.msra.mxu0 0
        %757 = vmatprep.subr.bf16.mxu0 0
        %758 = vmatpush2.bf16.msra.mxu0 0
        %759 = vmatprep.subr.bf16.mxu0 0
        %760 = vmatpush2.bf16.msra.mxu0 0
        %761 = vmatprep.subr.bf16.mxu0 0
        %762 = vmatpush2.bf16.msra.mxu0 0
        %763 = vmatprep.subr.bf16.mxu0 0
        %764 = vmatpush2.bf16.msra.mxu0 0
        %765 = vmatprep.subr.bf16.mxu0 0
        %766 = vmatpush2.bf16.msra.mxu0 0
        %767 = vmatprep.subr.bf16.mxu0 0
        %768 = vmatpush2.bf16.msra.mxu0 0
        %769 = vmatprep.subr.bf16.mxu0 0
        %770 = vmatpush2.bf16.msra.mxu0 0
        %771 = vmatprep.mubr.bf16.mxu0 0
        %772 = vmatmul.mubr.bf16.gmra.mxu0 %v733
        %v773 = vpop.f32.mrf.mxu0
        %v774 = vadd.f32 0.0, %v773
        %v775 = vpop.f32.mrf.mxu0
        %v776 = vpop.f32.mrf.mxu0
        %v777 = vpop.f32.mrf.mxu0
        %778 = vdwg.mxu0
        %v779 = vpack.c.bf16 %v774, %v774
        %v780 = vld [vmem:[#allocation4] sm:$0xf]
        %v781 = vld [vmem:[#allocation4 + $0x4] sm:$0xf]
        %v782 = vld [vmem:[#allocation4 + $0x8] sm:$0xf]
        %v783 = vld [vmem:[#allocation4 + $0xc] sm:$0xf]
        %784 = vrot.lane.b32.xlu0 %v592, 96
        %v785 = vpop.permute.xlu0 %784
        %786 = vrot.lane.b32.xlu0 %v594, 96
        %v787 = vpop.permute.xlu0 %786
        %v788 = vsel %vm639, %v785, 0
        %v790 = vsel %vm639, %v787, 0
        %792 = vmatprep.subr.mxu0 0.0
        %793 = vmatpush1.xpose.msra.mxu0 0.0
        %794 = vmatprep.subr.mxu0 0.0
        %795 = vmatpush1.xpose.msra.mxu0 0.0
        %796 = vmatprep.subr.mxu0 0.0
        %797 = vmatpush1.xpose.msra.mxu0 0.0
        %798 = vmatprep.subr.mxu0 0.0
        %799 = vmatpush1.xpose.msra.mxu0 0.0
        %800 = vmatprep.subr.mxu0 0.0
        %801 = vmatpush1.xpose.msra.mxu0 0.0
        %802 = vmatprep.subr.mxu0 0.0
        %803 = vmatpush1.xpose.msra.mxu0 0.0
        %804 = vmatprep.subr.mxu0 0.0
        %805 = vmatpush1.xpose.msra.mxu0 0.0
        %806 = vmatprep.subr.mxu0 0.0
        %807 = vmatpush1.xpose.msra.mxu0 0.0
        %808 = vmatprep.subr.mxu0 0.0
        %809 = vmatpush1.xpose.msra.mxu0 0.0
        %810 = vmatprep.subr.mxu0 0.0
        %811 = vmatpush1.xpose.msra.mxu0 0.0
        %812 = vmatprep.subr.mxu0 0.0
        %813 = vmatpush1.xpose.msra.mxu0 0.0
        %814 = vmatprep.subr.mxu0 0.0
        %815 = vmatpush1.xpose.msra.mxu0 0.0
        %816 = vmatprep.subr.mxu0 0.0
        %817 = vmatpush1.xpose.msra.mxu0 0.0
        %818 = vmatprep.subr.mxu0 0.0
        %819 = vmatpush1.xpose.msra.mxu0 0.0
        %820 = vmatprep.subr.mxu0 0.0
        %821 = vmatpush1.xpose.msra.mxu0 0.0
        %822 = vmatprep.subr.mxu0 0.0
        %823 = vmatpush1.xpose.msra.mxu0 %v790
        %824 = vmatprep.subr.mxu0 0.0
        %825 = vmatpush2.xpose.msra.mxu0 0.0
        %826 = vmatprep.subr.mxu0 0.0
        %827 = vmatpush2.xpose.msra.mxu0 0.0
        %828 = vmatprep.subr.mxu0 0.0
        %829 = vmatpush2.xpose.msra.mxu0 0.0
        %830 = vmatprep.subr.mxu0 0.0
        %831 = vmatpush2.xpose.msra.mxu0 0.0
        %832 = vmatprep.subr.mxu0 0.0
        %833 = vmatpush2.xpose.msra.mxu0 0.0
        %834 = vmatprep.subr.mxu0 0.0
        %835 = vmatpush2.xpose.msra.mxu0 0.0
        %836 = vmatprep.subr.mxu0 0.0
        %837 = vmatpush2.xpose.msra.mxu0 0.0
        %838 = vmatprep.subr.mxu0 0.0
        %839 = vmatpush2.xpose.msra.mxu0 0.0
        %840 = vmatprep.subr.mxu0 0.0
        %841 = vmatpush2.xpose.msra.mxu0 0.0
        %842 = vmatprep.subr.mxu0 0.0
        %843 = vmatpush2.xpose.msra.mxu0 0.0
        %844 = vmatprep.subr.mxu0 0.0
        %845 = vmatpush2.xpose.msra.mxu0 0.0
        %846 = vmatprep.subr.mxu0 0.0
        %847 = vmatpush2.xpose.msra.mxu0 0.0
        %848 = vmatprep.subr.mxu0 0.0
        %849 = vmatpush2.xpose.msra.mxu0 0.0
        %850 = vmatprep.subr.mxu0 0.0
        %851 = vmatpush2.xpose.msra.mxu0 0.0
        %852 = vmatprep.subr.mxu0 0.0
        %853 = vmatpush2.xpose.msra.mxu0 0.0
        %854 = vmatprep.subr.mxu0 0.0
        %855 = vmatpush2.xpose.msra.mxu0 0.0
        %856 = vmatprep.mubr.f32.mxu0 0.0
        %857 = vmatmul.mubr.f32.gmra.mxu0 %v788
        %v858 = vpop.f32.mrf.mxu0
        %v859 = vadd.f32 0.0, %v858
        %v860 = vpop.f32.mrf.mxu0
        %861 = vdwg.mxu0
        %v862 = vmul.f32 %v859, 0.17677669
        %v863 = vadd.f32 %v862, %v638
        %v864 = vsel %vm718, %v863, -inf
        %865 = vmax.xlane.f32.xlu0 %v864
        %v866 = vpop.xlane.xlu0 %865
        %v867 = vsub.f32 %v863, %v866
        %v868 = vmul.f32 %v867, 1.442695
        %v869 = vpow.pop %v868
        %v870 = vsel %vm718, %v869, 0.0
        %871 = vadd.xlane.f32.xlu0 %v870
        %v872 = vpop.xlane.xlu0 %871
        %v873 = vrcp.pop %v872
        %v874 = vmul.f32 %v869, %v873
        %v875 = vpack.c.bf16 %v874, %v874
        %877 = vrot.lane.b32.xlu0 %v731, 96
        %v878 = vpop.permute.xlu0 %877
        %v880 = vsel %vm718, %v875, 0
        %v883 = vsel %vm735, %v878, 0
        %885 = vmatprep.subr.bf16.mxu0 0
        %886 = vmatpush1.bf16.msra.mxu0 0
        %887 = vmatprep.subr.bf16.mxu0 0
        %888 = vmatpush1.bf16.msra.mxu0 0
        %889 = vmatprep.subr.bf16.mxu0 0
        %890 = vmatpush1.bf16.msra.mxu0 0
        %891 = vmatprep.subr.bf16.mxu0 0
        %892 = vmatpush1.bf16.msra.mxu0 0
        %893 = vmatprep.subr.bf16.mxu0 0
        %894 = vmatpush1.bf16.msra.mxu0 0
        %895 = vmatprep.subr.bf16.mxu0 0
        %896 = vmatpush1.bf16.msra.mxu0 0
        %897 = vmatprep.subr.bf16.mxu0 0
        %898 = vmatpush1.bf16.msra.mxu0 0
        %899 = vmatprep.subr.bf16.mxu0 0
        %900 = vmatpush1.bf16.msra.mxu0 %v883
        %901 = vmatprep.subr.bf16.mxu0 0
        %902 = vmatpush2.bf16.msra.mxu0 0
        %903 = vmatprep.subr.bf16.mxu0 0
        %904 = vmatpush2.bf16.msra.mxu0 0
        %905 = vmatprep.subr.bf16.mxu0 0
        %906 = vmatpush2.bf16.msra.mxu0 0
        %907 = vmatprep.subr.bf16.mxu0 0
        %908 = vmatpush2.bf16.msra.mxu0 0
        %909 = vmatprep.subr.bf16.mxu0 0
        %910 = vmatpush2.bf16.msra.mxu0 0
        %911 = vmatprep.subr.bf16.mxu0 0
        %912 = vmatpush2.bf16.msra.mxu0 0
        %913 = vmatprep.subr.bf16.mxu0 0
        %914 = vmatpush2.bf16.msra.mxu0 0
        %915 = vmatprep.subr.bf16.mxu0 0
        %916 = vmatpush2.bf16.msra.mxu0 0
        %917 = vmatprep.mubr.bf16.mxu0 0
        %918 = vmatmul.mubr.bf16.gmra.mxu0 %v880
        %v919 = vpop.f32.mrf.mxu0
        %v920 = vadd.f32 0.0, %v919
        %v921 = vpop.f32.mrf.mxu0
        %v922 = vpop.f32.mrf.mxu0
        %v923 = vpop.f32.mrf.mxu0
        %924 = vdwg.mxu0
        %v925 = vpack.c.bf16 %v920, %v920
        %v926 = vld [vmem:[#allocation4 + $0x10] sm:$0xf]
        %v927 = vld [vmem:[#allocation4 + $0x14] sm:$0xf]
        %v928 = vld [vmem:[#allocation4 + $0x18] sm:$0xf]
        %v929 = vld [vmem:[#allocation4 + $0x1c] sm:$0xf]
        %v934 = vunpack.c.l.b16 %v926
        %v935 = vunpack.c.l.b16 %v927
        %v936 = vunpack.c.l.b16 %v928
        %v937 = vunpack.c.l.b16 %v929
        %v938 = vpack.c.b16 %v935, %v934
        %v939 = vpack.c.b16 %v937, %v936
        %v943 = vsel %vm639, %v925, 0
        %945 = vmatprep.subr.bf16.mxu0 0
        %946 = vmatpush1.bf16.msra.mxu0 0
        %947 = vmatprep.subr.bf16.mxu0 0
        %948 = vmatpush1.bf16.msra.mxu0 0
        %949 = vmatprep.subr.bf16.mxu0 0
        %950 = vmatpush1.bf16.msra.mxu0 0
        %951 = vmatprep.subr.bf16.mxu0 0
        %952 = vmatpush1.bf16.msra.mxu0 0
        %953 = vmatprep.subr.bf16.mxu0 0
        %954 = vmatpush1.bf16.msra.mxu0 0
        %955 = vmatprep.subr.bf16.mxu0 0
        %956 = vmatpush1.bf16.msra.mxu0 0
        %957 = vmatprep.subr.bf16.mxu0 0
        %958 = vmatpush1.bf16.msra.mxu0 %v939
        %959 = vmatprep.subr.bf16.mxu0 0
        %960 = vmatpush1.bf16.msra.mxu0 %v938
        %961 = vmatprep.subr.bf16.mxu0 0
        %962 = vmatpush2.bf16.msra.mxu0 0
        %963 = vmatprep.subr.bf16.mxu0 0
        %964 = vmatpush2.bf16.msra.mxu0 0
        %965 = vmatprep.subr.bf16.mxu0 0
        %966 = vmatpush2.bf16.msra.mxu0 0
        %967 = vmatprep.subr.bf16.mxu0 0
        %968 = vmatpush2.bf16.msra.mxu0 0
        %969 = vmatprep.subr.bf16.mxu0 0
        %970 = vmatpush2.bf16.msra.mxu0 0
        %971 = vmatprep.subr.bf16.mxu0 0
        %972 = vmatpush2.bf16.msra.mxu0 0
        %973 = vmatprep.subr.bf16.mxu0 0
        %974 = vmatpush2.bf16.msra.mxu0 0
        %975 = vmatprep.subr.bf16.mxu0 0
        %976 = vmatpush2.bf16.msra.mxu0 0
        %977 = vmatprep.mubr.bf16.mxu0 0
        %978 = vmatmul.mubr.bf16.gmra.mxu0 %v943
        %v979 = vpop.f32.mrf.mxu0
        %v980 = vadd.f32 0.0, %v979
        %v981 = vpop.f32.mrf.mxu0
        %v982 = vpop.f32.mrf.mxu0
        %v983 = vpop.f32.mrf.mxu0
        %984 = vdwg.mxu0
        %v989 = vunpack.c.l.b16 %v780
        %v990 = vunpack.c.l.b16 %v781
        %v991 = vunpack.c.l.b16 %v782
        %v992 = vunpack.c.l.b16 %v783
        %v993 = vpack.c.b16 %v990, %v989
        %v994 = vpack.c.b16 %v992, %v991
        %v998 = vsel %vm639, %v779, 0
        %1000 = vmatprep.subr.bf16.mxu0 0
        %1001 = vmatpush1.bf16.msra.mxu0 0
        %1002 = vmatprep.subr.bf16.mxu0 0
        %1003 = vmatpush1.bf16.msra.mxu0 0
        %1004 = vmatprep.subr.bf16.mxu0 0
        %1005 = vmatpush1.bf16.msra.mxu0 0
        %1006 = vmatprep.subr.bf16.mxu0 0
        %1007 = vmatpush1.bf16.msra.mxu0 0
        %1008 = vmatprep.subr.bf16.mxu0 0
        %1009 = vmatpush1.bf16.msra.mxu0 0
        %1010 = vmatprep.subr.bf16.mxu0 0
        %1011 = vmatpush1.bf16.msra.mxu0 0
        %1012 = vmatprep.subr.bf16.mxu0 0
        %1013 = vmatpush1.bf16.msra.mxu0 %v994
        %1014 = vmatprep.subr.bf16.mxu0 0
        %1015 = vmatpush1.bf16.msra.mxu0 %v993
        %1016 = vmatprep.subr.bf16.mxu0 0
        %1017 = vmatpush2.bf16.msra.mxu0 0
        %1018 = vmatprep.subr.bf16.mxu0 0
        %1019 = vmatpush2.bf16.msra.mxu0 0
        %1020 = vmatprep.subr.bf16.mxu0 0
        %1021 = vmatpush2.bf16.msra.mxu0 0
        %1022 = vmatprep.subr.bf16.mxu0 0
        %1023 = vmatpush2.bf16.msra.mxu0 0
        %1024 = vmatprep.subr.bf16.mxu0 0
        %1025 = vmatpush2.bf16.msra.mxu0 0
        %1026 = vmatprep.subr.bf16.mxu0 0
        %1027 = vmatpush2.bf16.msra.mxu0 0
        %1028 = vmatprep.subr.bf16.mxu0 0
        %1029 = vmatpush2.bf16.msra.mxu0 0
        %1030 = vmatprep.subr.bf16.mxu0 0
        %1031 = vmatpush2.bf16.msra.mxu0 0
        %1032 = vmatprep.mubr.bf16.mxu0 0
        %1033 = vmatmul.mubr.bf16.gmra.mxu0 %v998
        %v1034 = vpop.f32.mrf.mxu0
        %v1035 = vadd.f32 %v980, %v1034
        %v1036 = vpop.f32.mrf.mxu0
        %v1037 = vpop.f32.mrf.mxu0
        %v1038 = vpop.f32.mrf.mxu0
        %1039 = vdwg.mxu0
        %1040 = vrot.lane.b32.xlu0 %v592, 64
        %v1041 = vpop.permute.xlu0 %1040
        %1042 = vrot.lane.b32.xlu0 %v594, 64
        %v1043 = vpop.permute.xlu0 %1042
        %v1044 = vsel %vm639, %v1041, 0
        %v1046 = vsel %vm639, %v1043, 0
        %1048 = vmatprep.subr.mxu0 0.0
        %1049 = vmatpush1.xpose.msra.mxu0 0.0
        %1050 = vmatprep.subr.mxu0 0.0
        %1051 = vmatpush1.xpose.msra.mxu0 0.0
        %1052 = vmatprep.subr.mxu0 0.0
        %1053 = vmatpush1.xpose.msra.mxu0 0.0
        %1054 = vmatprep.subr.mxu0 0.0
        %1055 = vmatpush1.xpose.msra.mxu0 0.0
        %1056 = vmatprep.subr.mxu0 0.0
        %1057 = vmatpush1.xpose.msra.mxu0 0.0
        %1058 = vmatprep.subr.mxu0 0.0
        %1059 = vmatpush1.xpose.msra.mxu0 0.0
        %1060 = vmatprep.subr.mxu0 0.0
        %1061 = vmatpush1.xpose.msra.mxu0 0.0
        %1062 = vmatprep.subr.mxu0 0.0
        %1063 = vmatpush1.xpose.msra.mxu0 0.0
        %1064 = vmatprep.subr.mxu0 0.0
        %1065 = vmatpush1.xpose.msra.mxu0 0.0
        %1066 = vmatprep.subr.mxu0 0.0
        %1067 = vmatpush1.xpose.msra.mxu0 0.0
        %1068 = vmatprep.subr.mxu0 0.0
        %1069 = vmatpush1.xpose.msra.mxu0 0.0
        %1070 = vmatprep.subr.mxu0 0.0
        %1071 = vmatpush1.xpose.msra.mxu0 0.0
        %1072 = vmatprep.subr.mxu0 0.0
        %1073 = vmatpush1.xpose.msra.mxu0 0.0
        %1074 = vmatprep.subr.mxu0 0.0
        %1075 = vmatpush1.xpose.msra.mxu0 0.0
        %1076 = vmatprep.subr.mxu0 0.0
        %1077 = vmatpush1.xpose.msra.mxu0 0.0
        %1078 = vmatprep.subr.mxu0 0.0
        %1079 = vmatpush1.xpose.msra.mxu0 %v1046
        %1080 = vmatprep.subr.mxu0 0.0
        %1081 = vmatpush2.xpose.msra.mxu0 0.0
        %1082 = vmatprep.subr.mxu0 0.0
        %1083 = vmatpush2.xpose.msra.mxu0 0.0
        %1084 = vmatprep.subr.mxu0 0.0
        %1085 = vmatpush2.xpose.msra.mxu0 0.0
        %1086 = vmatprep.subr.mxu0 0.0
        %1087 = vmatpush2.xpose.msra.mxu0 0.0
        %1088 = vmatprep.subr.mxu0 0.0
        %1089 = vmatpush2.xpose.msra.mxu0 0.0
        %1090 = vmatprep.subr.mxu0 0.0
        %1091 = vmatpush2.xpose.msra.mxu0 0.0
        %1092 = vmatprep.subr.mxu0 0.0
        %1093 = vmatpush2.xpose.msra.mxu0 0.0
        %1094 = vmatprep.subr.mxu0 0.0
        %1095 = vmatpush2.xpose.msra.mxu0 0.0
        %1096 = vmatprep.subr.mxu0 0.0
        %1097 = vmatpush2.xpose.msra.mxu0 0.0
        %1098 = vmatprep.subr.mxu0 0.0
        %1099 = vmatpush2.xpose.msra.mxu0 0.0
        %1100 = vmatprep.subr.mxu0 0.0
        %1101 = vmatpush2.xpose.msra.mxu0 0.0
        %1102 = vmatprep.subr.mxu0 0.0
        %1103 = vmatpush2.xpose.msra.mxu0 0.0
        %1104 = vmatprep.subr.mxu0 0.0
        %1105 = vmatpush2.xpose.msra.mxu0 0.0
        %1106 = vmatprep.subr.mxu0 0.0
        %1107 = vmatpush2.xpose.msra.mxu0 0.0
        %1108 = vmatprep.subr.mxu0 0.0
        %1109 = vmatpush2.xpose.msra.mxu0 0.0
        %1110 = vmatprep.subr.mxu0 0.0
        %1111 = vmatpush2.xpose.msra.mxu0 0.0
        %1112 = vmatprep.mubr.f32.mxu0 0.0
        %1113 = vmatmul.mubr.f32.gmra.mxu0 %v1044
        %v1114 = vpop.f32.mrf.mxu0
        %v1115 = vadd.f32 0.0, %v1114
        %v1116 = vpop.f32.mrf.mxu0
        %1117 = vdwg.mxu0
        %v1118 = vmul.f32 %v1115, 0.17677669
        %v1119 = vadd.f32 %v1118, %v638
        %v1120 = vsel %vm718, %v1119, -inf
        %1121 = vmax.xlane.f32.xlu0 %v1120
        %v1122 = vpop.xlane.xlu0 %1121
        %v1123 = vsub.f32 %v1119, %v1122
        %v1124 = vmul.f32 %v1123, 1.442695
        %v1125 = vpow.pop %v1124
        %v1126 = vsel %vm718, %v1125, 0.0
        %1127 = vadd.xlane.f32.xlu0 %v1126
        %v1128 = vpop.xlane.xlu0 %1127
        %v1129 = vrcp.pop %v1128
        %v1130 = vmul.f32 %v1125, %v1129
        %v1131 = vpack.c.bf16 %v1130, %v1130
        %1132 = vrot.lane.b32.xlu0 %v731, 64
        %v1133 = vpop.permute.xlu0 %1132
        %v1135 = vsel %vm718, %v1131, 0
        %v1138 = vsel %vm735, %v1133, 0
        %1140 = vmatprep.subr.bf16.mxu0 0
        %1141 = vmatpush1.bf16.msra.mxu0 0
        %1142 = vmatprep.subr.bf16.mxu0 0
        %1143 = vmatpush1.bf16.msra.mxu0 0
        %1144 = vmatprep.subr.bf16.mxu0 0
        %1145 = vmatpush1.bf16.msra.mxu0 0
        %1146 = vmatprep.subr.bf16.mxu0 0
        %1147 = vmatpush1.bf16.msra.mxu0 0
        %1148 = vmatprep.subr.bf16.mxu0 0
        %1149 = vmatpush1.bf16.msra.mxu0 0
        %1150 = vmatprep.subr.bf16.mxu0 0
        %1151 = vmatpush1.bf16.msra.mxu0 0
        %1152 = vmatprep.subr.bf16.mxu0 0
        %1153 = vmatpush1.bf16.msra.mxu0 0
        %1154 = vmatprep.subr.bf16.mxu0 0
        %1155 = vmatpush1.bf16.msra.mxu0 %v1138
        %1156 = vmatprep.subr.bf16.mxu0 0
        %1157 = vmatpush2.bf16.msra.mxu0 0
        %1158 = vmatprep.subr.bf16.mxu0 0
        %1159 = vmatpush2.bf16.msra.mxu0 0
        %1160 = vmatprep.subr.bf16.mxu0 0
        %1161 = vmatpush2.bf16.msra.mxu0 0
        %1162 = vmatprep.subr.bf16.mxu0 0
        %1163 = vmatpush2.bf16.msra.mxu0 0
        %1164 = vmatprep.subr.bf16.mxu0 0
        %1165 = vmatpush2.bf16.msra.mxu0 0
        %1166 = vmatprep.subr.bf16.mxu0 0
        %1167 = vmatpush2.bf16.msra.mxu0 0
        %1168 = vmatprep.subr.bf16.mxu0 0
        %1169 = vmatpush2.bf16.msra.mxu0 0
        %1170 = vmatprep.subr.bf16.mxu0 0
        %1171 = vmatpush2.bf16.msra.mxu0 0
        %1172 = vmatprep.mubr.bf16.mxu0 0
        %1173 = vmatmul.mubr.bf16.gmra.mxu0 %v1135
        %v1174 = vpop.f32.mrf.mxu0
        %v1175 = vadd.f32 0.0, %v1174
        %v1176 = vpop.f32.mrf.mxu0
        %v1177 = vpop.f32.mrf.mxu0
        %v1178 = vpop.f32.mrf.mxu0
        %1179 = vdwg.mxu0
        %v1180 = vpack.c.bf16 %v1175, %v1175
        %v1181 = vld [vmem:[#allocation4 + $0x20] sm:$0xf]
        %v1182 = vld [vmem:[#allocation4 + $0x24] sm:$0xf]
        %v1183 = vld [vmem:[#allocation4 + $0x28] sm:$0xf]
        %v1184 = vld [vmem:[#allocation4 + $0x2c] sm:$0xf]
        %v1189 = vunpack.c.l.b16 %v1181
        %v1190 = vunpack.c.l.b16 %v1182
        %v1191 = vunpack.c.l.b16 %v1183
        %v1192 = vunpack.c.l.b16 %v1184
        %v1193 = vpack.c.b16 %v1190, %v1189
        %v1194 = vpack.c.b16 %v1192, %v1191
        %v1198 = vsel %vm639, %v1180, 0
        %1200 = vmatprep.subr.bf16.mxu0 0
        %1201 = vmatpush1.bf16.msra.mxu0 0
        %1202 = vmatprep.subr.bf16.mxu0 0
        %1203 = vmatpush1.bf16.msra.mxu0 0
        %1204 = vmatprep.subr.bf16.mxu0 0
        %1205 = vmatpush1.bf16.msra.mxu0 0
        %1206 = vmatprep.subr.bf16.mxu0 0
        %1207 = vmatpush1.bf16.msra.mxu0 0
        %1208 = vmatprep.subr.bf16.mxu0 0
        %1209 = vmatpush1.bf16.msra.mxu0 0
        %1210 = vmatprep.subr.bf16.mxu0 0
        %1211 = vmatpush1.bf16.msra.mxu0 0
        %1212 = vmatprep.subr.bf16.mxu0 0
        %1213 = vmatpush1.bf16.msra.mxu0 %v1194
        %1214 = vmatprep.subr.bf16.mxu0 0
        %1215 = vmatpush1.bf16.msra.mxu0 %v1193
        %1216 = vmatprep.subr.bf16.mxu0 0
        %1217 = vmatpush2.bf16.msra.mxu0 0
        %1218 = vmatprep.subr.bf16.mxu0 0
        %1219 = vmatpush2.bf16.msra.mxu0 0
        %1220 = vmatprep.subr.bf16.mxu0 0
        %1221 = vmatpush2.bf16.msra.mxu0 0
        %1222 = vmatprep.subr.bf16.mxu0 0
        %1223 = vmatpush2.bf16.msra.mxu0 0
        %1224 = vmatprep.subr.bf16.mxu0 0
        %1225 = vmatpush2.bf16.msra.mxu0 0
        %1226 = vmatprep.subr.bf16.mxu0 0
        %1227 = vmatpush2.bf16.msra.mxu0 0
        %1228 = vmatprep.subr.bf16.mxu0 0
        %1229 = vmatpush2.bf16.msra.mxu0 0
        %1230 = vmatprep.subr.bf16.mxu0 0
        %1231 = vmatpush2.bf16.msra.mxu0 0
        %1232 = vmatprep.mubr.bf16.mxu0 0
        %1233 = vmatmul.mubr.bf16.gmra.mxu0 %v1198
        %v1234 = vpop.f32.mrf.mxu0
        %v1235 = vadd.f32 0.0, %v1234
        %v1236 = vpop.f32.mrf.mxu0
        %v1237 = vpop.f32.mrf.mxu0
        %v1238 = vpop.f32.mrf.mxu0
        %1239 = vdwg.mxu0
        %v1240 = vadd.f32 %v1035, %v1235
        %1241 = vrot.lane.b32.xlu0 %v592, 32
        %v1242 = vpop.permute.xlu0 %1241
        %1243 = vrot.lane.b32.xlu0 %v594, 32
        %v1244 = vpop.permute.xlu0 %1243
        %v1245 = vsel %vm639, %v1242, 0
        %v1247 = vsel %vm639, %v1244, 0
        %1249 = vmatprep.subr.mxu0 0.0
        %1250 = vmatpush1.xpose.msra.mxu0 0.0
        %1251 = vmatprep.subr.mxu0 0.0
        %1252 = vmatpush1.xpose.msra.mxu0 0.0
        %1253 = vmatprep.subr.mxu0 0.0
        %1254 = vmatpush1.xpose.msra.mxu0 0.0
        %1255 = vmatprep.subr.mxu0 0.0
        %1256 = vmatpush1.xpose.msra.mxu0 0.0
        %1257 = vmatprep.subr.mxu0 0.0
        %1258 = vmatpush1.xpose.msra.mxu0 0.0
        %1259 = vmatprep.subr.mxu0 0.0
        %1260 = vmatpush1.xpose.msra.mxu0 0.0
        %1261 = vmatprep.subr.mxu0 0.0
        %1262 = vmatpush1.xpose.msra.mxu0 0.0
        %1263 = vmatprep.subr.mxu0 0.0
        %1264 = vmatpush1.xpose.msra.mxu0 0.0
        %1265 = vmatprep.subr.mxu0 0.0
        %1266 = vmatpush1.xpose.msra.mxu0 0.0
        %1267 = vmatprep.subr.mxu0 0.0
        %1268 = vmatpush1.xpose.msra.mxu0 0.0
        %1269 = vmatprep.subr.mxu0 0.0
        %1270 = vmatpush1.xpose.msra.mxu0 0.0
        %1271 = vmatprep.subr.mxu0 0.0
        %1272 = vmatpush1.xpose.msra.mxu0 0.0
        %1273 = vmatprep.subr.mxu0 0.0
        %1274 = vmatpush1.xpose.msra.mxu0 0.0
        %1275 = vmatprep.subr.mxu0 0.0
        %1276 = vmatpush1.xpose.msra.mxu0 0.0
        %1277 = vmatprep.subr.mxu0 0.0
        %1278 = vmatpush1.xpose.msra.mxu0 0.0
        %1279 = vmatprep.subr.mxu0 0.0
        %1280 = vmatpush1.xpose.msra.mxu0 %v1247
        %1281 = vmatprep.subr.mxu0 0.0
        %1282 = vmatpush2.xpose.msra.mxu0 0.0
        %1283 = vmatprep.subr.mxu0 0.0
        %1284 = vmatpush2.xpose.msra.mxu0 0.0
        %1285 = vmatprep.subr.mxu0 0.0
        %1286 = vmatpush2.xpose.msra.mxu0 0.0
        %1287 = vmatprep.subr.mxu0 0.0
        %1288 = vmatpush2.xpose.msra.mxu0 0.0
        %1289 = vmatprep.subr.mxu0 0.0
        %1290 = vmatpush2.xpose.msra.mxu0 0.0
        %1291 = vmatprep.subr.mxu0 0.0
        %1292 = vmatpush2.xpose.msra.mxu0 0.0
        %1293 = vmatprep.subr.mxu0 0.0
        %1294 = vmatpush2.xpose.msra.mxu0 0.0
        %1295 = vmatprep.subr.mxu0 0.0
        %1296 = vmatpush2.xpose.msra.mxu0 0.0
        %1297 = vmatprep.subr.mxu0 0.0
        %1298 = vmatpush2.xpose.msra.mxu0 0.0
        %1299 = vmatprep.subr.mxu0 0.0
        %1300 = vmatpush2.xpose.msra.mxu0 0.0
        %1301 = vmatprep.subr.mxu0 0.0
        %1302 = vmatpush2.xpose.msra.mxu0 0.0
        %1303 = vmatprep.subr.mxu0 0.0
        %1304 = vmatpush2.xpose.msra.mxu0 0.0
        %1305 = vmatprep.subr.mxu0 0.0
        %1306 = vmatpush2.xpose.msra.mxu0 0.0
        %1307 = vmatprep.subr.mxu0 0.0
        %1308 = vmatpush2.xpose.msra.mxu0 0.0
        %1309 = vmatprep.subr.mxu0 0.0
        %1310 = vmatpush2.xpose.msra.mxu0 0.0
        %1311 = vmatprep.subr.mxu0 0.0
        %1312 = vmatpush2.xpose.msra.mxu0 0.0
        %1313 = vmatprep.mubr.f32.mxu0 0.0
        %1314 = vmatmul.mubr.f32.gmra.mxu0 %v1245
        %v1315 = vpop.f32.mrf.mxu0
        %v1316 = vadd.f32 0.0, %v1315
        %v1317 = vpop.f32.mrf.mxu0
        %1318 = vdwg.mxu0
        %v1319 = vmul.f32 %v1316, 0.17677669
        %v1320 = vadd.f32 %v1319, %v638
        %v1321 = vsel %vm718, %v1320, -inf
        %1322 = vmax.xlane.f32.xlu0 %v1321
        %v1323 = vpop.xlane.xlu0 %1322
        %v1324 = vsub.f32 %v1320, %v1323
        %v1325 = vmul.f32 %v1324, 1.442695
        %v1326 = vpow.pop %v1325
        %v1327 = vsel %vm718, %v1326, 0.0
        %1328 = vadd.xlane.f32.xlu0 %v1327
        %v1329 = vpop.xlane.xlu0 %1328
        %v1330 = vrcp.pop %v1329
        %v1331 = vmul.f32 %v1326, %v1330
        %v1332 = vpack.c.bf16 %v1331, %v1331
        %1333 = vrot.lane.b32.xlu0 %v731, 32
        %v1334 = vpop.permute.xlu0 %1333
        %v1336 = vsel %vm718, %v1332, 0
        %v1339 = vsel %vm735, %v1334, 0
        %1341 = vmatprep.subr.bf16.mxu0 0
        %1342 = vmatpush1.bf16.msra.mxu0 0
        %1343 = vmatprep.subr.bf16.mxu0 0
        %1344 = vmatpush1.bf16.msra.mxu0 0
        %1345 = vmatprep.subr.bf16.mxu0 0
        %1346 = vmatpush1.bf16.msra.mxu0 0
        %1347 = vmatprep.subr.bf16.mxu0 0
        %1348 = vmatpush1.bf16.msra.mxu0 0
        %1349 = vmatprep.subr.bf16.mxu0 0
        %1350 = vmatpush1.bf16.msra.mxu0 0
        %1351 = vmatprep.subr.bf16.mxu0 0
        %1352 = vmatpush1.bf16.msra.mxu0 0
        %1353 = vmatprep.subr.bf16.mxu0 0
        %1354 = vmatpush1.bf16.msra.mxu0 0
        %1355 = vmatprep.subr.bf16.mxu0 0
        %1356 = vmatpush1.bf16.msra.mxu0 %v1339
        %1357 = vmatprep.subr.bf16.mxu0 0
        %1358 = vmatpush2.bf16.msra.mxu0 0
        %1359 = vmatprep.subr.bf16.mxu0 0
        %1360 = vmatpush2.bf16.msra.mxu0 0
        %1361 = vmatprep.subr.bf16.mxu0 0
        %1362 = vmatpush2.bf16.msra.mxu0 0
        %1363 = vmatprep.subr.bf16.mxu0 0
        %1364 = vmatpush2.bf16.msra.mxu0 0
        %1365 = vmatprep.subr.bf16.mxu0 0
        %1366 = vmatpush2.bf16.msra.mxu0 0
        %1367 = vmatprep.subr.bf16.mxu0 0
        %1368 = vmatpush2.bf16.msra.mxu0 0
        %1369 = vmatprep.subr.bf16.mxu0 0
        %1370 = vmatpush2.bf16.msra.mxu0 0
        %1371 = vmatprep.subr.bf16.mxu0 0
        %1372 = vmatpush2.bf16.msra.mxu0 0
        %1373 = vmatprep.mubr.bf16.mxu0 0
        %1374 = vmatmul.mubr.bf16.gmra.mxu0 %v1336
        %v1375 = vpop.f32.mrf.mxu0
        %v1376 = vadd.f32 0.0, %v1375
        %v1377 = vpop.f32.mrf.mxu0
        %v1378 = vpop.f32.mrf.mxu0
        %v1379 = vpop.f32.mrf.mxu0
        %1380 = vdwg.mxu0
        %v1381 = vpack.c.bf16 %v1376, %v1376
        %v1382 = vld [vmem:[#allocation4 + $0x30] sm:$0xf]
        %v1383 = vld [vmem:[#allocation4 + $0x34] sm:$0xf]
        %v1384 = vld [vmem:[#allocation4 + $0x38] sm:$0xf]
        %v1385 = vld [vmem:[#allocation4 + $0x3c] sm:$0xf]
        %v1390 = vunpack.c.l.b16 %v1382
        %v1391 = vunpack.c.l.b16 %v1383
        %v1392 = vunpack.c.l.b16 %v1384
        %v1393 = vunpack.c.l.b16 %v1385
        %v1394 = vpack.c.b16 %v1391, %v1390
        %v1395 = vpack.c.b16 %v1393, %v1392
        %v1399 = vsel %vm639, %v1381, 0
        %1401 = vmatprep.subr.bf16.mxu0 0
        %1402 = vmatpush1.bf16.msra.mxu0 0
        %1403 = vmatprep.subr.bf16.mxu0 0
        %1404 = vmatpush1.bf16.msra.mxu0 0
        %1405 = vmatprep.subr.bf16.mxu0 0
        %1406 = vmatpush1.bf16.msra.mxu0 0
        %1407 = vmatprep.subr.bf16.mxu0 0
        %1408 = vmatpush1.bf16.msra.mxu0 0
        %1409 = vmatprep.subr.bf16.mxu0 0
        %1410 = vmatpush1.bf16.msra.mxu0 0
        %1411 = vmatprep.subr.bf16.mxu0 0
        %1412 = vmatpush1.bf16.msra.mxu0 0
        %1413 = vmatprep.subr.bf16.mxu0 0
        %1414 = vmatpush1.bf16.msra.mxu0 %v1395
        %1415 = vmatprep.subr.bf16.mxu0 0
        %1416 = vmatpush1.bf16.msra.mxu0 %v1394
        %1417 = vmatprep.subr.bf16.mxu0 0
        %1418 = vmatpush2.bf16.msra.mxu0 0
        %1419 = vmatprep.subr.bf16.mxu0 0
        %1420 = vmatpush2.bf16.msra.mxu0 0
        %1421 = vmatprep.subr.bf16.mxu0 0
        %1422 = vmatpush2.bf16.msra.mxu0 0
        %1423 = vmatprep.subr.bf16.mxu0 0
        %1424 = vmatpush2.bf16.msra.mxu0 0
        %1425 = vmatprep.subr.bf16.mxu0 0
        %1426 = vmatpush2.bf16.msra.mxu0 0
        %1427 = vmatprep.subr.bf16.mxu0 0
        %1428 = vmatpush2.bf16.msra.mxu0 0
        %1429 = vmatprep.subr.bf16.mxu0 0
        %1430 = vmatpush2.bf16.msra.mxu0 0
        %1431 = vmatprep.subr.bf16.mxu0 0
        %1432 = vmatpush2.bf16.msra.mxu0 0
        %1433 = vmatprep.mubr.bf16.mxu0 0
        %1434 = vmatmul.mubr.bf16.gmra.mxu0 %v1399
        %v1435 = vpop.f32.mrf.mxu0
        %v1436 = vadd.f32 0.0, %v1435
        %v1437 = vpop.f32.mrf.mxu0
        %v1438 = vpop.f32.mrf.mxu0
        %v1439 = vpop.f32.mrf.mxu0
        %1440 = vdwg.mxu0
        %v1441 = vadd.f32 %v1240, %v1436
        %v1442 = vadd.f32 %v350, %v1441
        %v1443 = vld [vmem:[%s7] sm:$0x1]
        %v1445 = vlaneseq
        %v1446 = vshrl.u32 %v1445, 7
        %v1447 = vsub.s32 0, %v1446
        %v1448 = vrot.slane %v1443, %v1447
        %v1450 = vadd.f32 %v1442, %v1448
        %v1451 = vpack.c.bf16 %v1450, %v1450
        %1452 = vst [vmem:[%s347] sm:$0xf] %v1451
        %p1453 = scmp.lt.s32.totalorder %s21, 1
        %s1454 = scalar_select %p1453, %s21, 1
        %s1455 = smul.addr %s1454, 4
        %s1456 = scalar_lea.vmem %s8, %s1455
        // Predicated region
        $region61: #{gpt_actor_forward.5} parent=51 // pred_check
          %p1457 = pneg %p217
        $region62: #{gpt_actor_forward.5} parent=51 // pred_check_branch
          %1459 = sbr.rel (%p1457) target = $region64
        $region63: #{gpt_actor_forward.5} parent=51 // pred_region
          _
        $region64: #{gpt_actor_forward.5} parent=51 // pred_fallthru
          _
      $region52: #{gpt_actor_forward.5} parent=5 // pred_fallthru
        _
      %p1460 = scmp.le.s32.totalorder 2, %s16
      // Predicated region
      $region65: #{gpt_actor_forward.5} parent=5 // pred_check
        %p1461 = pneg %p1460
      $region66: #{gpt_actor_forward.5} parent=5 // pred_check_branch
        %1463 = sbr.rel (%p1461) target = $region68
      $region67: #{gpt_actor_forward.5} parent=5 // pred_region
        %s1464 = ssub.s32 %s16, 2
        // Predicated region
        $region69: #{gpt_actor_forward.5} parent=67 // pred_check
          %p1465 = pneg %p223
        $region70: #{gpt_actor_forward.5} parent=67 // pred_check_branch
          %1467 = sbr.rel (%p1465) target = $region72
        $region71: #{gpt_actor_forward.5} parent=67 // pred_region
          %p1468 = scmp.lt.s32.totalorder %s22, 1
          %s1469 = scalar_select %p1468, %s22, 1
          %s1470 = smul.addr %s1469, 4
          %s1471 = scalar_lea.vmem %s8, %s1470
        $region72: #{gpt_actor_forward.5} parent=67 // pred_fallthru
          _
      $region68: #{gpt_actor_forward.5} parent=5 // pred_fallthru
        _
    $region6: #{gpt_actor_forward.5} parent=1 // loop_footer
      %s20 = sadd.s32 1, %s16
    $region7: #{gpt_actor_forward.5} parent=1 // loop_footer_branch
      %15 = sbr.rel target = $region3
    $region8: #{gpt_actor_forward.5} parent=1 // loop_exit
      _
    %1472 = vsyncpa [#allocation3], 1
    %s1473 = scalar_lea.sflag [#allocation3], 1
    %1474 = vsyncpa %s1473, 1
    %1475 = vsyncpa [#allocation5], 1

// kernel: gpt_actor_forward.9
$region0: #{gpt_actor_forward.9}
  #allocation0 [shape = 'u32[]', space=smem, size = 0x4, offset = 0x4, fixed_abs, tag = 'smem constant byte address 0x4 - core index']
  #allocation1 [shape = 'u32[144,128]{1,0:T(1,128)}', space=vmem, size = 0x12000, scoped, tag = 'internal scratch']
  %s0 = inlined_call_operand.vmem [shape: bf16[2,8,128], index: 0, kind: input, shape index: {}]
  %s1 = inlined_call_operand.vmem [shape: f32[1,128], index: 1, kind: input, shape index: {}]
  %s2 = inlined_call_operand.vmem [shape: f32[1,128], index: 2, kind: input, shape index: {}]
  %s3 = inlined_call_operand.vmem [shape: bf16[128,384], index: 3, kind: input, shape index: {}]
  %s4 = inlined_call_operand.vmem [shape: f32[2,8,384], index: 4, kind: output, shape index: {}]
  %s5 = sld [smem:[#allocation0]]
  $region49: #{gpt_actor_forward.9} parent=0
    _
  %s7 = ssub.s32 1, %s5
  %s8 = scalar_select 0, %s7, %s5
  loop: start=0, step=1, limit=4
  $region2: #{gpt_actor_forward.9} parent=0 // loop_pre_header
    _
  $region3: #{gpt_actor_forward.9} parent=0 // loop_header
    %s10 = sphi 0, %s14
    %p11 = scmp.ge.s32.totalorder %s10, 4
    %s20 = sphi 0, %s22
    %s23 = sphi 0, %s20
    %s24 = sphi 0, %s23
    %s40 = sphi 0, %s24
    %s44 = sphi 0, %s44
    %s46 = sphi 0, %s44
    %s47 = sphi 0, %s46
    %s61 = sphi 0, %s47
    %s65 = sphi 0, %s65
    %s67 = sphi 0, %s65
    %s68 = sphi 0, %s67
    %s82 = sphi 0, %s68
    %s86 = sphi 0, %s86
    %s88 = sphi 0, %s86
    %s89 = sphi 0, %s88
    %s103 = sphi 0, %s89
    %s109 = sphi 0, %s111
    %s112 = sphi 0, %s109
    %s113 = sphi 0, %s112
    %s129 = sphi 0, %s113
  $region4: #{gpt_actor_forward.9} parent=0 // loop_header_branch
    %13 = sbr.rel (%p11) target = $region8
  $region5: #{gpt_actor_forward.9} parent=0 // loop_body
    %s15 = ssub.s32 %s10, 1
    %s16 = ssub.s32 %s10, 2
    %s17 = sadd.s32 %s10, 1
    %s18 = ssub.s32 %s10, %s17
    %p19 = scmp.eq.s32.totalorder %s18, 0
    %s21 = sadd.s32 %s20, 1
    %s22 = scalar_select %p19, %s20, %s21
    %p25 = pneg %p19
    %p26 = scmp.eq.s32.totalorder %s10, 1
    %p27 = por %p25, %p26
    %p28 = scmp.ne.s32.totalorder %s20, %s23
    %p29 = scmp.eq.s32.totalorder %s10, 0
    %p30 = por %p28, %p29
    %p31 = scmp.ne.s32.totalorder %s20, %s23
    %p32 = scmp.eq.s32.totalorder %s15, 1
    %p33 = por %p31, %p32
    %p34 = scmp.ne.s32.totalorder %s23, %s24
    %p35 = scmp.eq.s32.totalorder %s15, 0
    %p36 = por %p34, %p35
    %p37 = scmp.ne.s32.totalorder %s23, %s24
    %p38 = scmp.eq.s32.totalorder %s16, 1
    %p39 = por %p37, %p38
    %p41 = scmp.ne.s32.totalorder %s24, %s40
    %p42 = scmp.eq.s32.totalorder %s16, 0
    %p43 = por %p41, %p42
    %s45 = sadd.s32 %s44, 1
    %p48 = scmp.eq.s32.totalorder %s10, 1
    %p49 = scmp.ne.s32.totalorder %s44, %s46
    %p50 = scmp.eq.s32.totalorder %s10, 0
    %p51 = por %p49, %p50
    %p52 = scmp.ne.s32.totalorder %s44, %s46
    %p53 = scmp.eq.s32.totalorder %s15, 1
    %p54 = por %p52, %p53
    %p55 = scmp.ne.s32.totalorder %s46, %s47
    %p56 = scmp.eq.s32.totalorder %s15, 0
    %p57 = por %p55, %p56
    %p58 = scmp.ne.s32.totalorder %s46, %s47
    %p59 = scmp.eq.s32.totalorder %s16, 1
    %p60 = por %p58, %p59
    %p62 = scmp.ne.s32.totalorder %s47, %s61
    %p63 = scmp.eq.s32.totalorder %s16, 0
    %p64 = por %p62, %p63
    %s66 = sadd.s32 %s65, 1
    %p69 = scmp.eq.s32.totalorder %s10, 1
    %p70 = scmp.ne.s32.totalorder %s65, %s67
    %p71 = scmp.eq.s32.totalorder %s10, 0
    %p72 = por %p70, %p71
    %p73 = scmp.ne.s32.totalorder %s65, %s67
    %p74 = scmp.eq.s32.totalorder %s15, 1
    %p75 = por %p73, %p74
    %p76 = scmp.ne.s32.totalorder %s67, %s68
    %p77 = scmp.eq.s32.totalorder %s15, 0
    %p78 = por %p76, %p77
    %p79 = scmp.ne.s32.totalorder %s67, %s68
    %p80 = scmp.eq.s32.totalorder %s16, 1
    %p81 = por %p79, %p80
    %p83 = scmp.ne.s32.totalorder %s68, %s82
    %p84 = scmp.eq.s32.totalorder %s16, 0
    %p85 = por %p83, %p84
    %s87 = sadd.s32 %s86, 1
    %p90 = scmp.eq.s32.totalorder %s10, 1
    %p91 = scmp.ne.s32.totalorder %s86, %s88
    %p92 = scmp.eq.s32.totalorder %s10, 0
    %p93 = por %p91, %p92
    %p94 = scmp.ne.s32.totalorder %s86, %s88
    %p95 = scmp.eq.s32.totalorder %s15, 1
    %p96 = por %p94, %p95
    %p97 = scmp.ne.s32.totalorder %s88, %s89
    %p98 = scmp.eq.s32.totalorder %s15, 0
    %p99 = por %p97, %p98
    %p100 = scmp.ne.s32.totalorder %s88, %s89
    %p101 = scmp.eq.s32.totalorder %s16, 1
    %p102 = por %p100, %p101
    %p104 = scmp.ne.s32.totalorder %s89, %s103
    %p105 = scmp.eq.s32.totalorder %s16, 0
    %p106 = por %p104, %p105
    %s107 = ssub.s32 %s10, %s17
    %p108 = scmp.eq.s32.totalorder %s107, 0
    %s110 = sadd.s32 %s109, 1
    %s111 = scalar_select %p108, %s109, %s110
    %p114 = pneg %p108
    %p115 = scmp.eq.s32.totalorder %s10, 1
    %p116 = por %p114, %p115
    %p117 = scmp.ne.s32.totalorder %s109, %s112
    %p118 = scmp.eq.s32.totalorder %s10, 0
    %p119 = por %p117, %p118
    %p120 = scmp.ne.s32.totalorder %s109, %s112
    %p121 = scmp.eq.s32.totalorder %s15, 1
    %p122 = por %p120, %p121
    %p123 = scmp.ne.s32.totalorder %s112, %s113
    %p124 = scmp.eq.s32.totalorder %s15, 0
    %p125 = por %p123, %p124
    %p126 = scmp.ne.s32.totalorder %s112, %s113
    %p127 = scmp.eq.s32.totalorder %s16, 1
    %p128 = por %p126, %p127
    %p130 = scmp.ne.s32.totalorder %s113, %s129
    %p131 = scmp.eq.s32.totalorder %s16, 0
    %p132 = por %p130, %p131
    %p133 = scmp.le.s32.totalorder 1, %s10
    %p134 = scmp.lt.s32.totalorder %s10, 3
    %p135 = pnand %p133, %p134
    %p136 = pneg %p135
    // Predicated region
    $region9: #{gpt_actor_forward.9} parent=5 // pred_check
      _
    $region10: #{gpt_actor_forward.9} parent=5 // pred_check_branch
      %138 = sbr.rel (%p135) target = $region12
    $region11: #{gpt_actor_forward.9} parent=5 // pred_region
      %s139 = ssub.s32 %s10, 1
      // Predicated region
      $region13: #{gpt_actor_forward.9} parent=11 // pred_check
        %p140 = pneg %p57
      $region14: #{gpt_actor_forward.9} parent=11 // pred_check_branch
        %142 = sbr.rel (%p140) target = $region16
      $region15: #{gpt_actor_forward.9} parent=11 // pred_region
        _
      $region16: #{gpt_actor_forward.9} parent=11 // pred_fallthru
        _
      // Predicated region
      $region17: #{gpt_actor_forward.9} parent=11 // pred_check
        %p143 = pneg %p78
      $region18: #{gpt_actor_forward.9} parent=11 // pred_check_branch
        %145 = sbr.rel (%p143) target = $region20
      $region19: #{gpt_actor_forward.9} parent=11 // pred_region
        _
      $region20: #{gpt_actor_forward.9} parent=11 // pred_fallthru
        _
      // Predicated region
      $region21: #{gpt_actor_forward.9} parent=11 // pred_check
        %p146 = pneg %p99
      $region22: #{gpt_actor_forward.9} parent=11 // pred_check_branch
        %148 = sbr.rel (%p146) target = $region24
      $region23: #{gpt_actor_forward.9} parent=11 // pred_region
        _
      $region24: #{gpt_actor_forward.9} parent=11 // pred_fallthru
        _
    $region12: #{gpt_actor_forward.9} parent=5 // pred_fallthru
      _
    %p149 = scmp.lt.s32.totalorder %s10, 2
    // Predicated region
    $region25: #{gpt_actor_forward.9} parent=5 // pred_check
      %p150 = pneg %p149
    $region26: #{gpt_actor_forward.9} parent=5 // pred_check_branch
      %152 = sbr.rel (%p150) target = $region28
    $region27: #{gpt_actor_forward.9} parent=5 // pred_region
      // Predicated region
      $region29: #{gpt_actor_forward.9} parent=27 // pred_check
        %p153 = pneg %p30
      $region30: #{gpt_actor_forward.9} parent=27 // pred_check_branch
        %155 = sbr.rel (%p153) target = $region32
      $region31: #{gpt_actor_forward.9} parent=27 // pred_region
        %p156 = scmp.lt.s32.totalorder %s10, 1
        %s157 = scalar_select %p156, %s10, 1
        %s158 = smul.addr %s157, 4
        %s159 = scalar_lea.vmem %s0, %s158
      $region32: #{gpt_actor_forward.9} parent=27 // pred_fallthru
        _
    $region28: #{gpt_actor_forward.9} parent=5 // pred_fallthru
      _
    %p160 = scmp.le.s32.totalorder 1, %s10
    %p161 = scmp.lt.s32.totalorder %s10, 3
    %p162 = pnand %p160, %p161
    %p163 = pneg %p162
    // Predicated region
    $region33: #{gpt_actor_forward.9} parent=5 // pred_check
      _
    $region34: #{gpt_actor_forward.9} parent=5 // pred_check_branch
      %165 = sbr.rel (%p162) target = $region36
    $region35: #{gpt_actor_forward.9} parent=5 // pred_region
      %s166 = ssub.s32 %s10, 1
      %p167 = scmp.lt.s32.totalorder %s15, 1
      %s168 = scalar_select %p167, %s15, 1
      %s169 = smul.addr %s168, 4
      %s170 = scalar_lea.vmem %s0, %s169
      %p171 = pneg %p36
      %p172 = pneg %p33
      %p173 = pneg %p57
      %p174 = pneg %p54
      %p175 = pneg %p78
      %p176 = pneg %p75
      %p177 = pneg %p99
      %p178 = pneg %p96
      %p179 = pneg %p125
      %p180 = pneg %p122
      %p181 = scmp.lt.s32.totalorder %s15, 1
      %s182 = scalar_select %p181, %s15, 1
      %s183 = smul.addr %s182, 3
      %s184 = smul.addr %s183, 8
      %s185 = scalar_lea.vmem %s4, %s184
      %p186 = scmp.lt.s32.totalorder %s15, 1
      %s187 = scalar_select %p186, %s15, 1
      %s188 = smul.addr %s187, 4
      %s189 = scalar_lea.vmem %s0, %s188
      %p190 = scmp.lt.s32.totalorder %s15, 1
      %s191 = scalar_select %p190, %s15, 1
      %s192 = smul.addr %s191, 3
      %s193 = smul.addr %s192, 8
      %s194 = scalar_lea.vmem %s4, %s193
      %v196 = vld [vmem:[%s189] sm:$0xf]
      %v197 = vunpack.c.l.bf16 %v196
      %v198 = vld [vmem:[%s1] sm:$0x1]
      %v199 = vld [vmem:[%s2] sm:$0x1]
      %200 = vadd.xlane.f32.xlu0 %v197
      %v201 = vpop.xlane.xlu0 %200
      %v202 = vrcp.pop 128.0
      %v203 = vmul.f32 %v201, %v202
      %v204 = vsub.f32 %v197, %v203
      %v205 = vmul.f32 %v204, %v204
      %206 = vadd.xlane.f32.xlu0 %v205
      %v207 = vpop.xlane.xlu0 %206
      %v208 = vmul.f32 %v207, %v202
      %v209 = vadd.f32 %v208, 1e-05
      %v210 = vrsqrt.pop %v209
      %v211 = vmul.f32 %v204, %v210
      %v213 = vlaneseq
      %v214 = vshrl.u32 %v213, 7
      %v215 = vsub.s32 0, %v214
      %v216 = vrot.slane %v198, %v215
      %v218 = vmul.f32 %v211, %v216
      %v220 = vlaneseq
      %v221 = vshrl.u32 %v220, 7
      %v222 = vsub.s32 0, %v221
      %v223 = vrot.slane %v199, %v222
      %v225 = vadd.f32 %v218, %v223
      %v226 = vpack.c.bf16 %v225, %v225
      %v227 = vld [vmem:[%s3] sm:$0xff]
      %v228 = vld [vmem:[%s3 + $0x8] sm:$0xf]
      %v229 = vld [vmem:[%s3 + $0xc] sm:$0xff]
      %v230 = vld [vmem:[%s3 + $0x14] sm:$0xf]
      %v231 = vld [vmem:[%s3 + $0x18] sm:$0xff]
      %v232 = vld [vmem:[%s3 + $0x20] sm:$0xf]
      %v233 = vld [vmem:[%s3 + $0x24] sm:$0xff]
      %v234 = vld [vmem:[%s3 + $0x2c] sm:$0xf]
      %v235 = vld [vmem:[%s3 + $0x30] sm:$0xff]
      %v236 = vld [vmem:[%s3 + $0x38] sm:$0xf]
      %v237 = vld [vmem:[%s3 + $0x3c] sm:$0xff]
      %v238 = vld [vmem:[%s3 + $0x44] sm:$0xf]
      %v239 = vld [vmem:[%s3 + $0x48] sm:$0xff]
      %v240 = vld [vmem:[%s3 + $0x50] sm:$0xf]
      %v241 = vld [vmem:[%s3 + $0x54] sm:$0xff]
      %v242 = vld [vmem:[%s3 + $0x5c] sm:$0xf]
      %v243 = vld [vmem:[%s3 + $0x60] sm:$0xff]
      %v244 = vld [vmem:[%s3 + $0x68] sm:$0xf]
      %v245 = vld [vmem:[%s3 + $0x6c] sm:$0xff]
      %v246 = vld [vmem:[%s3 + $0x74] sm:$0xf]
      %v247 = vld [vmem:[%s3 + $0x78] sm:$0xff]
      %v248 = vld [vmem:[%s3 + $0x80] sm:$0xf]
      %v249 = vld [vmem:[%s3 + $0x84] sm:$0xff]
      %v250 = vld [vmem:[%s3 + $0x8c] sm:$0xf]
      %v251 = vld [vmem:[%s3 + $0x90] sm:$0xff]
      %v252 = vld [vmem:[%s3 + $0x98] sm:$0xf]
      %v253 = vld [vmem:[%s3 + $0x9c] sm:$0xff]
      %v254 = vld [vmem:[%s3 + $0xa4] sm:$0xf]
      %v255 = vld [vmem:[%s3 + $0xa8] sm:$0xff]
      %v256 = vld [vmem:[%s3 + $0xb0] sm:$0xf]
      %v257 = vld [vmem:[%s3 + $0xb4] sm:$0xff]
      %v258 = vld [vmem:[%s3 + $0xbc] sm:$0xf]
      %v291 = vunpack.c.l.b16 %v227
      %v292 = vunpack.c.h.b16 %v227
      %v293 = vunpack.c.l.b16 %v228
      %v294 = vunpack.c.l.b16 %v229
      %v295 = vunpack.c.h.b16 %v229
      %v296 = vunpack.c.l.b16 %v230
      %v297 = vunpack.c.l.b16 %v231
      %v298 = vunpack.c.h.b16 %v231
      %v299 = vunpack.c.l.b16 %v232
      %v300 = vunpack.c.l.b16 %v233
      %v301 = vunpack.c.h.b16 %v233
      %v302 = vunpack.c.l.b16 %v234
      %v303 = vunpack.c.l.b16 %v235
      %v304 = vunpack.c.h.b16 %v235
      %v305 = vunpack.c.l.b16 %v236
      %v306 = vunpack.c.l.b16 %v237
      %v307 = vunpack.c.h.b16 %v237
      %v308 = vunpack.c.l.b16 %v238
      %v309 = vunpack.c.l.b16 %v239
      %v310 = vunpack.c.h.b16 %v239
      %v311 = vunpack.c.l.b16 %v240
      %v312 = vunpack.c.l.b16 %v241
      %v313 = vunpack.c.h.b16 %v241
      %v314 = vunpack.c.l.b16 %v242
      %v315 = vunpack.c.l.b16 %v243
      %v316 = vunpack.c.h.b16 %v243
      %v317 = vunpack.c.l.b16 %v244
      %v318 = vunpack.c.l.b16 %v245
      %v319 = vunpack.c.h.b16 %v245
      %v320 = vunpack.c.l.b16 %v246
      %v321 = vunpack.c.l.b16 %v247
      %v322 = vunpack.c.h.b16 %v247
      %v323 = vunpack.c.l.b16 %v248
      %v324 = vunpack.c.l.b16 %v249
      %v325 = vunpack.c.h.b16 %v249
      %v326 = vunpack.c.l.b16 %v250
      %v327 = vunpack.c.l.b16 %v251
      %v328 = vunpack.c.h.b16 %v251
      %v329 = vunpack.c.l.b16 %v252
      %v330 = vunpack.c.l.b16 %v253
      %v331 = vunpack.c.h.b16 %v253
      %v332 = vunpack.c.l.b16 %v254
      %v333 = vunpack.c.l.b16 %v255
      %v334 = vunpack.c.h.b16 %v255
      %v335 = vunpack.c.l.b16 %v256
      %v336 = vunpack.c.l.b16 %v257
      %v337 = vunpack.c.h.b16 %v257
      %v338 = vunpack.c.l.b16 %v258
      %v339 = vpack.c.b16 %v294, %v291
      %v340 = vpack.c.b16 %v295, %v292
      %v341 = vpack.c.b16 %v296, %v293
      %v342 = vpack.c.b16 %v300, %v297
      %v343 = vpack.c.b16 %v301, %v298
      %v344 = vpack.c.b16 %v302, %v299
      %v345 = vpack.c.b16 %v306, %v303
      %v346 = vpack.c.b16 %v307, %v304
      %v347 = vpack.c.b16 %v308, %v305
      %v348 = vpack.c.b16 %v312, %v309
      %v349 = vpack.c.b16 %v313, %v310
      %v350 = vpack.c.b16 %v314, %v311
      %v351 = vpack.c.b16 %v318, %v315
      %v352 = vpack.c.b16 %v319, %v316
      %v353 = vpack.c.b16 %v320, %v317
      %v354 = vpack.c.b16 %v324, %v321
      %v355 = vpack.c.b16 %v325, %v322
      %v356 = vpack.c.b16 %v326, %v323
      %v357 = vpack.c.b16 %v330, %v327
      %v358 = vpack.c.b16 %v331, %v328
      %v359 = vpack.c.b16 %v332, %v329
      %v360 = vpack.c.b16 %v336, %v333
      %v361 = vpack.c.b16 %v337, %v334
      %v362 = vpack.c.b16 %v338, %v335
      %387 = vmatprep.subr.bf16.mxu0 %v361
      %388 = vmatpush1.bf16.msra.mxu0 %v360
      %389 = vmatprep.subr.bf16.mxu0 %v358
      %390 = vmatpush1.bf16.msra.mxu0 %v357
      %391 = vmatprep.subr.bf16.mxu0 %v355
      %392 = vmatpush1.bf16.msra.mxu0 %v354
      %393 = vmatprep.subr.bf16.mxu0 %v352
      %394 = vmatpush1.bf16.msra.mxu0 %v351
      %395 = vmatprep.subr.bf16.mxu0 %v349
      %396 = vmatpush1.bf16.msra.mxu0 %v348
      %397 = vmatprep.subr.bf16.mxu0 %v346
      %398 = vmatpush1.bf16.msra.mxu0 %v345
      %399 = vmatprep.subr.bf16.mxu0 %v343
      %400 = vmatpush1.bf16.msra.mxu0 %v342
      %401 = vmatprep.subr.bf16.mxu0 %v340
      %402 = vmatpush1.bf16.msra.mxu0 %v339
      %403 = vmatprep.subr.bf16.mxu0 0
      %404 = vmatpush2.bf16.msra.mxu0 0
      %405 = vmatprep.subr.bf16.mxu0 0
      %406 = vmatpush2.bf16.msra.mxu0 0
      %407 = vmatprep.subr.bf16.mxu0 0
      %408 = vmatpush2.bf16.msra.mxu0 0
      %409 = vmatprep.subr.bf16.mxu0 0
      %410 = vmatpush2.bf16.msra.mxu0 0
      %411 = vmatprep.subr.bf16.mxu0 0
      %412 = vmatpush2.bf16.msra.mxu0 0
      %413 = vmatprep.subr.bf16.mxu0 0
      %414 = vmatpush2.bf16.msra.mxu0 0
      %415 = vmatprep.subr.bf16.mxu0 0
      %416 = vmatpush2.bf16.msra.mxu0 0
      %417 = vmatprep.subr.bf16.mxu0 0
      %418 = vmatpush2.bf16.msra.mxu0 0
      %419 = vmatprep.mubr.bf16.mxu0 0
      %420 = vmatmul.mubr.bf16.gmra.mxu0 %v226
      %v421 = vpop.f32.mrf.mxu0
      %v422 = vadd.f32 0.0, %v421
      %v423 = vpop.f32.mrf.mxu0
      %v424 = vadd.f32 0.0, %v423
      %v425 = vpop.f32.mrf.mxu0
      %v426 = vpop.f32.mrf.mxu0
      %427 = vdwg.mxu0
      %428 = vmatprep.subr.bf16.mxu0 0
      %429 = vmatpush1.bf16.msra.mxu0 %v362
      %430 = vmatprep.subr.bf16.mxu0 0
      %431 = vmatpush1.bf16.msra.mxu0 %v359
      %432 = vmatprep.subr.bf16.mxu0 0
      %433 = vmatpush1.bf16.msra.mxu0 %v356
      %434 = vmatprep.subr.bf16.mxu0 0
      %435 = vmatpush1.bf16.msra.mxu0 %v353
      %436 = vmatprep.subr.bf16.mxu0 0
      %437 = vmatpush1.bf16.msra.mxu0 %v350
      %438 = vmatprep.subr.bf16.mxu0 0
      %439 = vmatpush1.bf16.msra.mxu0 %v347
      %440 = vmatprep.subr.bf16.mxu0 0
      %441 = vmatpush1.bf16.msra.mxu0 %v344
      %442 = vmatprep.subr.bf16.mxu0 0
      %443 = vmatpush1.bf16.msra.mxu0 %v341
      %444 = vmatprep.subr.bf16.mxu0 0
      %445 = vmatpush2.bf16.msra.mxu0 0
      %446 = vmatprep.subr.bf16.mxu0 0
      %447 = vmatpush2.bf16.msra.mxu0 0
      %448 = vmatprep.subr.bf16.mxu0 0
      %449 = vmatpush2.bf16.msra.mxu0 0
      %450 = vmatprep.subr.bf16.mxu0 0
      %451 = vmatpush2.bf16.msra.mxu0 0
      %452 = vmatprep.subr.bf16.mxu0 0
      %453 = vmatpush2.bf16.msra.mxu0 0
      %454 = vmatprep.subr.bf16.mxu0 0
      %455 = vmatpush2.bf16.msra.mxu0 0
      %456 = vmatprep.subr.bf16.mxu0 0
      %457 = vmatpush2.bf16.msra.mxu0 0
      %458 = vmatprep.subr.bf16.mxu0 0
      %459 = vmatpush2.bf16.msra.mxu0 0
      %460 = vmatprep.mubr.bf16.mxu0 0
      %461 = vmatmul.mubr.bf16.gmra.mxu0 %v226
      %v462 = vpop.f32.mrf.mxu0
      %v463 = vadd.f32 0.0, %v462
      %v464 = vpop.f32.mrf.mxu0
      %v465 = vpop.f32.mrf.mxu0
      %v466 = vpop.f32.mrf.mxu0
      %467 = vdwg.mxu0
      %468 = vst [vmem:[%s194] sm:$0xff] %v422
      %469 = vst [vmem:[%s194 + $0x8] sm:$0xff] %v424
      %470 = vst [vmem:[%s194 + $0x10] sm:$0xff] %v463
      %p471 = scmp.lt.s32.totalorder %s15, 1
      %s472 = scalar_select %p471, %s15, 1
      %s473 = smul.addr %s472, 3
      %s474 = smul.addr %s473, 8
      %s475 = scalar_lea.vmem %s4, %s474
      // Predicated region
      $region37: #{gpt_actor_forward.9} parent=35 // pred_check
        %p476 = pneg %p122
      $region38: #{gpt_actor_forward.9} parent=35 // pred_check_branch
        %478 = sbr.rel (%p476) target = $region40
      $region39: #{gpt_actor_forward.9} parent=35 // pred_region
        _
      $region40: #{gpt_actor_forward.9} parent=35 // pred_fallthru
        _
    $region36: #{gpt_actor_forward.9} parent=5 // pred_fallthru
      _
    %p479 = scmp.le.s32.totalorder 2, %s10
    // Predicated region
    $region41: #{gpt_actor_forward.9} parent=5 // pred_check
      %p480 = pneg %p479
    $region42: #{gpt_actor_forward.9} parent=5 // pred_check_branch
      %482 = sbr.rel (%p480) target = $region44
    $region43: #{gpt_actor_forward.9} parent=5 // pred_region
      %s483 = ssub.s32 %s10, 2
      // Predicated region
      $region45: #{gpt_actor_forward.9} parent=43 // pred_check
        %p484 = pneg %p128
      $region46: #{gpt_actor_forward.9} parent=43 // pred_check_branch
        %486 = sbr.rel (%p484) target = $region48
      $region47: #{gpt_actor_forward.9} parent=43 // pred_region
        %p487 = scmp.lt.s32.totalorder %s16, 1
        %s488 = scalar_select %p487, %s16, 1
        %s489 = smul.addr %s488, 3
        %s490 = smul.addr %s489, 8
        %s491 = scalar_lea.vmem %s4, %s490
      $region48: #{gpt_actor_forward.9} parent=43 // pred_fallthru
        _
    $region44: #{gpt_actor_forward.9} parent=5 // pred_fallthru
      _
  $region6: #{gpt_actor_forward.9} parent=0 // loop_footer
    %s14 = sadd.s32 1, %s10
  $region7: #{gpt_actor_forward.9} parent=0 // loop_footer_branch
    %9 = sbr.rel target = $region3
  $region8: #{gpt_actor_forward.9} parent=0 // loop_exit
    _

</llo_original>
